<compile_context>
chip_gen: v7x
topology: tpu7x:2x2x1
jax: 0.10.0
libtpu: 0.0.40
codegen_flags: <defaults>
</compile_context>

<pallas_src>
import functools

import jax
import jax.numpy as jnp
from jax import lax
from jax.experimental import pallas as pl
from jax.experimental.pallas import tpu as pltpu

N_BITS = 8
QMAX = float(2 ** N_BITS - 1)          # 255 (asymmetric uint8 fake-quant)
BN_EPS = 1e-5

# Stat-accumulating kernels need a sequential grid ("arbitrary"); measured
# impact vs "parallel" is ~zero on v5e/v6e.
_ARB = pltpu.CompilerParams(dimension_semantics=("arbitrary",))
_PAR = pltpu.CompilerParams(dimension_semantics=("parallel",))


def _choose_tile(m, cap=1024):
    """Row tile: multiple of 16, <= cap, >= 2 grid steps, divisor if possible."""
    if m < 32:
        return m                                   # single (full) block
    tm = min(cap, max(16, ((m // 2) // 16) * 16))  # >= 2 steps
    for cand in range(tm, 15, -16):                # prefer no ragged tile
        if m % cand == 0:
            return cand
    return tm                                      # ragged last tile (masked)


def _flat2d(x):
    """Lane-dense flatten: (size//128, 128) when possible (feedback #1)."""
    n = x.size
    if n % 128 == 0:
        return x.reshape(n // 128, 128)
    c = x.shape[-1]
    return x.reshape(n // c, c)


# ----------------------------------------------------------------------------
# In-kernel helpers (all vector ops; no scalar-unit float math)
# ----------------------------------------------------------------------------
def _fq(x, inv_s, s, z):
    """Asymmetric 8-bit fake-quant (multiply by precomputed reciprocal)."""
    q = jnp.clip(jnp.round(x * inv_s) + z, 0.0, QMAX)
    return (q - z) * s


def _read_q(q_ref):
    """(3,128) qparams block -> three (1,1) values that broadcast anywhere."""
    return q_ref[0:1, 0:1], q_ref[1:2, 0:1], q_ref[2:3, 0:1]


def _update_stats(stat_ref, tile_mn, tile_mx, step):
    """Running per-lane min/max in VMEM scratch across the (sequential) grid."""
    @pl.when(step == 0)
    def _():
        stat_ref[0:1, :] = tile_mn
        stat_ref[1:2, :] = tile_mx

    @pl.when(step != 0)
    def _():
        stat_ref[0:1, :] = jnp.minimum(stat_ref[0:1, :], tile_mn)
        stat_ref[1:2, :] = jnp.maximum(stat_ref[1:2, :], tile_mx)


def _finalize_q(stat_ref, qout_ref, step, last):
    """At the last grid step emit [inv_scale, scale, zero_point] (3,128)."""
    @pl.when(step == last)
    def _():
        mn = jnp.minimum(jnp.min(stat_ref[0:1, :], axis=-1, keepdims=True), 0.0)
        mx = jnp.maximum(jnp.max(stat_ref[1:2, :], axis=-1, keepdims=True), 0.0)
        s = jnp.maximum((mx - mn) * (1.0 / QMAX), 1e-8)
        zp = jnp.round(-mn / s)
        qout_ref[0:1, :] = jnp.broadcast_to(1.0 / s, (1, 128))
        qout_ref[1:2, :] = jnp.broadcast_to(s, (1, 128))
        qout_ref[2:3, :] = jnp.broadcast_to(zp, (1, 128))


def _masked_minmax_rows(acc, step, tm, total_rows):
    """Tile min/max over rows; masks garbage rows of a ragged last tile."""
    if total_rows % tm != 0:
        rows = lax.broadcasted_iota(jnp.int32, acc.shape, 0)
        valid = rows < (total_rows - step * tm)
        mn_src = jnp.where(valid, acc, jnp.inf)
        mx_src = jnp.where(valid, acc, -jnp.inf)
    else:
        mn_src, mx_src = acc, acc
    return (jnp.min(mn_src, axis=0, keepdims=True),
            jnp.max(mx_src, axis=0, keepdims=True))


# ----------------------------------------------------------------------------
# Pallas kernels
# ----------------------------------------------------------------------------
def _pointwise_kernel(q_ref, x_ref, w_ref, b_ref, o_ref, qout_ref, stat_ref, *,
                      relu6, apply_in_fq, total_rows, tm):
    # q_ref: (3,128) input-activation qparams; x_ref: (TM,Cin) bf16
    # w_ref: (Cin,Cout) bf16; b_ref: (1,Cout) f32; o_ref: (TM,Cout) bf16
    # qout_ref: (3,128) output qparams; stat_ref: VMEM (2,Cout) running stats
    i = pl.program_id(0)
    x = x_ref[...]
    if apply_in_fq:
        inv_s, s, z = _read_q(q_ref)
        x = _fq(x.astype(jnp.float32), inv_s, s, z)
    x = x.astype(jnp.bfloat16)                                  # MXU operand
    acc = jnp.dot(x, w_ref[...], preferred_element_type=jnp.float32)
    acc = acc + b_ref[...]
    if relu6:
        acc = jnp.clip(acc, 0.0, 6.0)
    o_ref[...] = acc.astype(o_ref.dtype)

    tile_mn, tile_mx = _masked_minmax_rows(acc, i, tm, total_rows)
    _update_stats(stat_ref, tile_mn, tile_mx, i)
    _finalize_q(stat_ref, qout_ref, i, pl.num_programs(0) - 1)


def _depthwise_kernel(q_ref, x_ref, w_ref, b_ref, o_ref, qout_ref,
                      xpad_ref, stat_ref, *, stride, apply_in_fq):
    # x_ref: (1,H,W,C) bf16; w_ref: (3,3,C) f32; b_ref: (1,C) f32
    # o_ref: (1,Ho,Wo,C) bf16; xpad_ref: VMEM (1,H+2,W+2,C) f32 halo scratch
    n = pl.program_id(0)
    _, H, W, C = x_ref.shape
    Ho, Wo = o_ref.shape[1], o_ref.shape[2]

    x = x_ref[...].astype(jnp.float32)
    if apply_in_fq:
        inv_s, s, z = _read_q(q_ref)
        x = _fq(x, inv_s, s, z)

    # Halo lives in scratch: zero once at step 0 (only the 1-px border really
    # needs it; interior is overwritten every step), then write the interior.
    # All 9 taps are read back from the scratch (no concat copies; the padded
    # image never sits in vregs).
    @pl.when(n == 0)
    def _():
        xpad_ref[...] = jnp.zeros(xpad_ref.shape, jnp.float32)
    xpad_ref[:, 1:H + 1, 1:W + 1, :] = x

    w = w_ref[...]                       # hoisted: one load, sliced per tap
    bias = b_ref[...]                    # (1, C), hoisted
    acc = jnp.zeros((1, Ho, Wo, C), jnp.float32)
    for kh in range(3):
        for kw in range(3):
            if stride == 1:
                tap = xpad_ref[:, kh:kh + Ho, kw:kw + Wo, :]
            else:
                # Direct strided taps -> no redundant MACs / no subsample pass.
                tap = xpad_ref[:, pl.ds(kh, Ho, stride=2),
                               pl.ds(kw, Wo, stride=2), :]
            acc = acc + tap * w[kh, kw, :]
    acc = jnp.clip(acc + bias, 0.0, 6.0)          # folded-BN bias + ReLU6
    o_ref[...] = acc.astype(o_ref.dtype)

    acc2 = acc.reshape(Ho * Wo, C)                # free reshape (leading dims)
    tile_mn = jnp.min(acc2, axis=0, keepdims=True)
    tile_mx = jnp.max(acc2, axis=0, keepdims=True)
    _update_stats(stat_ref, tile_mn, tile_mx, n)
    _finalize_q(stat_ref, qout_ref, n, pl.num_programs(0) - 1)


def _residual_kernel(q_ref, x_ref, h_ref, o_ref, qout_ref, stat_ref, *,
                     total_rows, tm):
    # r = x + fake_quant(h); lane-dense (TM,128) tiles; emits qparams of r.
    i = pl.program_id(0)
    inv_s, s, z = _read_q(q_ref)
    hq = _fq(h_ref[...].astype(jnp.float32), inv_s, s, z)
    r = x_ref[...].astype(jnp.float32) + hq
    o_ref[...] = r.astype(o_ref.dtype)

    tile_mn, tile_mx = _masked_minmax_rows(r, i, tm, total_rows)
    _update_stats(stat_ref, tile_mn, tile_mx, i)
    _finalize_q(stat_ref, qout_ref, i, pl.num_programs(0) - 1)


def _fakequant_kernel(q_ref, x_ref, o_ref):
    inv_s, s, z = _read_q(q_ref)
    o_ref[...] = _fq(x_ref[...].astype(jnp.float32), inv_s, s, z
                     ).astype(o_ref.dtype)


# ----------------------------------------------------------------------------
# Pallas wrappers
# ----------------------------------------------------------------------------
_QSPEC = pl.BlockSpec((3, 128), lambda i: (0, 0))
_QSHAPE = jax.ShapeDtypeStruct((3, 128), jnp.float32)


def pointwise_conv(x, w, b, qparams, *, relu6, apply_in_fq):
    """1x1 conv over NHWC x; fuses input fake-quant + ReLU6 + output qparams."""
    N, H, W, Cin = x.shape
    Cout = w.shape[1]
    M = N * H * W
    x2 = x.reshape(M, Cin)
    TM = _choose_tile(M, cap=1024)
    T = pl.cdiv(M, TM)
    kernel = functools.partial(_pointwise_kernel, relu6=relu6,
                               apply_in_fq=apply_in_fq, total_rows=M, tm=TM)
    out, qout = pl.pallas_call(
        kernel,
        out_shape=(jax.ShapeDtypeStruct((M, Cout), jnp.bfloat16), _QSHAPE),
        grid=(T,),
        in_specs=[
            _QSPEC,
            pl.BlockSpec((TM, Cin), lambda i: (i, 0)),
            pl.BlockSpec((Cin, Cout), lambda i: (0, 0)),
            pl.BlockSpec((1, Cout), lambda i: (0, 0)),
        ],
        out_specs=(
            pl.BlockSpec((TM, Cout), lambda i: (i, 0)),
            _QSPEC,
        ),
        scratch_shapes=[pltpu.VMEM((2, Cout), jnp.float32)],
        compiler_params=_ARB,
    )(qparams, x2, w, b.reshape(1, Cout))
    return out.reshape(N, H, W, Cout), qout


def depthwise_conv3x3(x, w, b, qparams, *, stride, apply_in_fq):
    """3x3 depthwise conv, pad=1, NHWC; fuses input fq + ReLU6 + qparams."""
    N, H, W, C = x.shape
    Ho = (H - 1) // stride + 1
    Wo = (W - 1) // stride + 1
    kernel = functools.partial(_depthwise_kernel, stride=stride,
                               apply_in_fq=apply_in_fq)
    out, qout = pl.pallas_call(
        kernel,
        out_shape=(jax.ShapeDtypeStruct((N, Ho, Wo, C), jnp.bfloat16), _QSHAPE),
        grid=(N,),
        in_specs=[
            _QSPEC,
            pl.BlockSpec((1, H, W, C), lambda n: (n, 0, 0, 0)),
            pl.BlockSpec((3, 3, C), lambda n: (0, 0, 0)),
            pl.BlockSpec((1, C), lambda n: (0, 0)),
        ],
        out_specs=(
            pl.BlockSpec((1, Ho, Wo, C), lambda n: (n, 0, 0, 0)),
            _QSPEC,
        ),
        scratch_shapes=[pltpu.VMEM((1, H + 2, W + 2, C), jnp.float32),
                        pltpu.VMEM((2, C), jnp.float32)],
        compiler_params=_ARB,
    )(qparams, x, w, b.reshape(1, C))
    return out, qout


def residual_add(x, h, qparams):
    """r = x + fake_quant(h); lane-dense tiles; returns r (f32) + qparams(r)."""
    shape = x.shape
    x2 = _flat2d(x)
    h2 = _flat2d(h)
    M, C = x2.shape
    TM = _choose_tile(M, cap=2048)
    T = pl.cdiv(M, TM)
    kernel = functools.partial(_residual_kernel, total_rows=M, tm=TM)
    out, qout = pl.pallas_call(
        kernel,
        out_shape=(jax.ShapeDtypeStruct((M, C), jnp.float32), _QSHAPE),
        grid=(T,),
        in_specs=[
            _QSPEC,
            pl.BlockSpec((TM, C), lambda i: (i, 0)),
            pl.BlockSpec((TM, C), lambda i: (i, 0)),
        ],
        out_specs=(pl.BlockSpec((TM, C), lambda i: (i, 0)), _QSPEC),
        scratch_shapes=[pltpu.VMEM((2, C), jnp.float32)],
        compiler_params=_ARB,
    )(qparams, x2, h2)
    return out.reshape(shape), qout


def fake_quant_apply(x, qparams):
    """Lane-dense elementwise fake-quant of the block output (f32 result)."""
    shape = x.shape
    x2 = _flat2d(x)
    M, C = x2.shape
    TM = _choose_tile(M, cap=2048)
    T = pl.cdiv(M, TM)
    out = pl.pallas_call(
        _fakequant_kernel,
        out_shape=jax.ShapeDtypeStruct((M, C), jnp.float32),
        grid=(T,),
        in_specs=[_QSPEC, pl.BlockSpec((TM, C), lambda i: (i, 0))],
        out_specs=pl.BlockSpec((TM, C), lambda i: (i, 0)),
        compiler_params=_PAR,
    )(qparams, x2)
    return out.reshape(shape)


# ----------------------------------------------------------------------------
# Parameter setup (glue): BN folding + per-tensor weight fake-quant
# ----------------------------------------------------------------------------
def _fake_quant_weight(w):
    wmin = jnp.minimum(jnp.min(w), 0.0)
    wmax = jnp.maximum(jnp.max(w), 0.0)
    scale = jnp.maximum((wmax - wmin) / QMAX, 1e-8)
    zp = jnp.round(-wmin / scale)
    q = jnp.clip(jnp.round(w / scale) + zp, 0.0, QMAX)
    return (q - zp) * scale


def _make_bn(key, c):
    k1, k2, k3, k4 = jax.random.split(key, 4)
    gamma = 1.0 + 0.1 * jax.random.normal(k1, (c,), jnp.float32)
    beta = 0.05 * jax.random.normal(k2, (c,), jnp.float32)
    mean = 0.1 * jax.random.normal(k3, (c,), jnp.float32)
    var = 1.0 + 0.1 * jax.random.uniform(k4, (c,), jnp.float32)
    return gamma, beta, mean, var


def _fold_bn(gamma, beta, mean, var):
    s = gamma / jnp.sqrt(var + BN_EPS)
    return s, beta - mean * s


def make_params(key, inp, oup, expand_ratio):
    hidden = int(round(inp * expand_ratio))
    keys = jax.random.split(key, 6)
    params = {}
    if expand_ratio != 1:
        w1 = 0.1 * jax.random.normal(keys[0], (inp, hidden), jnp.float32)
        s, b = _fold_bn(*_make_bn(keys[1], hidden))
        params["w1"] = _fake_quant_weight(w1 * s[None, :]).astype(jnp.bfloat16)
        params["b1"] = b
    w_dw = 0.1 * jax.random.normal(keys[2], (3, 3, hidden), jnp.float32)
    s, b = _fold_bn(*_make_bn(keys[3], hidden))
    params["w_dw"] = _fake_quant_weight(w_dw * s[None, None, :])   # f32 (VPU)
    params["b_dw"] = b
    w2 = 0.1 * jax.random.normal(keys[4], (hidden, oup), jnp.float32)
    s, b = _fold_bn(*_make_bn(keys[5], oup))
    params["w2"] = _fake_quant_weight(w2 * s[None, :]).astype(jnp.bfloat16)
    params["b2"] = b
    return params


# ----------------------------------------------------------------------------
# Forward pass (mirrors QuantizedInvertedResidual.forward)
# ----------------------------------------------------------------------------
def inverted_residual_forward(x_nchw, params, *, stride, expand_ratio,
                              use_res_connect, apply_output_fq=True):
    x = jnp.transpose(x_nchw, (0, 2, 3, 1)).astype(jnp.bfloat16)  # NCHW->NHWC
    dummy_q = jnp.zeros((3, 128), jnp.float32)

    h = x
    q = dummy_q
    have_q = False
    if expand_ratio != 1:
        h, q = pointwise_conv(h, params["w1"], params["b1"], dummy_q,
                              relu6=True, apply_in_fq=False)
        have_q = True

    h, q = depthwise_conv3x3(h, params["w_dw"], params["b_dw"], q,
                             stride=stride, apply_in_fq=have_q)

    h, q = pointwise_conv(h, params["w2"], params["b2"], q,
                          relu6=False, apply_in_fq=True)

    if use_res_connect:
        # NOTE: the fq of the projected output needs its *global* range (q),
        # so the add cannot be folded into the project matmul itself.
        pre, q = residual_add(x, h, q)
    else:
        pre = h

    if not apply_output_fq:
        # Defer the output fake-quant into the next quant-aware consumer
        # (reuses the apply_in_fq-on-load path): saves one HBM round trip.
        return jnp.transpose(pre.astype(jnp.float32), (0, 3, 1, 2)), q

    out = fake_quant_apply(pre, q)
    return jnp.transpose(out, (0, 3, 1, 2))  # NHWC -> NCHW


# ----------------------------------------------------------------------------
# Pure-JAX reference (test only)
# ----------------------------------------------------------------------------
def _ref_qparams(x):
    xmin = jnp.minimum(jnp.min(x), 0.0)
    xmax = jnp.maximum(jnp.max(x), 0.0)
    scale = jnp.maximum((xmax - xmin) / QMAX, 1e-8)
    zp = jnp.round(-xmin / scale)
    return 1.0 / scale, scale, zp


def reference_forward(x_nchw, params, *, stride, expand_ratio, use_res_connect):
    hi = jax.lax.Precision.HIGHEST
    x = jnp.transpose(x_nchw, (0, 2, 3, 1)).astype(jnp.float32)
    h = x
    if expand_ratio != 1:
        w1 = params["w1"].astype(jnp.float32)
        h = jnp.clip(jnp.einsum("nhwc,cd->nhwd", h, w1, precision=hi)
                     + params["b1"], 0.0, 6.0)
        h = _fq(h, *_ref_qparams(h))
    C = params["w_dw"].shape[-1]
    h = lax.conv_general_dilated(
        h, params["w_dw"].reshape(3, 3, 1, C),
        window_strides=(stride, stride), padding=((1, 1), (1, 1)),
        dimension_numbers=("NHWC", "HWIO", "NHWC"),
        feature_group_count=C, precision=hi)
    h = jnp.clip(h + params["b_dw"], 0.0, 6.0)
    h = _fq(h, *_ref_qparams(h))
    w2 = params["w2"].astype(jnp.float32)
    h = jnp.einsum("nhwc,cd->nhwd", h, w2, precision=hi) + params["b2"]
    h = _fq(h, *_ref_qparams(h))
    if use_res_connect:
        r = x + h
        h = _fq(r, *_ref_qparams(r))
    return jnp.transpose(h, (0, 3, 1, 2))


def _check_close(y, y_ref, tag):
    d = jnp.abs(jnp.asarray(y, jnp.float32) - jnp.asarray(y_ref, jnp.float32))
    mx, mean = float(jnp.max(d)), float(jnp.mean(d))
    # Loose tolerance: bf16 intermediates / bf16 MXU operands + per-tensor
    # dynamic ranges mean a small fraction of values can flip by one 8-bit
    # quantization step (~range/255) vs the f32 HIGHEST reference.
    assert mx < 0.5 and mean < 0.05, (tag, mx, mean)


# ----------------------------------------------------------------------------
if __name__ == "__main__":
    key = jax.random.PRNGKey(0)
    kx, kp1, kp2 = jax.random.split(key, 3)

    fwd = jax.jit(inverted_residual_forward,
                  static_argnames=("stride", "expand_ratio", "use_res_connect",
                                   "apply_output_fq"))

    # Config 1: stride=1, inp == oup, expand_ratio=6 -> residual branch.
    inp, oup, stride, er = 8, 8, 1, 6
    x = jax.random.normal(kx, (2, inp, 16, 16), jnp.float32)  # NCHW (PyTorch)
    params1 = make_params(kp1, inp, oup, er)
    y1 = jax.block_until_ready(
        fwd(x, params1, stride=stride, expand_ratio=er,
            use_res_connect=(stride == 1 and inp == oup)))
    assert y1.shape == (2, oup, 16, 16), y1.shape
    _check_close(y1, reference_forward(x, params1, stride=stride,
                                       expand_ratio=er, use_res_connect=True),
                 "config1")

    # Config 2: stride=2, expand_ratio=1 (no expand conv), inp != oup.
    inp2, oup2, stride2, er2 = 8, 16, 2, 1
    params2 = make_params(kp2, inp2, oup2, er2)
    y2 = jax.block_until_ready(
        fwd(x, params2, stride=stride2, expand_ratio=er2, use_res_connect=False))
    assert y2.shape == (2, oup2, 8, 8), y2.shape
    _check_close(y2, reference_forward(x, params2, stride=stride2,
                                       expand_ratio=er2, use_res_connect=False),
                 "config2")

    print("KERNEL_OK")
</pallas_src>

<mosaic_0001>
module attributes {stable_mosaic.version = 11 : i64} {
  func.func @_pointwise_kernel(%arg0: i32, %arg1: memref<3x128xf32, #tpu.memory_space<vmem>>, %arg2: memref<256x8xbf16, #tpu.memory_space<vmem>>, %arg3: memref<8x48xbf16, #tpu.memory_space<vmem>>, %arg4: memref<1x48xf32, #tpu.memory_space<vmem>>, %arg5: memref<256x48xbf16, #tpu.memory_space<vmem>>, %arg6: memref<3x128xf32, #tpu.memory_space<vmem>>, %arg7: memref<2x48xf32, #tpu.memory_space<vmem>>) attributes {dimension_semantics = [#tpu.dimension_semantics<arbitrary>], iteration_bounds = array<i64: 2>, scalar_prefetch = 0 : i64, scratch_operands = 1 : i64, tpu.core_type = #tpu.core_type<tc>, window_params = [{pipeline_mode = #tpu.pipeline_mode<synchronous>, transform_indices = @transform_0, window_bounds = array<i64: 3, 128>}, {transform_indices = @transform_1, window_bounds = array<i64: 256, 8>}, {pipeline_mode = #tpu.pipeline_mode<synchronous>, transform_indices = @transform_2, window_bounds = array<i64: 8, 48>}, {pipeline_mode = #tpu.pipeline_mode<synchronous>, transform_indices = @transform_3, window_bounds = array<i64: 1, 48>}, {transform_indices = @transform_4, window_bounds = array<i64: 256, 48>}, {pipeline_mode = #tpu.pipeline_mode<synchronous>, transform_indices = @transform_5, window_bounds = array<i64: 3, 128>}]} {
    %c0 = arith.constant 0 : index
    %c0_0 = arith.constant 0 : index
    %0 = vector.load %arg2[%c0, %c0_0] : memref<256x8xbf16, #tpu.memory_space<vmem>>, vector<256x8xbf16>
    %c0_1 = arith.constant 0 : index
    %c0_2 = arith.constant 0 : index
    %1 = vector.load %arg3[%c0_1, %c0_2] : memref<8x48xbf16, #tpu.memory_space<vmem>>, vector<8x48xbf16>
    %cst = arith.constant dense<0.000000e+00> : vector<256x48xf32>
    %2 = tpu.matmul %0, %1, %cst {dimension_numbers = #tpu.dot_dimension_numbers<[1], [0], [0], [1], [0, 0, 1, 1], [], []>} : vector<256x8xbf16>, vector<8x48xbf16>, vector<256x48xf32> -> vector<256x48xf32>
    %c0_3 = arith.constant 0 : index
    %c0_4 = arith.constant 0 : index
    %3 = vector.load %arg4[%c0_3, %c0_4] : memref<1x48xf32, #tpu.memory_space<vmem>>, vector<1x48xf32>
    %4 = vector.broadcast %3 : vector<1x48xf32> to vector<256x48xf32>
    %5 = arith.addf %2, %4 : vector<256x48xf32>
    %cst_5 = arith.constant 0.000000e+00 : f32
    %cst_6 = arith.constant 6.000000e+00 : f32
    %6 = vector.broadcast %cst_5 : f32 to vector<256x48xf32>
    %7 = arith.maximumf %6, %5 : vector<256x48xf32>
    %8 = vector.broadcast %cst_6 : f32 to vector<256x48xf32>
    %9 = arith.minimumf %8, %7 : vector<256x48xf32>
    %10 = arith.truncf %9 : vector<256x48xf32> to vector<256x48xbf16>
    %c0_7 = arith.constant 0 : index
    %c0_8 = arith.constant 0 : index
    %11 = vector.load %arg5[%c0_7, %c0_8] : memref<256x48xbf16, #tpu.memory_space<vmem>>, vector<256x48xbf16>
    tpu.vector_store %arg5[%c0_7, %c0_8], %10 {strides = array<i32>} : memref<256x48xbf16, #tpu.memory_space<vmem>>, vector<256x48xbf16>,
    %cst_9 = arith.constant dense<0x7F800000> : vector<48xf32>
    %12 = vector.multi_reduction <minimumf>, %9, %cst_9 [0] : vector<256x48xf32> to vector<48xf32>
    %13 = vector.shape_cast %12 : vector<48xf32> to vector<1x48xf32>
    %cst_10 = arith.constant dense<0xFF800000> : vector<48xf32>
    %14 = vector.multi_reduction <maximumf>, %9, %cst_10 [0] : vector<256x48xf32> to vector<48xf32>
    %15 = vector.shape_cast %14 : vector<48xf32> to vector<1x48xf32>
    %c0_i32 = arith.constant 0 : i32
    %16 = arith.cmpi eq, %arg0, %c0_i32 : i32
    %17 = arith.extui %16 : i1 to i32
    %c0_i32_11 = arith.constant 0 : i32
    %18 = arith.cmpi ne, %17, %c0_i32_11 : i32
    scf.if %18 {
      %c0_15 = arith.constant 0 : index
      %c0_16 = arith.constant 0 : index
      %25 = vector.load %arg7[%c0_15, %c0_16] : memref<2x48xf32, #tpu.memory_space<vmem>>, vector<1x48xf32>
      tpu.vector_store %arg7[%c0_15, %c0_16], %13 {strides = array<i32>} : memref<2x48xf32, #tpu.memory_space<vmem>>, vector<1x48xf32>,
      %c1 = arith.constant 1 : index
      %c0_17 = arith.constant 0 : index
      %26 = vector.load %arg7[%c1, %c0_17] : memref<2x48xf32, #tpu.memory_space<vmem>>, vector<1x48xf32>
      tpu.vector_store %arg7[%c1, %c0_17], %15 {strides = array<i32>} : memref<2x48xf32, #tpu.memory_space<vmem>>, vector<1x48xf32>,
    } else {
    }
    %c0_i32_12 = arith.constant 0 : i32
    %19 = arith.cmpi ne, %arg0, %c0_i32_12 : i32
    %20 = arith.extui %19 : i1 to i32
    %c0_i32_13 = arith.constant 0 : i32
    %21 = arith.cmpi ne, %20, %c0_i32_13 : i32
    scf.if %21 {
      %c0_15 = arith.constant 0 : index
      %c0_16 = arith.constant 0 : index
      %25 = vector.load %arg7[%c0_15, %c0_16] : memref<2x48xf32, #tpu.memory_space<vmem>>, vector<1x48xf32>
      %26 = arith.minimumf %25, %13 : vector<1x48xf32>
      %c0_17 = arith.constant 0 : index
      %c0_18 = arith.constant 0 : index
      %27 = vector.load %arg7[%c0_17, %c0_18] : memref<2x48xf32, #tpu.memory_space<vmem>>, vector<1x48xf32>
      tpu.vector_store %arg7[%c0_17, %c0_18], %26 {strides = array<i32>} : memref<2x48xf32, #tpu.memory_space<vmem>>, vector<1x48xf32>,
      %c1 = arith.constant 1 : index
      %c0_19 = arith.constant 0 : index
      %28 = vector.load %arg7[%c1, %c0_19] : memref<2x48xf32, #tpu.memory_space<vmem>>, vector<1x48xf32>
      %29 = arith.maximumf %28, %15 : vector<1x48xf32>
      %c1_20 = arith.constant 1 : index
      %c0_21 = arith.constant 0 : index
      %30 = vector.load %arg7[%c1_20, %c0_21] : memref<2x48xf32, #tpu.memory_space<vmem>>, vector<1x48xf32>
      tpu.vector_store %arg7[%c1_20, %c0_21], %29 {strides = array<i32>} : memref<2x48xf32, #tpu.memory_space<vmem>>, vector<1x48xf32>,
    } else {
    }
    %c1_i32 = arith.constant 1 : i32
    %22 = arith.cmpi eq, %arg0, %c1_i32 : i32
    %23 = arith.extui %22 : i1 to i32
    %c0_i32_14 = arith.constant 0 : i32
    %24 = arith.cmpi ne, %23, %c0_i32_14 : i32
    scf.if %24 {
      %c0_15 = arith.constant 0 : index
      %c0_16 = arith.constant 0 : index
      %25 = vector.load %arg7[%c0_15, %c0_16] : memref<2x48xf32, #tpu.memory_space<vmem>>, vector<1x48xf32>
      %cst_17 = arith.constant dense<0x7F800000> : vector<1xf32>
      %26 = vector.multi_reduction <minimumf>, %25, %cst_17 [1] : vector<1x48xf32> to vector<1xf32>
      %27 = vector.shape_cast %26 : vector<1xf32> to vector<1x1xf32>
      %cst_18 = arith.constant 0.000000e+00 : f32
      %28 = vector.broadcast %cst_18 : f32 to vector<1x1xf32>
      %29 = arith.minimumf %27, %28 : vector<1x1xf32>
      %c1 = arith.constant 1 : index
      %c0_19 = arith.constant 0 : index
      %30 = vector.load %arg7[%c1, %c0_19] : memref<2x48xf32, #tpu.memory_space<vmem>>, vector<1x48xf32>
      %cst_20 = arith.constant dense<0xFF800000> : vector<1xf32>
      %31 = vector.multi_reduction <maximumf>, %30, %cst_20 [1] : vector<1x48xf32> to vector<1xf32>
      %32 = vector.shape_cast %31 : vector<1xf32> to vector<1x1xf32>
      %cst_21 = arith.constant 0.000000e+00 : f32
      %33 = vector.broadcast %cst_21 : f32 to vector<1x1xf32>
      %34 = arith.maximumf %32, %33 : vector<1x1xf32>
      %35 = arith.subf %34, %29 : vector<1x1xf32>
      %cst_22 = arith.constant 0.00392156886 : f32
      %36 = vector.broadcast %cst_22 : f32 to vector<1x1xf32>
      %37 = arith.mulf %35, %36 : vector<1x1xf32>
      %cst_23 = arith.constant 9.99999993E-9 : f32
      %38 = vector.broadcast %cst_23 : f32 to vector<1x1xf32>
      %39 = arith.maximumf %37, %38 : vector<1x1xf32>
      %cst_24 = arith.constant 0.000000e+00 : f32
      %40 = vector.broadcast %cst_24 : f32 to vector<1x1xf32>
      %41 = arith.subf %40, %29 : vector<1x1xf32>
      %42 = arith.divf %41, %39 : vector<1x1xf32>
      %43 = math.roundeven %42 : vector<1x1xf32>
      %cst_25 = arith.constant 1.000000e+00 : f32
      %44 = vector.broadcast %cst_25 : f32 to vector<1x1xf32>
      %45 = arith.divf %44, %39 : vector<1x1xf32>
      %46 = vector.shape_cast %45 : vector<1x1xf32> to vector<1x1xf32>
      %47 = vector.broadcast %46 : vector<1x1xf32> to vector<1x128xf32>
      %c0_26 = arith.constant 0 : index
      %c0_27 = arith.constant 0 : index
      %48 = vector.load %arg6[%c0_26, %c0_27] : memref<3x128xf32, #tpu.memory_space<vmem>>, vector<1x128xf32>
      tpu.vector_store %arg6[%c0_26, %c0_27], %47 {strides = array<i32>} : memref<3x128xf32, #tpu.memory_space<vmem>>, vector<1x128xf32>,
      %49 = vector.shape_cast %39 : vector<1x1xf32> to vector<1x1xf32>
      %50 = vector.broadcast %49 : vector<1x1xf32> to vector<1x128xf32>
      %c1_28 = arith.constant 1 : index
      %c0_29 = arith.constant 0 : index
      %51 = vector.load %arg6[%c1_28, %c0_29] : memref<3x128xf32, #tpu.memory_space<vmem>>, vector<1x128xf32>
      tpu.vector_store %arg6[%c1_28, %c0_29], %50 {strides = array<i32>} : memref<3x128xf32, #tpu.memory_space<vmem>>, vector<1x128xf32>,
      %52 = vector.shape_cast %43 : vector<1x1xf32> to vector<1x1xf32>
      %53 = vector.broadcast %52 : vector<1x1xf32> to vector<1x128xf32>
      %c2 = arith.constant 2 : index
      %c0_30 = arith.constant 0 : index
      %54 = vector.load %arg6[%c2, %c0_30] : memref<3x128xf32, #tpu.memory_space<vmem>>, vector<1x128xf32>
      tpu.vector_store %arg6[%c2, %c0_30], %53 {strides = array<i32>} : memref<3x128xf32, #tpu.memory_space<vmem>>, vector<1x128xf32>,
    } else {
    }
    return
  }
  func.func @transform_0(%arg0: i32) -> (i32, i32) {
    %c0_i32 = arith.constant 0 : i32
    %c0_i32_0 = arith.constant 0 : i32
    %c0_i32_1 = arith.constant 0 : i32
    return %c0_i32, %c0_i32_0 : i32, i32
  }
  func.func @transform_1(%arg0: i32) -> (i32, i32) {
    %c0_i32 = arith.constant 0 : i32
    %c0_i32_0 = arith.constant 0 : i32
    return %arg0, %c0_i32 : i32, i32
  }
  func.func @transform_2(%arg0: i32) -> (i32, i32) {
    %c0_i32 = arith.constant 0 : i32
    %c0_i32_0 = arith.constant 0 : i32
    %c0_i32_1 = arith.constant 0 : i32
    return %c0_i32, %c0_i32_0 : i32, i32
  }
  func.func @transform_3(%arg0: i32) -> (i32, i32) {
    %c0_i32 = arith.constant 0 : i32
    %c0_i32_0 = arith.constant 0 : i32
    %c0_i32_1 = arith.constant 0 : i32
    return %c0_i32, %c0_i32_0 : i32, i32
  }
  func.func @transform_4(%arg0: i32) -> (i32, i32) {
    %c0_i32 = arith.constant 0 : i32
    %c0_i32_0 = arith.constant 0 : i32
    return %arg0, %c0_i32 : i32, i32
  }
  func.func @transform_5(%arg0: i32) -> (i32, i32) {
    %c0_i32 = arith.constant 0 : i32
    %c0_i32_0 = arith.constant 0 : i32
    %c0_i32_1 = arith.constant 0 : i32
    return %c0_i32, %c0_i32_0 : i32, i32
  }
}

module attributes {stable_mosaic.version = 11 : i64} {
  func.func @_pointwise_kernel(%arg0: i32, %arg1: memref<3x128xf32, #tpu.memory_space<vmem>>, %arg2: memref<256x48xbf16, #tpu.memory_space<vmem>>, %arg3: memref<48x8xbf16, #tpu.memory_space<vmem>>, %arg4: memref<1x8xf32, #tpu.memory_space<vmem>>, %arg5: memref<256x8xbf16, #tpu.memory_space<vmem>>, %arg6: memref<3x128xf32, #tpu.memory_space<vmem>>, %arg7: memref<2x8xf32, #tpu.memory_space<vmem>>) attributes {dimension_semantics = [#tpu.dimension_semantics<arbitrary>], iteration_bounds = array<i64: 2>, scalar_prefetch = 0 : i64, scratch_operands = 1 : i64, tpu.core_type = #tpu.core_type<tc>, window_params = [{pipeline_mode = #tpu.pipeline_mode<synchronous>, transform_indices = @transform_0, window_bounds = array<i64: 3, 128>}, {transform_indices = @transform_1, window_bounds = array<i64: 256, 48>}, {pipeline_mode = #tpu.pipeline_mode<synchronous>, transform_indices = @transform_2, window_bounds = array<i64: 48, 8>}, {pipeline_mode = #tpu.pipeline_mode<synchronous>, transform_indices = @transform_3, window_bounds = array<i64: 1, 8>}, {transform_indices = @transform_4, window_bounds = array<i64: 256, 8>}, {pipeline_mode = #tpu.pipeline_mode<synchronous>, transform_indices = @transform_5, window_bounds = array<i64: 3, 128>}]} {
    %c0 = arith.constant 0 : index
    %c0_0 = arith.constant 0 : index
    %0 = vector.load %arg2[%c0, %c0_0] : memref<256x48xbf16, #tpu.memory_space<vmem>>, vector<256x48xbf16>
    %c0_1 = arith.constant 0 : index
    %c0_2 = arith.constant 0 : index
    %1 = vector.load %arg1[%c0_1, %c0_2] : memref<3x128xf32, #tpu.memory_space<vmem>>, vector<1x1xf32>
    %c1 = arith.constant 1 : index
    %c0_3 = arith.constant 0 : index
    %2 = vector.load %arg1[%c1, %c0_3] : memref<3x128xf32, #tpu.memory_space<vmem>>, vector<1x1xf32>
    %c2 = arith.constant 2 : index
    %c0_4 = arith.constant 0 : index
    %3 = vector.load %arg1[%c2, %c0_4] : memref<3x128xf32, #tpu.memory_space<vmem>>, vector<1x1xf32>
    %4 = arith.extf %0 : vector<256x48xbf16> to vector<256x48xf32>
    %5 = vector.broadcast %1 : vector<1x1xf32> to vector<256x48xf32>
    %6 = arith.mulf %4, %5 : vector<256x48xf32>
    %7 = math.roundeven %6 : vector<256x48xf32>
    %8 = vector.broadcast %3 : vector<1x1xf32> to vector<256x48xf32>
    %9 = arith.addf %7, %8 : vector<256x48xf32>
    %cst = arith.constant 0.000000e+00 : f32
    %cst_5 = arith.constant 2.550000e+02 : f32
    %10 = vector.broadcast %cst : f32 to vector<256x48xf32>
    %11 = arith.maximumf %10, %9 : vector<256x48xf32>
    %12 = vector.broadcast %cst_5 : f32 to vector<256x48xf32>
    %13 = arith.minimumf %12, %11 : vector<256x48xf32>
    %14 = vector.broadcast %3 : vector<1x1xf32> to vector<256x48xf32>
    %15 = arith.subf %13, %14 : vector<256x48xf32>
    %16 = vector.broadcast %2 : vector<1x1xf32> to vector<256x48xf32>
    %17 = arith.mulf %15, %16 : vector<256x48xf32>
    %18 = arith.truncf %17 : vector<256x48xf32> to vector<256x48xbf16>
    %c0_6 = arith.constant 0 : index
    %c0_7 = arith.constant 0 : index
    %19 = vector.load %arg3[%c0_6, %c0_7] : memref<48x8xbf16, #tpu.memory_space<vmem>>, vector<48x8xbf16>
    %cst_8 = arith.constant dense<0.000000e+00> : vector<256x8xf32>
    %20 = tpu.matmul %18, %19, %cst_8 {dimension_numbers = #tpu.dot_dimension_numbers<[1], [0], [0], [1], [0, 0, 1, 1], [], []>} : vector<256x48xbf16>, vector<48x8xbf16>, vector<256x8xf32> -> vector<256x8xf32>
    %c0_9 = arith.constant 0 : index
    %c0_10 = arith.constant 0 : index
    %21 = vector.load %arg4[%c0_9, %c0_10] : memref<1x8xf32, #tpu.memory_space<vmem>>, vector<1x8xf32>
    %22 = vector.broadcast %21 : vector<1x8xf32> to vector<256x8xf32>
    %23 = arith.addf %20, %22 : vector<256x8xf32>
    %24 = arith.truncf %23 : vector<256x8xf32> to vector<256x8xbf16>
    %c0_11 = arith.constant 0 : index
    %c0_12 = arith.constant 0 : index
    %25 = vector.load %arg5[%c0_11, %c0_12] : memref<256x8xbf16, #tpu.memory_space<vmem>>, vector<256x8xbf16>
    tpu.vector_store %arg5[%c0_11, %c0_12], %24 {strides = array<i32>} : memref<256x8xbf16, #tpu.memory_space<vmem>>, vector<256x8xbf16>,
    %cst_13 = arith.constant dense<0x7F800000> : vector<8xf32>
    %26 = vector.multi_reduction <minimumf>, %23, %cst_13 [0] : vector<256x8xf32> to vector<8xf32>
    %27 = vector.shape_cast %26 : vector<8xf32> to vector<1x8xf32>
    %cst_14 = arith.constant dense<0xFF800000> : vector<8xf32>
    %28 = vector.multi_reduction <maximumf>, %23, %cst_14 [0] : vector<256x8xf32> to vector<8xf32>
    %29 = vector.shape_cast %28 : vector<8xf32> to vector<1x8xf32>
    %c0_i32 = arith.constant 0 : i32
    %30 = arith.cmpi eq, %arg0, %c0_i32 : i32
    %31 = arith.extui %30 : i1 to i32
    %c0_i32_15 = arith.constant 0 : i32
    %32 = arith.cmpi ne, %31, %c0_i32_15 : i32
    scf.if %32 {
      %c0_19 = arith.constant 0 : index
      %c0_20 = arith.constant 0 : index
      %39 = vector.load %arg7[%c0_19, %c0_20] : memref<2x8xf32, #tpu.memory_space<vmem>>, vector<1x8xf32>
      tpu.vector_store %arg7[%c0_19, %c0_20], %27 {strides = array<i32>} : memref<2x8xf32, #tpu.memory_space<vmem>>, vector<1x8xf32>,
      %c1_21 = arith.constant 1 : index
      %c0_22 = arith.constant 0 : index
      %40 = vector.load %arg7[%c1_21, %c0_22] : memref<2x8xf32, #tpu.memory_space<vmem>>, vector<1x8xf32>
      tpu.vector_store %arg7[%c1_21, %c0_22], %29 {strides = array<i32>} : memref<2x8xf32, #tpu.memory_space<vmem>>, vector<1x8xf32>,
    } else {
    }
    %c0_i32_16 = arith.constant 0 : i32
    %33 = arith.cmpi ne, %arg0, %c0_i32_16 : i32
    %34 = arith.extui %33 : i1 to i32
    %c0_i32_17 = arith.constant 0 : i32
    %35 = arith.cmpi ne, %34, %c0_i32_17 : i32
    scf.if %35 {
      %c0_19 = arith.constant 0 : index
      %c0_20 = arith.constant 0 : index
      %39 = vector.load %arg7[%c0_19, %c0_20] : memref<2x8xf32, #tpu.memory_space<vmem>>, vector<1x8xf32>
      %40 = arith.minimumf %39, %27 : vector<1x8xf32>
      %c0_21 = arith.constant 0 : index
      %c0_22 = arith.constant 0 : index
      %41 = vector.load %arg7[%c0_21, %c0_22] : memref<2x8xf32, #tpu.memory_space<vmem>>, vector<1x8xf32>
      tpu.vector_store %arg7[%c0_21, %c0_22], %40 {strides = array<i32>} : memref<2x8xf32, #tpu.memory_space<vmem>>, vector<1x8xf32>,
      %c1_23 = arith.constant 1 : index
      %c0_24 = arith.constant 0 : index
      %42 = vector.load %arg7[%c1_23, %c0_24] : memref<2x8xf32, #tpu.memory_space<vmem>>, vector<1x8xf32>
      %43 = arith.maximumf %42, %29 : vector<1x8xf32>
      %c1_25 = arith.constant 1 : index
      %c0_26 = arith.constant 0 : index
      %44 = vector.load %arg7[%c1_25, %c0_26] : memref<2x8xf32, #tpu.memory_space<vmem>>, vector<1x8xf32>
      tpu.vector_store %arg7[%c1_25, %c0_26], %43 {strides = array<i32>} : memref<2x8xf32, #tpu.memory_space<vmem>>, vector<1x8xf32>,
    } else {
    }
    %c1_i32 = arith.constant 1 : i32
    %36 = arith.cmpi eq, %arg0, %c1_i32 : i32
    %37 = arith.extui %36 : i1 to i32
    %c0_i32_18 = arith.constant 0 : i32
    %38 = arith.cmpi ne, %37, %c0_i32_18 : i32
    scf.if %38 {
      %c0_19 = arith.constant 0 : index
      %c0_20 = arith.constant 0 : index
      %39 = vector.load %arg7[%c0_19, %c0_20] : memref<2x8xf32, #tpu.memory_space<vmem>>, vector<1x8xf32>
      %cst_21 = arith.constant dense<0x7F800000> : vector<1xf32>
      %40 = vector.multi_reduction <minimumf>, %39, %cst_21 [1] : vector<1x8xf32> to vector<1xf32>
      %41 = vector.shape_cast %40 : vector<1xf32> to vector<1x1xf32>
      %cst_22 = arith.constant 0.000000e+00 : f32
      %42 = vector.broadcast %cst_22 : f32 to vector<1x1xf32>
      %43 = arith.minimumf %41, %42 : vector<1x1xf32>
      %c1_23 = arith.constant 1 : index
      %c0_24 = arith.constant 0 : index
      %44 = vector.load %arg7[%c1_23, %c0_24] : memref<2x8xf32, #tpu.memory_space<vmem>>, vector<1x8xf32>
      %cst_25 = arith.constant dense<0xFF800000> : vector<1xf32>
      %45 = vector.multi_reduction <maximumf>, %44, %cst_25 [1] : vector<1x8xf32> to vector<1xf32>
      %46 = vector.shape_cast %45 : vector<1xf32> to vector<1x1xf32>
      %cst_26 = arith.constant 0.000000e+00 : f32
      %47 = vector.broadcast %cst_26 : f32 to vector<1x1xf32>
      %48 = arith.maximumf %46, %47 : vector<1x1xf32>
      %49 = arith.subf %48, %43 : vector<1x1xf32>
      %cst_27 = arith.constant 0.00392156886 : f32
      %50 = vector.broadcast %cst_27 : f32 to vector<1x1xf32>
      %51 = arith.mulf %49, %50 : vector<1x1xf32>
      %cst_28 = arith.constant 9.99999993E-9 : f32
      %52 = vector.broadcast %cst_28 : f32 to vector<1x1xf32>
      %53 = arith.maximumf %51, %52 : vector<1x1xf32>
      %cst_29 = arith.constant 0.000000e+00 : f32
      %54 = vector.broadcast %cst_29 : f32 to vector<1x1xf32>
      %55 = arith.subf %54, %43 : vector<1x1xf32>
      %56 = arith.divf %55, %53 : vector<1x1xf32>
      %57 = math.roundeven %56 : vector<1x1xf32>
      %cst_30 = arith.constant 1.000000e+00 : f32
      %58 = vector.broadcast %cst_30 : f32 to vector<1x1xf32>
      %59 = arith.divf %58, %53 : vector<1x1xf32>
      %60 = vector.shape_cast %59 : vector<1x1xf32> to vector<1x1xf32>
      %61 = vector.broadcast %60 : vector<1x1xf32> to vector<1x128xf32>
      %c0_31 = arith.constant 0 : index
      %c0_32 = arith.constant 0 : index
      %62 = vector.load %arg6[%c0_31, %c0_32] : memref<3x128xf32, #tpu.memory_space<vmem>>, vector<1x128xf32>
      tpu.vector_store %arg6[%c0_31, %c0_32], %61 {strides = array<i32>} : memref<3x128xf32, #tpu.memory_space<vmem>>, vector<1x128xf32>,
      %63 = vector.shape_cast %53 : vector<1x1xf32> to vector<1x1xf32>
      %64 = vector.broadcast %63 : vector<1x1xf32> to vector<1x128xf32>
      %c1_33 = arith.constant 1 : index
      %c0_34 = arith.constant 0 : index
      %65 = vector.load %arg6[%c1_33, %c0_34] : memref<3x128xf32, #tpu.memory_space<vmem>>, vector<1x128xf32>
      tpu.vector_store %arg6[%c1_33, %c0_34], %64 {strides = array<i32>} : memref<3x128xf32, #tpu.memory_space<vmem>>, vector<1x128xf32>,
      %66 = vector.shape_cast %57 : vector<1x1xf32> to vector<1x1xf32>
      %67 = vector.broadcast %66 : vector<1x1xf32> to vector<1x128xf32>
      %c2_35 = arith.constant 2 : index
      %c0_36 = arith.constant 0 : index
      %68 = vector.load %arg6[%c2_35, %c0_36] : memref<3x128xf32, #tpu.memory_space<vmem>>, vector<1x128xf32>
      tpu.vector_store %arg6[%c2_35, %c0_36], %67 {strides = array<i32>} : memref<3x128xf32, #tpu.memory_space<vmem>>, vector<1x128xf32>,
    } else {
    }
    return
  }
  func.func @transform_0(%arg0: i32) -> (i32, i32) {
    %c0_i32 = arith.constant 0 : i32
    %c0_i32_0 = arith.constant 0 : i32
    %c0_i32_1 = arith.constant 0 : i32
    return %c0_i32, %c0_i32_0 : i32, i32
  }
  func.func @transform_1(%arg0: i32) -> (i32, i32) {
    %c0_i32 = arith.constant 0 : i32
    %c0_i32_0 = arith.constant 0 : i32
    return %arg0, %c0_i32 : i32, i32
  }
  func.func @transform_2(%arg0: i32) -> (i32, i32) {
    %c0_i32 = arith.constant 0 : i32
    %c0_i32_0 = arith.constant 0 : i32
    %c0_i32_1 = arith.constant 0 : i32
    return %c0_i32, %c0_i32_0 : i32, i32
  }
  func.func @transform_3(%arg0: i32) -> (i32, i32) {
    %c0_i32 = arith.constant 0 : i32
    %c0_i32_0 = arith.constant 0 : i32
    %c0_i32_1 = arith.constant 0 : i32
    return %c0_i32, %c0_i32_0 : i32, i32
  }
  func.func @transform_4(%arg0: i32) -> (i32, i32) {
    %c0_i32 = arith.constant 0 : i32
    %c0_i32_0 = arith.constant 0 : i32
    return %arg0, %c0_i32 : i32, i32
  }
  func.func @transform_5(%arg0: i32) -> (i32, i32) {
    %c0_i32 = arith.constant 0 : i32
    %c0_i32_0 = arith.constant 0 : i32
    %c0_i32_1 = arith.constant 0 : i32
    return %c0_i32, %c0_i32_0 : i32, i32
  }
}

module attributes {stable_mosaic.version = 11 : i64} {
  func.func @_depthwise_kernel(%arg0: i32, %arg1: memref<3x128xf32, #tpu.memory_space<vmem>>, %arg2: memref<1x16x16x48xbf16, #tpu.memory_space<vmem>>, %arg3: memref<3x3x48xf32, #tpu.memory_space<vmem>>, %arg4: memref<1x48xf32, #tpu.memory_space<vmem>>, %arg5: memref<1x16x16x48xbf16, #tpu.memory_space<vmem>>, %arg6: memref<3x128xf32, #tpu.memory_space<vmem>>, %arg7: memref<1x18x18x48xf32, #tpu.memory_space<vmem>>, %arg8: memref<2x48xf32, #tpu.memory_space<vmem>>) attributes {dimension_semantics = [#tpu.dimension_semantics<arbitrary>], iteration_bounds = array<i64: 2>, scalar_prefetch = 0 : i64, scratch_operands = 2 : i64, tpu.core_type = #tpu.core_type<tc>, window_params = [{pipeline_mode = #tpu.pipeline_mode<synchronous>, transform_indices = @transform_0, window_bounds = array<i64: 3, 128>}, {transform_indices = @transform_1, window_bounds = array<i64: 1, 16, 16, 48>}, {pipeline_mode = #tpu.pipeline_mode<synchronous>, transform_indices = @transform_2, window_bounds = array<i64: 3, 3, 48>}, {pipeline_mode = #tpu.pipeline_mode<synchronous>, transform_indices = @transform_3, window_bounds = array<i64: 1, 48>}, {transform_indices = @transform_4, window_bounds = array<i64: 1, 16, 16, 48>}, {pipeline_mode = #tpu.pipeline_mode<synchronous>, transform_indices = @transform_5, window_bounds = array<i64: 3, 128>}]} {
    %c0 = arith.constant 0 : index
    %c0_0 = arith.constant 0 : index
    %c0_1 = arith.constant 0 : index
    %c0_2 = arith.constant 0 : index
    %0 = vector.load %arg2[%c0, %c0_0, %c0_1, %c0_2] : memref<1x16x16x48xbf16, #tpu.memory_space<vmem>>, vector<1x16x16x48xbf16>
    %1 = arith.extf %0 : vector<1x16x16x48xbf16> to vector<1x16x16x48xf32>
    %c0_3 = arith.constant 0 : index
    %c0_4 = arith.constant 0 : index
    %2 = vector.load %arg1[%c0_3, %c0_4] : memref<3x128xf32, #tpu.memory_space<vmem>>, vector<1x1xf32>
    %c1 = arith.constant 1 : index
    %c0_5 = arith.constant 0 : index
    %3 = vector.load %arg1[%c1, %c0_5] : memref<3x128xf32, #tpu.memory_space<vmem>>, vector<1x1xf32>
    %c2 = arith.constant 2 : index
    %c0_6 = arith.constant 0 : index
    %4 = vector.load %arg1[%c2, %c0_6] : memref<3x128xf32, #tpu.memory_space<vmem>>, vector<1x1xf32>
    %5 = vector.shape_cast %2 : vector<1x1xf32> to vector<1x1x1x1xf32>
    %6 = vector.broadcast %5 : vector<1x1x1x1xf32> to vector<1x16x16x48xf32>
    %7 = arith.mulf %1, %6 : vector<1x16x16x48xf32>
    %8 = math.roundeven %7 : vector<1x16x16x48xf32>
    %9 = vector.shape_cast %4 : vector<1x1xf32> to vector<1x1x1x1xf32>
    %10 = vector.broadcast %9 : vector<1x1x1x1xf32> to vector<1x16x16x48xf32>
    %11 = arith.addf %8, %10 : vector<1x16x16x48xf32>
    %cst = arith.constant 0.000000e+00 : f32
    %cst_7 = arith.constant 2.550000e+02 : f32
    %12 = vector.broadcast %cst : f32 to vector<1x16x16x48xf32>
    %13 = arith.maximumf %12, %11 : vector<1x16x16x48xf32>
    %14 = vector.broadcast %cst_7 : f32 to vector<1x16x16x48xf32>
    %15 = arith.minimumf %14, %13 : vector<1x16x16x48xf32>
    %16 = vector.shape_cast %4 : vector<1x1xf32> to vector<1x1x1x1xf32>
    %17 = vector.broadcast %16 : vector<1x1x1x1xf32> to vector<1x16x16x48xf32>
    %18 = arith.subf %15, %17 : vector<1x16x16x48xf32>
    %19 = vector.shape_cast %3 : vector<1x1xf32> to vector<1x1x1x1xf32>
    %20 = vector.broadcast %19 : vector<1x1x1x1xf32> to vector<1x16x16x48xf32>
    %21 = arith.mulf %18, %20 : vector<1x16x16x48xf32>
    %c0_i32 = arith.constant 0 : i32
    %22 = arith.cmpi eq, %arg0, %c0_i32 : i32
    %23 = arith.extui %22 : i1 to i32
    %c0_i32_8 = arith.constant 0 : i32
    %24 = arith.cmpi ne, %23, %c0_i32_8 : i32
    scf.if %24 {
      %cst_68 = arith.constant 0.000000e+00 : f32
      %115 = vector.broadcast %cst_68 : f32 to vector<1x18x18x48xf32>
      %c0_69 = arith.constant 0 : index
      %c0_70 = arith.constant 0 : index
      %c0_71 = arith.constant 0 : index
      %c0_72 = arith.constant 0 : index
      %116 = vector.load %arg7[%c0_69, %c0_70, %c0_71, %c0_72] : memref<1x18x18x48xf32, #tpu.memory_space<vmem>>, vector<1x18x18x48xf32>
      tpu.vector_store %arg7[%c0_69, %c0_70, %c0_71, %c0_72], %115 {strides = array<i32>} : memref<1x18x18x48xf32, #tpu.memory_space<vmem>>, vector<1x18x18x48xf32>,
    } else {
    }
    %c0_9 = arith.constant 0 : index
    %c1_10 = arith.constant 1 : index
    %c1_11 = arith.constant 1 : index
    %c0_12 = arith.constant 0 : index
    %25 = vector.load %arg7[%c0_9, %c1_10, %c1_11, %c0_12] : memref<1x18x18x48xf32, #tpu.memory_space<vmem>>, vector<1x16x16x48xf32>
    tpu.vector_store %arg7[%c0_9, %c1_10, %c1_11, %c0_12], %21 {strides = array<i32>} : memref<1x18x18x48xf32, #tpu.memory_space<vmem>>, vector<1x16x16x48xf32>,
    %c0_13 = arith.constant 0 : index
    %c0_14 = arith.constant 0 : index
    %c0_15 = arith.constant 0 : index
    %26 = vector.load %arg3[%c0_13, %c0_14, %c0_15] : memref<3x3x48xf32, #tpu.memory_space<vmem>>, vector<3x3x48xf32>
    %c0_16 = arith.constant 0 : index
    %c0_17 = arith.constant 0 : index
    %27 = vector.load %arg4[%c0_16, %c0_17] : memref<1x48xf32, #tpu.memory_space<vmem>>, vector<1x48xf32>
    %cst_18 = arith.constant 0.000000e+00 : f32
    %28 = vector.broadcast %cst_18 : f32 to vector<1x16x16x48xf32>
    %c0_19 = arith.constant 0 : index
    %c0_20 = arith.constant 0 : index
    %c0_21 = arith.constant 0 : index
    %c0_22 = arith.constant 0 : index
    %29 = vector.load %arg7[%c0_19, %c0_20, %c0_21, %c0_22] : memref<1x18x18x48xf32, #tpu.memory_space<vmem>>, vector<1x16x16x48xf32>
    %30 = vector.extract_strided_slice %26 {offsets = [0, 0, 0], sizes = [1, 1, 48], strides = [1, 1, 1]} : vector<3x3x48xf32> to vector<1x1x48xf32>
    %31 = vector.shape_cast %30 : vector<1x1x48xf32> to vector<48xf32>
    %32 = vector.shape_cast %31 : vector<48xf32> to vector<1x1x1x48xf32>
    %33 = vector.broadcast %32 : vector<1x1x1x48xf32> to vector<1x16x16x48xf32>
    %34 = arith.mulf %29, %33 : vector<1x16x16x48xf32>
    %35 = arith.addf %28, %34 : vector<1x16x16x48xf32>
    %c0_23 = arith.constant 0 : index
    %c0_24 = arith.constant 0 : index
    %c1_25 = arith.constant 1 : index
    %c0_26 = arith.constant 0 : index
    %36 = vector.load %arg7[%c0_23, %c0_24, %c1_25, %c0_26] : memref<1x18x18x48xf32, #tpu.memory_space<vmem>>, vector<1x16x16x48xf32>
    %37 = vector.extract_strided_slice %26 {offsets = [0, 1, 0], sizes = [1, 1, 48], strides = [1, 1, 1]} : vector<3x3x48xf32> to vector<1x1x48xf32>
    %38 = vector.shape_cast %37 : vector<1x1x48xf32> to vector<48xf32>
    %39 = vector.shape_cast %38 : vector<48xf32> to vector<1x1x1x48xf32>
    %40 = vector.broadcast %39 : vector<1x1x1x48xf32> to vector<1x16x16x48xf32>
    %41 = arith.mulf %36, %40 : vector<1x16x16x48xf32>
    %42 = arith.addf %35, %41 : vector<1x16x16x48xf32>
    %c0_27 = arith.constant 0 : index
    %c0_28 = arith.constant 0 : index
    %c2_29 = arith.constant 2 : index
    %c0_30 = arith.constant 0 : index
    %43 = vector.load %arg7[%c0_27, %c0_28, %c2_29, %c0_30] : memref<1x18x18x48xf32, #tpu.memory_space<vmem>>, vector<1x16x16x48xf32>
    %44 = vector.extract_strided_slice %26 {offsets = [0, 2, 0], sizes = [1, 1, 48], strides = [1, 1, 1]} : vector<3x3x48xf32> to vector<1x1x48xf32>
    %45 = vector.shape_cast %44 : vector<1x1x48xf32> to vector<48xf32>
    %46 = vector.shape_cast %45 : vector<48xf32> to vector<1x1x1x48xf32>
    %47 = vector.broadcast %46 : vector<1x1x1x48xf32> to vector<1x16x16x48xf32>
    %48 = arith.mulf %43, %47 : vector<1x16x16x48xf32>
    %49 = arith.addf %42, %48 : vector<1x16x16x48xf32>
    %c0_31 = arith.constant 0 : index
    %c1_32 = arith.constant 1 : index
    %c0_33 = arith.constant 0 : index
    %c0_34 = arith.constant 0 : index
    %50 = vector.load %arg7[%c0_31, %c1_32, %c0_33, %c0_34] : memref<1x18x18x48xf32, #tpu.memory_space<vmem>>, vector<1x16x16x48xf32>
    %51 = vector.extract_strided_slice %26 {offsets = [1, 0, 0], sizes = [1, 1, 48], strides = [1, 1, 1]} : vector<3x3x48xf32> to vector<1x1x48xf32>
    %52 = vector.shape_cast %51 : vector<1x1x48xf32> to vector<48xf32>
    %53 = vector.shape_cast %52 : vector<48xf32> to vector<1x1x1x48xf32>
    %54 = vector.broadcast %53 : vector<1x1x1x48xf32> to vector<1x16x16x48xf32>
    %55 = arith.mulf %50, %54 : vector<1x16x16x48xf32>
    %56 = arith.addf %49, %55 : vector<1x16x16x48xf32>
    %c0_35 = arith.constant 0 : index
    %c1_36 = arith.constant 1 : index
    %c1_37 = arith.constant 1 : index
    %c0_38 = arith.constant 0 : index
    %57 = vector.load %arg7[%c0_35, %c1_36, %c1_37, %c0_38] : memref<1x18x18x48xf32, #tpu.memory_space<vmem>>, vector<1x16x16x48xf32>
    %58 = vector.extract_strided_slice %26 {offsets = [1, 1, 0], sizes = [1, 1, 48], strides = [1, 1, 1]} : vector<3x3x48xf32> to vector<1x1x48xf32>
    %59 = vector.shape_cast %58 : vector<1x1x48xf32> to vector<48xf32>
    %60 = vector.shape_cast %59 : vector<48xf32> to vector<1x1x1x48xf32>
    %61 = vector.broadcast %60 : vector<1x1x1x48xf32> to vector<1x16x16x48xf32>
    %62 = arith.mulf %57, %61 : vector<1x16x16x48xf32>
    %63 = arith.addf %56, %62 : vector<1x16x16x48xf32>
    %c0_39 = arith.constant 0 : index
    %c1_40 = arith.constant 1 : index
    %c2_41 = arith.constant 2 : index
    %c0_42 = arith.constant 0 : index
    %64 = vector.load %arg7[%c0_39, %c1_40, %c2_41, %c0_42] : memref<1x18x18x48xf32, #tpu.memory_space<vmem>>, vector<1x16x16x48xf32>
    %65 = vector.extract_strided_slice %26 {offsets = [1, 2, 0], sizes = [1, 1, 48], strides = [1, 1, 1]} : vector<3x3x48xf32> to vector<1x1x48xf32>
    %66 = vector.shape_cast %65 : vector<1x1x48xf32> to vector<48xf32>
    %67 = vector.shape_cast %66 : vector<48xf32> to vector<1x1x1x48xf32>
    %68 = vector.broadcast %67 : vector<1x1x1x48xf32> to vector<1x16x16x48xf32>
    %69 = arith.mulf %64, %68 : vector<1x16x16x48xf32>
    %70 = arith.addf %63, %69 : vector<1x16x16x48xf32>
    %c0_43 = arith.constant 0 : index
    %c2_44 = arith.constant 2 : index
    %c0_45 = arith.constant 0 : index
    %c0_46 = arith.constant 0 : index
    %71 = vector.load %arg7[%c0_43, %c2_44, %c0_45, %c0_46] : memref<1x18x18x48xf32, #tpu.memory_space<vmem>>, vector<1x16x16x48xf32>
    %72 = vector.extract_strided_slice %26 {offsets = [2, 0, 0], sizes = [1, 1, 48], strides = [1, 1, 1]} : vector<3x3x48xf32> to vector<1x1x48xf32>
    %73 = vector.shape_cast %72 : vector<1x1x48xf32> to vector<48xf32>
    %74 = vector.shape_cast %73 : vector<48xf32> to vector<1x1x1x48xf32>
    %75 = vector.broadcast %74 : vector<1x1x1x48xf32> to vector<1x16x16x48xf32>
    %76 = arith.mulf %71, %75 : vector<1x16x16x48xf32>
    %77 = arith.addf %70, %76 : vector<1x16x16x48xf32>
    %c0_47 = arith.constant 0 : index
    %c2_48 = arith.constant 2 : index
    %c1_49 = arith.constant 1 : index
    %c0_50 = arith.constant 0 : index
    %78 = vector.load %arg7[%c0_47, %c2_48, %c1_49, %c0_50] : memref<1x18x18x48xf32, #tpu.memory_space<vmem>>, vector<1x16x16x48xf32>
    %79 = vector.extract_strided_slice %26 {offsets = [2, 1, 0], sizes = [1, 1, 48], strides = [1, 1, 1]} : vector<3x3x48xf32> to vector<1x1x48xf32>
    %80 = vector.shape_cast %79 : vector<1x1x48xf32> to vector<48xf32>
    %81 = vector.shape_cast %80 : vector<48xf32> to vector<1x1x1x48xf32>
    %82 = vector.broadcast %81 : vector<1x1x1x48xf32> to vector<1x16x16x48xf32>
    %83 = arith.mulf %78, %82 : vector<1x16x16x48xf32>
    %84 = arith.addf %77, %83 : vector<1x16x16x48xf32>
    %c0_51 = arith.constant 0 : index
    %c2_52 = arith.constant 2 : index
    %c2_53 = arith.constant 2 : index
    %c0_54 = arith.constant 0 : index
    %85 = vector.load %arg7[%c0_51, %c2_52, %c2_53, %c0_54] : memref<1x18x18x48xf32, #tpu.memory_space<vmem>>, vector<1x16x16x48xf32>
    %86 = vector.extract_strided_slice %26 {offsets = [2, 2, 0], sizes = [1, 1, 48], strides = [1, 1, 1]} : vector<3x3x48xf32> to vector<1x1x48xf32>
    %87 = vector.shape_cast %86 : vector<1x1x48xf32> to vector<48xf32>
    %88 = vector.shape_cast %87 : vector<48xf32> to vector<1x1x1x48xf32>
    %89 = vector.broadcast %88 : vector<1x1x1x48xf32> to vector<1x16x16x48xf32>
    %90 = arith.mulf %85, %89 : vector<1x16x16x48xf32>
    %91 = arith.addf %84, %90 : vector<1x16x16x48xf32>
    %92 = vector.shape_cast %27 : vector<1x48xf32> to vector<1x1x1x48xf32>
    %93 = vector.broadcast %92 : vector<1x1x1x48xf32> to vector<1x16x16x48xf32>
    %94 = arith.addf %91, %93 : vector<1x16x16x48xf32>
    %cst_55 = arith.constant 0.000000e+00 : f32
    %cst_56 = arith.constant 6.000000e+00 : f32
    %95 = vector.broadcast %cst_55 : f32 to vector<1x16x16x48xf32>
    %96 = arith.maximumf %95, %94 : vector<1x16x16x48xf32>
    %97 = vector.broadcast %cst_56 : f32 to vector<1x16x16x48xf32>
    %98 = arith.minimumf %97, %96 : vector<1x16x16x48xf32>
    %99 = arith.truncf %98 : vector<1x16x16x48xf32> to vector<1x16x16x48xbf16>
    %c0_57 = arith.constant 0 : index
    %c0_58 = arith.constant 0 : index
    %c0_59 = arith.constant 0 : index
    %c0_60 = arith.constant 0 : index
    %100 = vector.load %arg5[%c0_57, %c0_58, %c0_59, %c0_60] : memref<1x16x16x48xbf16, #tpu.memory_space<vmem>>, vector<1x16x16x48xbf16>
    tpu.vector_store %arg5[%c0_57, %c0_58, %c0_59, %c0_60], %99 {strides = array<i32>} : memref<1x16x16x48xbf16, #tpu.memory_space<vmem>>, vector<1x16x16x48xbf16>,
    %101 = vector.shape_cast %98 : vector<1x16x16x48xf32> to vector<256x48xf32>
    %cst_61 = arith.constant dense<0x7F800000> : vector<48xf32>
    %102 = vector.multi_reduction <minimumf>, %101, %cst_61 [0] : vector<256x48xf32> to vector<48xf32>
    %103 = vector.shape_cast %102 : vector<48xf32> to vector<1x48xf32>
    %cst_62 = arith.constant dense<0xFF800000> : vector<48xf32>
    %104 = vector.multi_reduction <maximumf>, %101, %cst_62 [0] : vector<256x48xf32> to vector<48xf32>
    %105 = vector.shape_cast %104 : vector<48xf32> to vector<1x48xf32>
    %c0_i32_63 = arith.constant 0 : i32
    %106 = arith.cmpi eq, %arg0, %c0_i32_63 : i32
    %107 = arith.extui %106 : i1 to i32
    %c0_i32_64 = arith.constant 0 : i32
    %108 = arith.cmpi ne, %107, %c0_i32_64 : i32
    scf.if %108 {
      %c0_68 = arith.constant 0 : index
      %c0_69 = arith.constant 0 : index
      %115 = vector.load %arg8[%c0_68, %c0_69] : memref<2x48xf32, #tpu.memory_space<vmem>>, vector<1x48xf32>
      tpu.vector_store %arg8[%c0_68, %c0_69], %103 {strides = array<i32>} : memref<2x48xf32, #tpu.memory_space<vmem>>, vector<1x48xf32>,
      %c1_70 = arith.constant 1 : index
      %c0_71 = arith.constant 0 : index
      %116 = vector.load %arg8[%c1_70, %c0_71] : memref<2x48xf32, #tpu.memory_space<vmem>>, vector<1x48xf32>
      tpu.vector_store %arg8[%c1_70, %c0_71], %105 {strides = array<i32>} : memref<2x48xf32, #tpu.memory_space<vmem>>, vector<1x48xf32>,
    } else {
    }
    %c0_i32_65 = arith.constant 0 : i32
    %109 = arith.cmpi ne, %arg0, %c0_i32_65 : i32
    %110 = arith.extui %109 : i1 to i32
    %c0_i32_66 = arith.constant 0 : i32
    %111 = arith.cmpi ne, %110, %c0_i32_66 : i32
    scf.if %111 {
      %c0_68 = arith.constant 0 : index
      %c0_69 = arith.constant 0 : index
      %115 = vector.load %arg8[%c0_68, %c0_69] : memref<2x48xf32, #tpu.memory_space<vmem>>, vector<1x48xf32>
      %116 = arith.minimumf %115, %103 : vector<1x48xf32>
      %c0_70 = arith.constant 0 : index
      %c0_71 = arith.constant 0 : index
      %117 = vector.load %arg8[%c0_70, %c0_71] : memref<2x48xf32, #tpu.memory_space<vmem>>, vector<1x48xf32>
      tpu.vector_store %arg8[%c0_70, %c0_71], %116 {strides = array<i32>} : memref<2x48xf32, #tpu.memory_space<vmem>>, vector<1x48xf32>,
      %c1_72 = arith.constant 1 : index
      %c0_73 = arith.constant 0 : index
      %118 = vector.load %arg8[%c1_72, %c0_73] : memref<2x48xf32, #tpu.memory_space<vmem>>, vector<1x48xf32>
      %119 = arith.maximumf %118, %105 : vector<1x48xf32>
      %c1_74 = arith.constant 1 : index
      %c0_75 = arith.constant 0 : index
      %120 = vector.load %arg8[%c1_74, %c0_75] : memref<2x48xf32, #tpu.memory_space<vmem>>, vector<1x48xf32>
      tpu.vector_store %arg8[%c1_74, %c0_75], %119 {strides = array<i32>} : memref<2x48xf32, #tpu.memory_space<vmem>>, vector<1x48xf32>,
    } else {
    }
    %c1_i32 = arith.constant 1 : i32
    %112 = arith.cmpi eq, %arg0, %c1_i32 : i32
    %113 = arith.extui %112 : i1 to i32
    %c0_i32_67 = arith.constant 0 : i32
    %114 = arith.cmpi ne, %113, %c0_i32_67 : i32
    scf.if %114 {
      %c0_68 = arith.constant 0 : index
      %c0_69 = arith.constant 0 : index
      %115 = vector.load %arg8[%c0_68, %c0_69] : memref<2x48xf32, #tpu.memory_space<vmem>>, vector<1x48xf32>
      %cst_70 = arith.constant dense<0x7F800000> : vector<1xf32>
      %116 = vector.multi_reduction <minimumf>, %115, %cst_70 [1] : vector<1x48xf32> to vector<1xf32>
      %117 = vector.shape_cast %116 : vector<1xf32> to vector<1x1xf32>
      %cst_71 = arith.constant 0.000000e+00 : f32
      %118 = vector.broadcast %cst_71 : f32 to vector<1x1xf32>
      %119 = arith.minimumf %117, %118 : vector<1x1xf32>
      %c1_72 = arith.constant 1 : index
      %c0_73 = arith.constant 0 : index
      %120 = vector.load %arg8[%c1_72, %c0_73] : memref<2x48xf32, #tpu.memory_space<vmem>>, vector<1x48xf32>
      %cst_74 = arith.constant dense<0xFF800000> : vector<1xf32>
      %121 = vector.multi_reduction <maximumf>, %120, %cst_74 [1] : vector<1x48xf32> to vector<1xf32>
      %122 = vector.shape_cast %121 : vector<1xf32> to vector<1x1xf32>
      %cst_75 = arith.constant 0.000000e+00 : f32
      %123 = vector.broadcast %cst_75 : f32 to vector<1x1xf32>
      %124 = arith.maximumf %122, %123 : vector<1x1xf32>
      %125 = arith.subf %124, %119 : vector<1x1xf32>
      %cst_76 = arith.constant 0.00392156886 : f32
      %126 = vector.broadcast %cst_76 : f32 to vector<1x1xf32>
      %127 = arith.mulf %125, %126 : vector<1x1xf32>
      %cst_77 = arith.constant 9.99999993E-9 : f32
      %128 = vector.broadcast %cst_77 : f32 to vector<1x1xf32>
      %129 = arith.maximumf %127, %128 : vector<1x1xf32>
      %cst_78 = arith.constant 0.000000e+00 : f32
      %130 = vector.broadcast %cst_78 : f32 to vector<1x1xf32>
      %131 = arith.subf %130, %119 : vector<1x1xf32>
      %132 = arith.divf %131, %129 : vector<1x1xf32>
      %133 = math.roundeven %132 : vector<1x1xf32>
      %cst_79 = arith.constant 1.000000e+00 : f32
      %134 = vector.broadcast %cst_79 : f32 to vector<1x1xf32>
      %135 = arith.divf %134, %129 : vector<1x1xf32>
      %136 = vector.shape_cast %135 : vector<1x1xf32> to vector<1x1xf32>
      %137 = vector.broadcast %136 : vector<1x1xf32> to vector<1x128xf32>
      %c0_80 = arith.constant 0 : index
      %c0_81 = arith.constant 0 : index
      %138 = vector.load %arg6[%c0_80, %c0_81] : memref<3x128xf32, #tpu.memory_space<vmem>>, vector<1x128xf32>
      tpu.vector_store %arg6[%c0_80, %c0_81], %137 {strides = array<i32>} : memref<3x128xf32, #tpu.memory_space<vmem>>, vector<1x128xf32>,
      %139 = vector.shape_cast %129 : vector<1x1xf32> to vector<1x1xf32>
      %140 = vector.broadcast %139 : vector<1x1xf32> to vector<1x128xf32>
      %c1_82 = arith.constant 1 : index
      %c0_83 = arith.constant 0 : index
      %141 = vector.load %arg6[%c1_82, %c0_83] : memref<3x128xf32, #tpu.memory_space<vmem>>, vector<1x128xf32>
      tpu.vector_store %arg6[%c1_82, %c0_83], %140 {strides = array<i32>} : memref<3x128xf32, #tpu.memory_space<vmem>>, vector<1x128xf32>,
      %142 = vector.shape_cast %133 : vector<1x1xf32> to vector<1x1xf32>
      %143 = vector.broadcast %142 : vector<1x1xf32> to vector<1x128xf32>
      %c2_84 = arith.constant 2 : index
      %c0_85 = arith.constant 0 : index
      %144 = vector.load %arg6[%c2_84, %c0_85] : memref<3x128xf32, #tpu.memory_space<vmem>>, vector<1x128xf32>
      tpu.vector_store %arg6[%c2_84, %c0_85], %143 {strides = array<i32>} : memref<3x128xf32, #tpu.memory_space<vmem>>, vector<1x128xf32>,
    } else {
    }
    return
  }
  func.func @transform_0(%arg0: i32) -> (i32, i32) {
    %c0_i32 = arith.constant 0 : i32
    %c0_i32_0 = arith.constant 0 : i32
    %c0_i32_1 = arith.constant 0 : i32
    return %c0_i32, %c0_i32_0 : i32, i32
  }
  func.func @transform_1(%arg0: i32) -> (i32, i32, i32, i32) {
    %c0_i32 = arith.constant 0 : i32
    %c0_i32_0 = arith.constant 0 : i32
    %c0_i32_1 = arith.constant 0 : i32
    %c0_i32_2 = arith.constant 0 : i32
    return %arg0, %c0_i32, %c0_i32_0, %c0_i32_1 : i32, i32, i32, i32
  }
  func.func @transform_2(%arg0: i32) -> (i32, i32, i32) {
    %c0_i32 = arith.constant 0 : i32
    %c0_i32_0 = arith.constant 0 : i32
    %c0_i32_1 = arith.constant 0 : i32
    %c0_i32_2 = arith.constant 0 : i32
    return %c0_i32, %c0_i32_0, %c0_i32_1 : i32, i32, i32
  }
  func.func @transform_3(%arg0: i32) -> (i32, i32) {
    %c0_i32 = arith.constant 0 : i32
    %c0_i32_0 = arith.constant 0 : i32
    %c0_i32_1 = arith.constant 0 : i32
    return %c0_i32, %c0_i32_0 : i32, i32
  }
  func.func @transform_4(%arg0: i32) -> (i32, i32, i32, i32) {
    %c0_i32 = arith.constant 0 : i32
    %c0_i32_0 = arith.constant 0 : i32
    %c0_i32_1 = arith.constant 0 : i32
    %c0_i32_2 = arith.constant 0 : i32
    return %arg0, %c0_i32, %c0_i32_0, %c0_i32_1 : i32, i32, i32, i32
  }
  func.func @transform_5(%arg0: i32) -> (i32, i32) {
    %c0_i32 = arith.constant 0 : i32
    %c0_i32_0 = arith.constant 0 : i32
    %c0_i32_1 = arith.constant 0 : i32
    return %c0_i32, %c0_i32_0 : i32, i32
  }
}

module attributes {stable_mosaic.version = 11 : i64} {
  func.func @_residual_kernel(%arg0: i32, %arg1: memref<3x128xf32, #tpu.memory_space<vmem>>, %arg2: memref<16x128xbf16, #tpu.memory_space<vmem>>, %arg3: memref<16x128xbf16, #tpu.memory_space<vmem>>, %arg4: memref<16x128xf32, #tpu.memory_space<vmem>>, %arg5: memref<3x128xf32, #tpu.memory_space<vmem>>, %arg6: memref<2x128xf32, #tpu.memory_space<vmem>>) attributes {dimension_semantics = [#tpu.dimension_semantics<arbitrary>], iteration_bounds = array<i64: 2>, scalar_prefetch = 0 : i64, scratch_operands = 1 : i64, tpu.core_type = #tpu.core_type<tc>, window_params = [{pipeline_mode = #tpu.pipeline_mode<synchronous>, transform_indices = @transform_0, window_bounds = array<i64: 3, 128>}, {transform_indices = @transform_1, window_bounds = array<i64: 16, 128>}, {transform_indices = @transform_2, window_bounds = array<i64: 16, 128>}, {transform_indices = @transform_3, window_bounds = array<i64: 16, 128>}, {pipeline_mode = #tpu.pipeline_mode<synchronous>, transform_indices = @transform_4, window_bounds = array<i64: 3, 128>}]} {
    %c0 = arith.constant 0 : index
    %c0_0 = arith.constant 0 : index
    %0 = vector.load %arg1[%c0, %c0_0] : memref<3x128xf32, #tpu.memory_space<vmem>>, vector<1x1xf32>
    %c1 = arith.constant 1 : index
    %c0_1 = arith.constant 0 : index
    %1 = vector.load %arg1[%c1, %c0_1] : memref<3x128xf32, #tpu.memory_space<vmem>>, vector<1x1xf32>
    %c2 = arith.constant 2 : index
    %c0_2 = arith.constant 0 : index
    %2 = vector.load %arg1[%c2, %c0_2] : memref<3x128xf32, #tpu.memory_space<vmem>>, vector<1x1xf32>
    %c0_3 = arith.constant 0 : index
    %c0_4 = arith.constant 0 : index
    %3 = vector.load %arg3[%c0_3, %c0_4] : memref<16x128xbf16, #tpu.memory_space<vmem>>, vector<16x128xbf16>
    %4 = arith.extf %3 : vector<16x128xbf16> to vector<16x128xf32>
    %5 = vector.broadcast %0 : vector<1x1xf32> to vector<16x128xf32>
    %6 = arith.mulf %4, %5 : vector<16x128xf32>
    %7 = math.roundeven %6 : vector<16x128xf32>
    %8 = vector.broadcast %2 : vector<1x1xf32> to vector<16x128xf32>
    %9 = arith.addf %7, %8 : vector<16x128xf32>
    %cst = arith.constant 0.000000e+00 : f32
    %cst_5 = arith.constant 2.550000e+02 : f32
    %10 = vector.broadcast %cst : f32 to vector<16x128xf32>
    %11 = arith.maximumf %10, %9 : vector<16x128xf32>
    %12 = vector.broadcast %cst_5 : f32 to vector<16x128xf32>
    %13 = arith.minimumf %12, %11 : vector<16x128xf32>
    %14 = vector.broadcast %2 : vector<1x1xf32> to vector<16x128xf32>
    %15 = arith.subf %13, %14 : vector<16x128xf32>
    %16 = vector.broadcast %1 : vector<1x1xf32> to vector<16x128xf32>
    %17 = arith.mulf %15, %16 : vector<16x128xf32>
    %c0_6 = arith.constant 0 : index
    %c0_7 = arith.constant 0 : index
    %18 = vector.load %arg2[%c0_6, %c0_7] : memref<16x128xbf16, #tpu.memory_space<vmem>>, vector<16x128xbf16>
    %19 = arith.extf %18 : vector<16x128xbf16> to vector<16x128xf32>
    %20 = arith.addf %19, %17 : vector<16x128xf32>
    %c0_8 = arith.constant 0 : index
    %c0_9 = arith.constant 0 : index
    %21 = vector.load %arg4[%c0_8, %c0_9] : memref<16x128xf32, #tpu.memory_space<vmem>>, vector<16x128xf32>
    tpu.vector_store %arg4[%c0_8, %c0_9], %20 {strides = array<i32>} : memref<16x128xf32, #tpu.memory_space<vmem>>, vector<16x128xf32>,
    %cst_10 = arith.constant dense<0x7F800000> : vector<128xf32>
    %22 = vector.multi_reduction <minimumf>, %20, %cst_10 [0] : vector<16x128xf32> to vector<128xf32>
    %23 = vector.shape_cast %22 : vector<128xf32> to vector<1x128xf32>
    %cst_11 = arith.constant dense<0xFF800000> : vector<128xf32>
    %24 = vector.multi_reduction <maximumf>, %20, %cst_11 [0] : vector<16x128xf32> to vector<128xf32>
    %25 = vector.shape_cast %24 : vector<128xf32> to vector<1x128xf32>
    %c0_i32 = arith.constant 0 : i32
    %26 = arith.cmpi eq, %arg0, %c0_i32 : i32
    %27 = arith.extui %26 : i1 to i32
    %c0_i32_12 = arith.constant 0 : i32
    %28 = arith.cmpi ne, %27, %c0_i32_12 : i32
    scf.if %28 {
      %c0_16 = arith.constant 0 : index
      %c0_17 = arith.constant 0 : index
      %35 = vector.load %arg6[%c0_16, %c0_17] : memref<2x128xf32, #tpu.memory_space<vmem>>, vector<1x128xf32>
      tpu.vector_store %arg6[%c0_16, %c0_17], %23 {strides = array<i32>} : memref<2x128xf32, #tpu.memory_space<vmem>>, vector<1x128xf32>,
      %c1_18 = arith.constant 1 : index
      %c0_19 = arith.constant 0 : index
      %36 = vector.load %arg6[%c1_18, %c0_19] : memref<2x128xf32, #tpu.memory_space<vmem>>, vector<1x128xf32>
      tpu.vector_store %arg6[%c1_18, %c0_19], %25 {strides = array<i32>} : memref<2x128xf32, #tpu.memory_space<vmem>>, vector<1x128xf32>,
    } else {
    }
    %c0_i32_13 = arith.constant 0 : i32
    %29 = arith.cmpi ne, %arg0, %c0_i32_13 : i32
    %30 = arith.extui %29 : i1 to i32
    %c0_i32_14 = arith.constant 0 : i32
    %31 = arith.cmpi ne, %30, %c0_i32_14 : i32
    scf.if %31 {
      %c0_16 = arith.constant 0 : index
      %c0_17 = arith.constant 0 : index
      %35 = vector.load %arg6[%c0_16, %c0_17] : memref<2x128xf32, #tpu.memory_space<vmem>>, vector<1x128xf32>
      %36 = arith.minimumf %35, %23 : vector<1x128xf32>
      %c0_18 = arith.constant 0 : index
      %c0_19 = arith.constant 0 : index
      %37 = vector.load %arg6[%c0_18, %c0_19] : memref<2x128xf32, #tpu.memory_space<vmem>>, vector<1x128xf32>
      tpu.vector_store %arg6[%c0_18, %c0_19], %36 {strides = array<i32>} : memref<2x128xf32, #tpu.memory_space<vmem>>, vector<1x128xf32>,
      %c1_20 = arith.constant 1 : index
      %c0_21 = arith.constant 0 : index
      %38 = vector.load %arg6[%c1_20, %c0_21] : memref<2x128xf32, #tpu.memory_space<vmem>>, vector<1x128xf32>
      %39 = arith.maximumf %38, %25 : vector<1x128xf32>
      %c1_22 = arith.constant 1 : index
      %c0_23 = arith.constant 0 : index
      %40 = vector.load %arg6[%c1_22, %c0_23] : memref<2x128xf32, #tpu.memory_space<vmem>>, vector<1x128xf32>
      tpu.vector_store %arg6[%c1_22, %c0_23], %39 {strides = array<i32>} : memref<2x128xf32, #tpu.memory_space<vmem>>, vector<1x128xf32>,
    } else {
    }
    %c1_i32 = arith.constant 1 : i32
    %32 = arith.cmpi eq, %arg0, %c1_i32 : i32
    %33 = arith.extui %32 : i1 to i32
    %c0_i32_15 = arith.constant 0 : i32
    %34 = arith.cmpi ne, %33, %c0_i32_15 : i32
    scf.if %34 {
      %c0_16 = arith.constant 0 : index
      %c0_17 = arith.constant 0 : index
      %35 = vector.load %arg6[%c0_16, %c0_17] : memref<2x128xf32, #tpu.memory_space<vmem>>, vector<1x128xf32>
      %cst_18 = arith.constant dense<0x7F800000> : vector<1xf32>
      %36 = vector.multi_reduction <minimumf>, %35, %cst_18 [1] : vector<1x128xf32> to vector<1xf32>
      %37 = vector.shape_cast %36 : vector<1xf32> to vector<1x1xf32>
      %cst_19 = arith.constant 0.000000e+00 : f32
      %38 = vector.broadcast %cst_19 : f32 to vector<1x1xf32>
      %39 = arith.minimumf %37, %38 : vector<1x1xf32>
      %c1_20 = arith.constant 1 : index
      %c0_21 = arith.constant 0 : index
      %40 = vector.load %arg6[%c1_20, %c0_21] : memref<2x128xf32, #tpu.memory_space<vmem>>, vector<1x128xf32>
      %cst_22 = arith.constant dense<0xFF800000> : vector<1xf32>
      %41 = vector.multi_reduction <maximumf>, %40, %cst_22 [1] : vector<1x128xf32> to vector<1xf32>
      %42 = vector.shape_cast %41 : vector<1xf32> to vector<1x1xf32>
      %cst_23 = arith.constant 0.000000e+00 : f32
      %43 = vector.broadcast %cst_23 : f32 to vector<1x1xf32>
      %44 = arith.maximumf %42, %43 : vector<1x1xf32>
      %45 = arith.subf %44, %39 : vector<1x1xf32>
      %cst_24 = arith.constant 0.00392156886 : f32
      %46 = vector.broadcast %cst_24 : f32 to vector<1x1xf32>
      %47 = arith.mulf %45, %46 : vector<1x1xf32>
      %cst_25 = arith.constant 9.99999993E-9 : f32
      %48 = vector.broadcast %cst_25 : f32 to vector<1x1xf32>
      %49 = arith.maximumf %47, %48 : vector<1x1xf32>
      %cst_26 = arith.constant 0.000000e+00 : f32
      %50 = vector.broadcast %cst_26 : f32 to vector<1x1xf32>
      %51 = arith.subf %50, %39 : vector<1x1xf32>
      %52 = arith.divf %51, %49 : vector<1x1xf32>
      %53 = math.roundeven %52 : vector<1x1xf32>
      %cst_27 = arith.constant 1.000000e+00 : f32
      %54 = vector.broadcast %cst_27 : f32 to vector<1x1xf32>
      %55 = arith.divf %54, %49 : vector<1x1xf32>
      %56 = vector.shape_cast %55 : vector<1x1xf32> to vector<1x1xf32>
      %57 = vector.broadcast %56 : vector<1x1xf32> to vector<1x128xf32>
      %c0_28 = arith.constant 0 : index
      %c0_29 = arith.constant 0 : index
      %58 = vector.load %arg5[%c0_28, %c0_29] : memref<3x128xf32, #tpu.memory_space<vmem>>, vector<1x128xf32>
      tpu.vector_store %arg5[%c0_28, %c0_29], %57 {strides = array<i32>} : memref<3x128xf32, #tpu.memory_space<vmem>>, vector<1x128xf32>,
      %59 = vector.shape_cast %49 : vector<1x1xf32> to vector<1x1xf32>
      %60 = vector.broadcast %59 : vector<1x1xf32> to vector<1x128xf32>
      %c1_30 = arith.constant 1 : index
      %c0_31 = arith.constant 0 : index
      %61 = vector.load %arg5[%c1_30, %c0_31] : memref<3x128xf32, #tpu.memory_space<vmem>>, vector<1x128xf32>
      tpu.vector_store %arg5[%c1_30, %c0_31], %60 {strides = array<i32>} : memref<3x128xf32, #tpu.memory_space<vmem>>, vector<1x128xf32>,
      %62 = vector.shape_cast %53 : vector<1x1xf32> to vector<1x1xf32>
      %63 = vector.broadcast %62 : vector<1x1xf32> to vector<1x128xf32>
      %c2_32 = arith.constant 2 : index
      %c0_33 = arith.constant 0 : index
      %64 = vector.load %arg5[%c2_32, %c0_33] : memref<3x128xf32, #tpu.memory_space<vmem>>, vector<1x128xf32>
      tpu.vector_store %arg5[%c2_32, %c0_33], %63 {strides = array<i32>} : memref<3x128xf32, #tpu.memory_space<vmem>>, vector<1x128xf32>,
    } else {
    }
    return
  }
  func.func @transform_0(%arg0: i32) -> (i32, i32) {
    %c0_i32 = arith.constant 0 : i32
    %c0_i32_0 = arith.constant 0 : i32
    %c0_i32_1 = arith.constant 0 : i32
    return %c0_i32, %c0_i32_0 : i32, i32
  }
  func.func @transform_1(%arg0: i32) -> (i32, i32) {
    %c0_i32 = arith.constant 0 : i32
    %c0_i32_0 = arith.constant 0 : i32
    return %arg0, %c0_i32 : i32, i32
  }
  func.func @transform_2(%arg0: i32) -> (i32, i32) {
    %c0_i32 = arith.constant 0 : i32
    %c0_i32_0 = arith.constant 0 : i32
    return %arg0, %c0_i32 : i32, i32
  }
  func.func @transform_3(%arg0: i32) -> (i32, i32) {
    %c0_i32 = arith.constant 0 : i32
    %c0_i32_0 = arith.constant 0 : i32
    return %arg0, %c0_i32 : i32, i32
  }
  func.func @transform_4(%arg0: i32) -> (i32, i32) {
    %c0_i32 = arith.constant 0 : i32
    %c0_i32_0 = arith.constant 0 : i32
    %c0_i32_1 = arith.constant 0 : i32
    return %c0_i32, %c0_i32_0 : i32, i32
  }
}

module attributes {stable_mosaic.version = 11 : i64} {
  func.func @_fakequant_kernel(%arg0: i32, %arg1: memref<3x128xf32, #tpu.memory_space<vmem>>, %arg2: memref<16x128xf32, #tpu.memory_space<vmem>>, %arg3: memref<16x128xf32, #tpu.memory_space<vmem>>) attributes {dimension_semantics = [#tpu.dimension_semantics<parallel>], iteration_bounds = array<i64: 2>, scalar_prefetch = 0 : i64, scratch_operands = 0 : i64, tpu.core_type = #tpu.core_type<tc>, window_params = [{pipeline_mode = #tpu.pipeline_mode<synchronous>, transform_indices = @transform_0, window_bounds = array<i64: 3, 128>}, {transform_indices = @transform_1, window_bounds = array<i64: 16, 128>}, {transform_indices = @transform_2, window_bounds = array<i64: 16, 128>}]} {
    %c0 = arith.constant 0 : index
    %c0_0 = arith.constant 0 : index
    %0 = vector.load %arg1[%c0, %c0_0] : memref<3x128xf32, #tpu.memory_space<vmem>>, vector<1x1xf32>
    %c1 = arith.constant 1 : index
    %c0_1 = arith.constant 0 : index
    %1 = vector.load %arg1[%c1, %c0_1] : memref<3x128xf32, #tpu.memory_space<vmem>>, vector<1x1xf32>
    %c2 = arith.constant 2 : index
    %c0_2 = arith.constant 0 : index
    %2 = vector.load %arg1[%c2, %c0_2] : memref<3x128xf32, #tpu.memory_space<vmem>>, vector<1x1xf32>
    %c0_3 = arith.constant 0 : index
    %c0_4 = arith.constant 0 : index
    %3 = vector.load %arg2[%c0_3, %c0_4] : memref<16x128xf32, #tpu.memory_space<vmem>>, vector<16x128xf32>
    %4 = vector.broadcast %0 : vector<1x1xf32> to vector<16x128xf32>
    %5 = arith.mulf %3, %4 : vector<16x128xf32>
    %6 = math.roundeven %5 : vector<16x128xf32>
    %7 = vector.broadcast %2 : vector<1x1xf32> to vector<16x128xf32>
    %8 = arith.addf %6, %7 : vector<16x128xf32>
    %cst = arith.constant 0.000000e+00 : f32
    %cst_5 = arith.constant 2.550000e+02 : f32
    %9 = vector.broadcast %cst : f32 to vector<16x128xf32>
    %10 = arith.maximumf %9, %8 : vector<16x128xf32>
    %11 = vector.broadcast %cst_5 : f32 to vector<16x128xf32>
    %12 = arith.minimumf %11, %10 : vector<16x128xf32>
    %13 = vector.broadcast %2 : vector<1x1xf32> to vector<16x128xf32>
    %14 = arith.subf %12, %13 : vector<16x128xf32>
    %15 = vector.broadcast %1 : vector<1x1xf32> to vector<16x128xf32>
    %16 = arith.mulf %14, %15 : vector<16x128xf32>
    %c0_6 = arith.constant 0 : index
    %c0_7 = arith.constant 0 : index
    %17 = vector.load %arg3[%c0_6, %c0_7] : memref<16x128xf32, #tpu.memory_space<vmem>>, vector<16x128xf32>
    tpu.vector_store %arg3[%c0_6, %c0_7], %16 {strides = array<i32>} : memref<16x128xf32, #tpu.memory_space<vmem>>, vector<16x128xf32>,
    return
  }
  func.func @transform_0(%arg0: i32) -> (i32, i32) {
    %c0_i32 = arith.constant 0 : i32
    %c0_i32_0 = arith.constant 0 : i32
    %c0_i32_1 = arith.constant 0 : i32
    return %c0_i32, %c0_i32_0 : i32, i32
  }
  func.func @transform_1(%arg0: i32) -> (i32, i32) {
    %c0_i32 = arith.constant 0 : i32
    %c0_i32_0 = arith.constant 0 : i32
    return %arg0, %c0_i32 : i32, i32
  }
  func.func @transform_2(%arg0: i32) -> (i32, i32) {
    %c0_i32 = arith.constant 0 : i32
    %c0_i32_0 = arith.constant 0 : i32
    return %arg0, %c0_i32 : i32, i32
  }
}

</mosaic_0001>

<llo_original>
// kernel: inverted_residual_forward.7
$region0: #{inverted_residual_forward.7}
  #allocation0 [shape = 'u32[]', space=smem, size = 0x4, offset = 0x4, fixed_abs, tag = 'smem constant byte address 0x4 - core index']
  #allocation1 [shape = 'u32[144,128]{1,0:T(1,128)}', space=vmem, size = 0x12000, scoped, tag = 'internal scratch']
  #allocation2 [shape = 'f32[2,8]{1,0:T(2,128)}', space=vmem, size = 0x400, scoped, tag = 'scratch operand']
  %s0 = inlined_call_operand.vmem [shape: f32[3,128], index: 0, kind: input, shape index: {}]
  %s1 = inlined_call_operand.vmem [shape: bf16[512,48], index: 1, kind: input, shape index: {}]
  %s2 = inlined_call_operand.vmem [shape: bf16[48,8], index: 2, kind: input, shape index: {}]
  %s3 = inlined_call_operand.vmem [shape: f32[1,8], index: 3, kind: input, shape index: {}]
  %s4 = inlined_call_operand.vmem [shape: bf16[512,8], index: 4, kind: output, shape index: {0}]
  %s5 = inlined_call_operand.vmem [shape: f32[3,128], index: 5, kind: output, shape index: {1}]
  %6 = xla_tuple %s4, %s5
  %s7 = sld [smem:[#allocation0]]
  $region69: #{inverted_residual_forward.7} parent=0
    _
  %s9 = ssub.s32 1, %s7
  %s10 = scalar_select 0, %s9, %s7
  loop: start=0, step=1, limit=4
  $region2: #{inverted_residual_forward.7} parent=0 // loop_pre_header
    _
  $region3: #{inverted_residual_forward.7} parent=0 // loop_header
    %s12 = sphi 0, %s16
    %p13 = scmp.ge.s32.totalorder %s12, 4
    %s20 = sphi 0, %s20
    %s22 = sphi 0, %s20
    %s23 = sphi 0, %s22
    %s37 = sphi 0, %s23
    %s43 = sphi 0, %s45
    %s46 = sphi 0, %s43
    %s47 = sphi 0, %s46
    %s63 = sphi 0, %s47
    %s67 = sphi 0, %s67
    %s69 = sphi 0, %s67
    %s70 = sphi 0, %s69
    %s84 = sphi 0, %s70
    %s88 = sphi 0, %s88
    %s90 = sphi 0, %s88
    %s91 = sphi 0, %s90
    %s105 = sphi 0, %s91
    %s111 = sphi 0, %s113
    %s114 = sphi 0, %s111
    %s115 = sphi 0, %s114
    %s131 = sphi 0, %s115
    %s135 = sphi 0, %s135
    %s137 = sphi 0, %s135
    %s138 = sphi 0, %s137
    %s152 = sphi 0, %s138
  $region4: #{inverted_residual_forward.7} parent=0 // loop_header_branch
    %15 = sbr.rel (%p13) target = $region8
  $region5: #{inverted_residual_forward.7} parent=0 // loop_body
    %s17 = ssub.s32 %s12, 1
    %s18 = ssub.s32 %s12, 2
    %s19 = sadd.s32 %s12, 1
    %s21 = sadd.s32 %s20, 1
    %p24 = scmp.eq.s32.totalorder %s12, 1
    %p25 = scmp.ne.s32.totalorder %s20, %s22
    %p26 = scmp.eq.s32.totalorder %s12, 0
    %p27 = por %p25, %p26
    %p28 = scmp.ne.s32.totalorder %s20, %s22
    %p29 = scmp.eq.s32.totalorder %s17, 1
    %p30 = por %p28, %p29
    %p31 = scmp.ne.s32.totalorder %s22, %s23
    %p32 = scmp.eq.s32.totalorder %s17, 0
    %p33 = por %p31, %p32
    %p34 = scmp.ne.s32.totalorder %s22, %s23
    %p35 = scmp.eq.s32.totalorder %s18, 1
    %p36 = por %p34, %p35
    %p38 = scmp.ne.s32.totalorder %s23, %s37
    %p39 = scmp.eq.s32.totalorder %s18, 0
    %p40 = por %p38, %p39
    %s41 = ssub.s32 %s12, %s19
    %p42 = scmp.eq.s32.totalorder %s41, 0
    %s44 = sadd.s32 %s43, 1
    %s45 = scalar_select %p42, %s43, %s44
    %p48 = pneg %p42
    %p49 = scmp.eq.s32.totalorder %s12, 1
    %p50 = por %p48, %p49
    %p51 = scmp.ne.s32.totalorder %s43, %s46
    %p52 = scmp.eq.s32.totalorder %s12, 0
    %p53 = por %p51, %p52
    %p54 = scmp.ne.s32.totalorder %s43, %s46
    %p55 = scmp.eq.s32.totalorder %s17, 1
    %p56 = por %p54, %p55
    %p57 = scmp.ne.s32.totalorder %s46, %s47
    %p58 = scmp.eq.s32.totalorder %s17, 0
    %p59 = por %p57, %p58
    %p60 = scmp.ne.s32.totalorder %s46, %s47
    %p61 = scmp.eq.s32.totalorder %s18, 1
    %p62 = por %p60, %p61
    %p64 = scmp.ne.s32.totalorder %s47, %s63
    %p65 = scmp.eq.s32.totalorder %s18, 0
    %p66 = por %p64, %p65
    %s68 = sadd.s32 %s67, 1
    %p71 = scmp.eq.s32.totalorder %s12, 1
    %p72 = scmp.ne.s32.totalorder %s67, %s69
    %p73 = scmp.eq.s32.totalorder %s12, 0
    %p74 = por %p72, %p73
    %p75 = scmp.ne.s32.totalorder %s67, %s69
    %p76 = scmp.eq.s32.totalorder %s17, 1
    %p77 = por %p75, %p76
    %p78 = scmp.ne.s32.totalorder %s69, %s70
    %p79 = scmp.eq.s32.totalorder %s17, 0
    %p80 = por %p78, %p79
    %p81 = scmp.ne.s32.totalorder %s69, %s70
    %p82 = scmp.eq.s32.totalorder %s18, 1
    %p83 = por %p81, %p82
    %p85 = scmp.ne.s32.totalorder %s70, %s84
    %p86 = scmp.eq.s32.totalorder %s18, 0
    %p87 = por %p85, %p86
    %s89 = sadd.s32 %s88, 1
    %p92 = scmp.eq.s32.totalorder %s12, 1
    %p93 = scmp.ne.s32.totalorder %s88, %s90
    %p94 = scmp.eq.s32.totalorder %s12, 0
    %p95 = por %p93, %p94
    %p96 = scmp.ne.s32.totalorder %s88, %s90
    %p97 = scmp.eq.s32.totalorder %s17, 1
    %p98 = por %p96, %p97
    %p99 = scmp.ne.s32.totalorder %s90, %s91
    %p100 = scmp.eq.s32.totalorder %s17, 0
    %p101 = por %p99, %p100
    %p102 = scmp.ne.s32.totalorder %s90, %s91
    %p103 = scmp.eq.s32.totalorder %s18, 1
    %p104 = por %p102, %p103
    %p106 = scmp.ne.s32.totalorder %s91, %s105
    %p107 = scmp.eq.s32.totalorder %s18, 0
    %p108 = por %p106, %p107
    %s109 = ssub.s32 %s12, %s19
    %p110 = scmp.eq.s32.totalorder %s109, 0
    %s112 = sadd.s32 %s111, 1
    %s113 = scalar_select %p110, %s111, %s112
    %p116 = pneg %p110
    %p117 = scmp.eq.s32.totalorder %s12, 1
    %p118 = por %p116, %p117
    %p119 = scmp.ne.s32.totalorder %s111, %s114
    %p120 = scmp.eq.s32.totalorder %s12, 0
    %p121 = por %p119, %p120
    %p122 = scmp.ne.s32.totalorder %s111, %s114
    %p123 = scmp.eq.s32.totalorder %s17, 1
    %p124 = por %p122, %p123
    %p125 = scmp.ne.s32.totalorder %s114, %s115
    %p126 = scmp.eq.s32.totalorder %s17, 0
    %p127 = por %p125, %p126
    %p128 = scmp.ne.s32.totalorder %s114, %s115
    %p129 = scmp.eq.s32.totalorder %s18, 1
    %p130 = por %p128, %p129
    %p132 = scmp.ne.s32.totalorder %s115, %s131
    %p133 = scmp.eq.s32.totalorder %s18, 0
    %p134 = por %p132, %p133
    %s136 = sadd.s32 %s135, 1
    %p139 = scmp.eq.s32.totalorder %s12, 1
    %p140 = scmp.ne.s32.totalorder %s135, %s137
    %p141 = scmp.eq.s32.totalorder %s12, 0
    %p142 = por %p140, %p141
    %p143 = scmp.ne.s32.totalorder %s135, %s137
    %p144 = scmp.eq.s32.totalorder %s17, 1
    %p145 = por %p143, %p144
    %p146 = scmp.ne.s32.totalorder %s137, %s138
    %p147 = scmp.eq.s32.totalorder %s17, 0
    %p148 = por %p146, %p147
    %p149 = scmp.ne.s32.totalorder %s137, %s138
    %p150 = scmp.eq.s32.totalorder %s18, 1
    %p151 = por %p149, %p150
    %p153 = scmp.ne.s32.totalorder %s138, %s152
    %p154 = scmp.eq.s32.totalorder %s18, 0
    %p155 = por %p153, %p154
    %p156 = scmp.le.s32.totalorder 1, %s12
    %p157 = scmp.lt.s32.totalorder %s12, 3
    %p158 = pnand %p156, %p157
    %p159 = pneg %p158
    // Predicated region
    $region9: #{inverted_residual_forward.7} parent=5 // pred_check
      _
    $region10: #{inverted_residual_forward.7} parent=5 // pred_check_branch
      %161 = sbr.rel (%p158) target = $region12
    $region11: #{inverted_residual_forward.7} parent=5 // pred_region
      %s162 = ssub.s32 %s12, 1
      // Predicated region
      $region13: #{inverted_residual_forward.7} parent=11 // pred_check
        %p163 = pneg %p33
      $region14: #{inverted_residual_forward.7} parent=11 // pred_check_branch
        %165 = sbr.rel (%p163) target = $region16
      $region15: #{inverted_residual_forward.7} parent=11 // pred_region
        _
      $region16: #{inverted_residual_forward.7} parent=11 // pred_fallthru
        _
      // Predicated region
      $region17: #{inverted_residual_forward.7} parent=11 // pred_check
        %p166 = pneg %p80
      $region18: #{inverted_residual_forward.7} parent=11 // pred_check_branch
        %168 = sbr.rel (%p166) target = $region20
      $region19: #{inverted_residual_forward.7} parent=11 // pred_region
        _
      $region20: #{inverted_residual_forward.7} parent=11 // pred_fallthru
        _
      // Predicated region
      $region21: #{inverted_residual_forward.7} parent=11 // pred_check
        %p169 = pneg %p101
      $region22: #{inverted_residual_forward.7} parent=11 // pred_check_branch
        %171 = sbr.rel (%p169) target = $region24
      $region23: #{inverted_residual_forward.7} parent=11 // pred_region
        _
      $region24: #{inverted_residual_forward.7} parent=11 // pred_fallthru
        _
    $region12: #{inverted_residual_forward.7} parent=5 // pred_fallthru
      _
    %p172 = scmp.lt.s32.totalorder %s12, 2
    // Predicated region
    $region25: #{inverted_residual_forward.7} parent=5 // pred_check
      %p173 = pneg %p172
    $region26: #{inverted_residual_forward.7} parent=5 // pred_check_branch
      %175 = sbr.rel (%p173) target = $region28
    $region27: #{inverted_residual_forward.7} parent=5 // pred_region
      // Predicated region
      $region29: #{inverted_residual_forward.7} parent=27 // pred_check
        %p176 = pneg %p53
      $region30: #{inverted_residual_forward.7} parent=27 // pred_check_branch
        %178 = sbr.rel (%p176) target = $region32
      $region31: #{inverted_residual_forward.7} parent=27 // pred_region
        %s179 = smul.u32 32, %s12
        %p180 = scmp.lt.s32.totalorder %s179, 63
        %s181 = scalar_select %p180, %s179, 63
        %s182 = smul.addr %s181, 4
        %s183 = scalar_lea.vmem %s1, %s182
        %s184 = smul.u32 32, %s12
      $region32: #{inverted_residual_forward.7} parent=27 // pred_fallthru
        _
    $region28: #{inverted_residual_forward.7} parent=5 // pred_fallthru
      _
    %p185 = scmp.le.s32.totalorder 1, %s12
    %p186 = scmp.lt.s32.totalorder %s12, 3
    %p187 = pnand %p185, %p186
    %p188 = pneg %p187
    // Predicated region
    $region33: #{inverted_residual_forward.7} parent=5 // pred_check
      _
    $region34: #{inverted_residual_forward.7} parent=5 // pred_check_branch
      %190 = sbr.rel (%p187) target = $region36
    $region35: #{inverted_residual_forward.7} parent=5 // pred_region
      %s191 = ssub.s32 %s12, 1
      %p192 = pneg %p33
      %p193 = pneg %p30
      %s194 = smul.u32 32, %s17
      %p195 = scmp.lt.s32.totalorder %s194, 63
      %s196 = scalar_select %p195, %s194, 63
      %s197 = smul.addr %s196, 4
      %s198 = scalar_lea.vmem %s1, %s197
      %p199 = pneg %p59
      %p200 = pneg %p56
      %p201 = pneg %p80
      %p202 = pneg %p77
      %p203 = pneg %p101
      %p204 = pneg %p98
      %p205 = pneg %p127
      %p206 = pneg %p124
      %s207 = smul.u32 32, %s17
      %p208 = scmp.lt.s32.totalorder %s207, 63
      %s209 = scalar_select %p208, %s207, 63
      %s210 = smul.addr %s209, 4
      %s211 = scalar_lea.vmem %s4, %s210
      %p212 = pneg %p148
      %p213 = pneg %p145
      %s214 = smul.u32 32, %s17
      %p215 = scmp.lt.s32.totalorder %s214, 63
      %s216 = scalar_select %p215, %s214, 63
      %s217 = smul.addr %s216, 4
      %s218 = scalar_lea.vmem %s1, %s217
      %s219 = smul.u32 32, %s17
      %s220 = smul.u32 32, %s17
      %p221 = scmp.lt.s32.totalorder %s220, 63
      %s222 = scalar_select %p221, %s220, 63
      %s223 = smul.addr %s222, 4
      %s224 = scalar_lea.vmem %s4, %s223
      %s225 = smul.u32 32, %s17
      %v227 = vld [vmem:[%s218] sm:$0xf]
      %v228 = vld [vmem:[%s218 + $0x4] sm:$0xf]
      %v229 = vld [vmem:[%s218 + $0x8] sm:$0xf]
      %v230 = vld [vmem:[%s218 + $0xc] sm:$0xf]
      %v231 = vld [vmem:[%s218 + $0x10] sm:$0xf]
      %v232 = vld [vmem:[%s218 + $0x14] sm:$0xf]
      %v233 = vld [vmem:[%s218 + $0x18] sm:$0xf]
      %v234 = vld [vmem:[%s218 + $0x1c] sm:$0xf]
      %v235 = vld [vmem:[%s218 + $0x20] sm:$0xf]
      %v236 = vld [vmem:[%s218 + $0x24] sm:$0xf]
      %v237 = vld [vmem:[%s218 + $0x28] sm:$0xf]
      %v238 = vld [vmem:[%s218 + $0x2c] sm:$0xf]
      %v239 = vld [vmem:[%s218 + $0x30] sm:$0xf]
      %v240 = vld [vmem:[%s218 + $0x34] sm:$0xf]
      %v241 = vld [vmem:[%s218 + $0x38] sm:$0xf]
      %v242 = vld [vmem:[%s218 + $0x3c] sm:$0xf]
      %v243 = vld [vmem:[%s218 + $0x40] sm:$0xf]
      %v244 = vld [vmem:[%s218 + $0x44] sm:$0xf]
      %v245 = vld [vmem:[%s218 + $0x48] sm:$0xf]
      %v246 = vld [vmem:[%s218 + $0x4c] sm:$0xf]
      %v247 = vld [vmem:[%s218 + $0x50] sm:$0xf]
      %v248 = vld [vmem:[%s218 + $0x54] sm:$0xf]
      %v249 = vld [vmem:[%s218 + $0x58] sm:$0xf]
      %v250 = vld [vmem:[%s218 + $0x5c] sm:$0xf]
      %v251 = vld [vmem:[%s218 + $0x60] sm:$0xf]
      %v252 = vld [vmem:[%s218 + $0x64] sm:$0xf]
      %v253 = vld [vmem:[%s218 + $0x68] sm:$0xf]
      %v254 = vld [vmem:[%s218 + $0x6c] sm:$0xf]
      %v255 = vld [vmem:[%s218 + $0x70] sm:$0xf]
      %v256 = vld [vmem:[%s218 + $0x74] sm:$0xf]
      %v257 = vld [vmem:[%s218 + $0x78] sm:$0xf]
      %v258 = vld [vmem:[%s218 + $0x7c] sm:$0xf]
      %v259 = vld [vmem:[%s0] sm:$0x1]
      %v260 = vld [vmem:[%s0 + $0x1] sm:$0x1]
      %v261 = vld [vmem:[%s0 + $0x2] sm:$0x1]
      %v262 = vunpack.c.l.bf16 %v227
      %v263 = vunpack.c.l.bf16 %v228
      %v264 = vunpack.c.l.bf16 %v229
      %v265 = vunpack.c.l.bf16 %v230
      %v266 = vunpack.c.l.bf16 %v231
      %v267 = vunpack.c.l.bf16 %v232
      %v268 = vunpack.c.l.bf16 %v233
      %v269 = vunpack.c.l.bf16 %v234
      %v270 = vunpack.c.l.bf16 %v235
      %v271 = vunpack.c.l.bf16 %v236
      %v272 = vunpack.c.l.bf16 %v237
      %v273 = vunpack.c.l.bf16 %v238
      %v274 = vunpack.c.l.bf16 %v239
      %v275 = vunpack.c.l.bf16 %v240
      %v276 = vunpack.c.l.bf16 %v241
      %v277 = vunpack.c.l.bf16 %v242
      %v278 = vunpack.c.l.bf16 %v243
      %v279 = vunpack.c.l.bf16 %v244
      %v280 = vunpack.c.l.bf16 %v245
      %v281 = vunpack.c.l.bf16 %v246
      %v282 = vunpack.c.l.bf16 %v247
      %v283 = vunpack.c.l.bf16 %v248
      %v284 = vunpack.c.l.bf16 %v249
      %v285 = vunpack.c.l.bf16 %v250
      %v286 = vunpack.c.l.bf16 %v251
      %v287 = vunpack.c.l.bf16 %v252
      %v288 = vunpack.c.l.bf16 %v253
      %v289 = vunpack.c.l.bf16 %v254
      %v290 = vunpack.c.l.bf16 %v255
      %v291 = vunpack.c.l.bf16 %v256
      %v292 = vunpack.c.l.bf16 %v257
      %v293 = vunpack.c.l.bf16 %v258
      %s295 = vtos %v259
      %v296 = vstv %s295
      %v298 = vmul.f32 %v262, %v296
      %v299 = vmul.f32 %v263, %v296
      %v300 = vmul.f32 %v264, %v296
      %v301 = vmul.f32 %v265, %v296
      %v302 = vmul.f32 %v266, %v296
      %v303 = vmul.f32 %v267, %v296
      %v304 = vmul.f32 %v268, %v296
      %v305 = vmul.f32 %v269, %v296
      %v306 = vmul.f32 %v270, %v296
      %v307 = vmul.f32 %v271, %v296
      %v308 = vmul.f32 %v272, %v296
      %v309 = vmul.f32 %v273, %v296
      %v310 = vmul.f32 %v274, %v296
      %v311 = vmul.f32 %v275, %v296
      %v312 = vmul.f32 %v276, %v296
      %v313 = vmul.f32 %v277, %v296
      %v314 = vmul.f32 %v278, %v296
      %v315 = vmul.f32 %v279, %v296
      %v316 = vmul.f32 %v280, %v296
      %v317 = vmul.f32 %v281, %v296
      %v318 = vmul.f32 %v282, %v296
      %v319 = vmul.f32 %v283, %v296
      %v320 = vmul.f32 %v284, %v296
      %v321 = vmul.f32 %v285, %v296
      %v322 = vmul.f32 %v286, %v296
      %v323 = vmul.f32 %v287, %v296
      %v324 = vmul.f32 %v288, %v296
      %v325 = vmul.f32 %v289, %v296
      %v326 = vmul.f32 %v290, %v296
      %v327 = vmul.f32 %v291, %v296
      %v328 = vmul.f32 %v292, %v296
      %v329 = vmul.f32 %v293, %v296
      %v330 = vround.ne.pseudo %v298
      %v331 = vround.ne.pseudo %v299
      %v332 = vround.ne.pseudo %v300
      %v333 = vround.ne.pseudo %v301
      %v334 = vround.ne.pseudo %v302
      %v335 = vround.ne.pseudo %v303
      %v336 = vround.ne.pseudo %v304
      %v337 = vround.ne.pseudo %v305
      %v338 = vround.ne.pseudo %v306
      %v339 = vround.ne.pseudo %v307
      %v340 = vround.ne.pseudo %v308
      %v341 = vround.ne.pseudo %v309
      %v342 = vround.ne.pseudo %v310
      %v343 = vround.ne.pseudo %v311
      %v344 = vround.ne.pseudo %v312
      %v345 = vround.ne.pseudo %v313
      %v346 = vround.ne.pseudo %v314
      %v347 = vround.ne.pseudo %v315
      %v348 = vround.ne.pseudo %v316
      %v349 = vround.ne.pseudo %v317
      %v350 = vround.ne.pseudo %v318
      %v351 = vround.ne.pseudo %v319
      %v352 = vround.ne.pseudo %v320
      %v353 = vround.ne.pseudo %v321
      %v354 = vround.ne.pseudo %v322
      %v355 = vround.ne.pseudo %v323
      %v356 = vround.ne.pseudo %v324
      %v357 = vround.ne.pseudo %v325
      %v358 = vround.ne.pseudo %v326
      %v359 = vround.ne.pseudo %v327
      %v360 = vround.ne.pseudo %v328
      %v361 = vround.ne.pseudo %v329
      %s363 = vtos %v261
      %v364 = vstv %s363
      %v366 = vadd.f32 %v330, %v364
      %v367 = vadd.f32 %v331, %v364
      %v368 = vadd.f32 %v332, %v364
      %v369 = vadd.f32 %v333, %v364
      %v370 = vadd.f32 %v334, %v364
      %v371 = vadd.f32 %v335, %v364
      %v372 = vadd.f32 %v336, %v364
      %v373 = vadd.f32 %v337, %v364
      %v374 = vadd.f32 %v338, %v364
      %v375 = vadd.f32 %v339, %v364
      %v376 = vadd.f32 %v340, %v364
      %v377 = vadd.f32 %v341, %v364
      %v378 = vadd.f32 %v342, %v364
      %v379 = vadd.f32 %v343, %v364
      %v380 = vadd.f32 %v344, %v364
      %v381 = vadd.f32 %v345, %v364
      %v382 = vadd.f32 %v346, %v364
      %v383 = vadd.f32 %v347, %v364
      %v384 = vadd.f32 %v348, %v364
      %v385 = vadd.f32 %v349, %v364
      %v386 = vadd.f32 %v350, %v364
      %v387 = vadd.f32 %v351, %v364
      %v388 = vadd.f32 %v352, %v364
      %v389 = vadd.f32 %v353, %v364
      %v390 = vadd.f32 %v354, %v364
      %v391 = vadd.f32 %v355, %v364
      %v392 = vadd.f32 %v356, %v364
      %v393 = vadd.f32 %v357, %v364
      %v394 = vadd.f32 %v358, %v364
      %v395 = vadd.f32 %v359, %v364
      %v396 = vadd.f32 %v360, %v364
      %v397 = vadd.f32 %v361, %v364
      %v398 = vmax.f32 %v366, 0.0
      %v399 = vmax.f32 %v367, 0.0
      %v400 = vmax.f32 %v368, 0.0
      %v401 = vmax.f32 %v369, 0.0
      %v402 = vmax.f32 %v370, 0.0
      %v403 = vmax.f32 %v371, 0.0
      %v404 = vmax.f32 %v372, 0.0
      %v405 = vmax.f32 %v373, 0.0
      %v406 = vmax.f32 %v374, 0.0
      %v407 = vmax.f32 %v375, 0.0
      %v408 = vmax.f32 %v376, 0.0
      %v409 = vmax.f32 %v377, 0.0
      %v410 = vmax.f32 %v378, 0.0
      %v411 = vmax.f32 %v379, 0.0
      %v412 = vmax.f32 %v380, 0.0
      %v413 = vmax.f32 %v381, 0.0
      %v414 = vmax.f32 %v382, 0.0
      %v415 = vmax.f32 %v383, 0.0
      %v416 = vmax.f32 %v384, 0.0
      %v417 = vmax.f32 %v385, 0.0
      %v418 = vmax.f32 %v386, 0.0
      %v419 = vmax.f32 %v387, 0.0
      %v420 = vmax.f32 %v388, 0.0
      %v421 = vmax.f32 %v389, 0.0
      %v422 = vmax.f32 %v390, 0.0
      %v423 = vmax.f32 %v391, 0.0
      %v424 = vmax.f32 %v392, 0.0
      %v425 = vmax.f32 %v393, 0.0
      %v426 = vmax.f32 %v394, 0.0
      %v427 = vmax.f32 %v395, 0.0
      %v428 = vmax.f32 %v396, 0.0
      %v429 = vmax.f32 %v397, 0.0
      %v430 = vmin.f32 %v398, 255.0
      %v431 = vmin.f32 %v399, 255.0
      %v432 = vmin.f32 %v400, 255.0
      %v433 = vmin.f32 %v401, 255.0
      %v434 = vmin.f32 %v402, 255.0
      %v435 = vmin.f32 %v403, 255.0
      %v436 = vmin.f32 %v404, 255.0
      %v437 = vmin.f32 %v405, 255.0
      %v438 = vmin.f32 %v406, 255.0
      %v439 = vmin.f32 %v407, 255.0
      %v440 = vmin.f32 %v408, 255.0
      %v441 = vmin.f32 %v409, 255.0
      %v442 = vmin.f32 %v410, 255.0
      %v443 = vmin.f32 %v411, 255.0
      %v444 = vmin.f32 %v412, 255.0
      %v445 = vmin.f32 %v413, 255.0
      %v446 = vmin.f32 %v414, 255.0
      %v447 = vmin.f32 %v415, 255.0
      %v448 = vmin.f32 %v416, 255.0
      %v449 = vmin.f32 %v417, 255.0
      %v450 = vmin.f32 %v418, 255.0
      %v451 = vmin.f32 %v419, 255.0
      %v452 = vmin.f32 %v420, 255.0
      %v453 = vmin.f32 %v421, 255.0
      %v454 = vmin.f32 %v422, 255.0
      %v455 = vmin.f32 %v423, 255.0
      %v456 = vmin.f32 %v424, 255.0
      %v457 = vmin.f32 %v425, 255.0
      %v458 = vmin.f32 %v426, 255.0
      %v459 = vmin.f32 %v427, 255.0
      %v460 = vmin.f32 %v428, 255.0
      %v461 = vmin.f32 %v429, 255.0
      %v462 = vsub.f32 %v430, %v364
      %v463 = vsub.f32 %v431, %v364
      %v464 = vsub.f32 %v432, %v364
      %v465 = vsub.f32 %v433, %v364
      %v466 = vsub.f32 %v434, %v364
      %v467 = vsub.f32 %v435, %v364
      %v468 = vsub.f32 %v436, %v364
      %v469 = vsub.f32 %v437, %v364
      %v470 = vsub.f32 %v438, %v364
      %v471 = vsub.f32 %v439, %v364
      %v472 = vsub.f32 %v440, %v364
      %v473 = vsub.f32 %v441, %v364
      %v474 = vsub.f32 %v442, %v364
      %v475 = vsub.f32 %v443, %v364
      %v476 = vsub.f32 %v444, %v364
      %v477 = vsub.f32 %v445, %v364
      %v478 = vsub.f32 %v446, %v364
      %v479 = vsub.f32 %v447, %v364
      %v480 = vsub.f32 %v448, %v364
      %v481 = vsub.f32 %v449, %v364
      %v482 = vsub.f32 %v450, %v364
      %v483 = vsub.f32 %v451, %v364
      %v484 = vsub.f32 %v452, %v364
      %v485 = vsub.f32 %v453, %v364
      %v486 = vsub.f32 %v454, %v364
      %v487 = vsub.f32 %v455, %v364
      %v488 = vsub.f32 %v456, %v364
      %v489 = vsub.f32 %v457, %v364
      %v490 = vsub.f32 %v458, %v364
      %v491 = vsub.f32 %v459, %v364
      %v492 = vsub.f32 %v460, %v364
      %v493 = vsub.f32 %v461, %v364
      %s495 = vtos %v260
      %v496 = vstv %s495
      %v498 = vmul.f32 %v462, %v496
      %v499 = vmul.f32 %v463, %v496
      %v500 = vmul.f32 %v464, %v496
      %v501 = vmul.f32 %v465, %v496
      %v502 = vmul.f32 %v466, %v496
      %v503 = vmul.f32 %v467, %v496
      %v504 = vmul.f32 %v468, %v496
      %v505 = vmul.f32 %v469, %v496
      %v506 = vmul.f32 %v470, %v496
      %v507 = vmul.f32 %v471, %v496
      %v508 = vmul.f32 %v472, %v496
      %v509 = vmul.f32 %v473, %v496
      %v510 = vmul.f32 %v474, %v496
      %v511 = vmul.f32 %v475, %v496
      %v512 = vmul.f32 %v476, %v496
      %v513 = vmul.f32 %v477, %v496
      %v514 = vmul.f32 %v478, %v496
      %v515 = vmul.f32 %v479, %v496
      %v516 = vmul.f32 %v480, %v496
      %v517 = vmul.f32 %v481, %v496
      %v518 = vmul.f32 %v482, %v496
      %v519 = vmul.f32 %v483, %v496
      %v520 = vmul.f32 %v484, %v496
      %v521 = vmul.f32 %v485, %v496
      %v522 = vmul.f32 %v486, %v496
      %v523 = vmul.f32 %v487, %v496
      %v524 = vmul.f32 %v488, %v496
      %v525 = vmul.f32 %v489, %v496
      %v526 = vmul.f32 %v490, %v496
      %v527 = vmul.f32 %v491, %v496
      %v528 = vmul.f32 %v492, %v496
      %v529 = vmul.f32 %v493, %v496
      %v530 = vpack.c.bf16 %v499, %v498
      %v531 = vpack.c.bf16 %v501, %v500
      %v532 = vpack.c.bf16 %v503, %v502
      %v533 = vpack.c.bf16 %v505, %v504
      %v534 = vpack.c.bf16 %v507, %v506
      %v535 = vpack.c.bf16 %v509, %v508
      %v536 = vpack.c.bf16 %v511, %v510
      %v537 = vpack.c.bf16 %v513, %v512
      %v538 = vpack.c.bf16 %v515, %v514
      %v539 = vpack.c.bf16 %v517, %v516
      %v540 = vpack.c.bf16 %v519, %v518
      %v541 = vpack.c.bf16 %v521, %v520
      %v542 = vpack.c.bf16 %v523, %v522
      %v543 = vpack.c.bf16 %v525, %v524
      %v544 = vpack.c.bf16 %v527, %v526
      %v545 = vpack.c.bf16 %v529, %v528
      %v546 = vld [vmem:[%s2] sm:$0xf]
      %v547 = vld [vmem:[%s2 + $0x4] sm:$0xf]
      %v548 = vld [vmem:[%s2 + $0x8] sm:$0xf]
      %v549 = vld [vmem:[%s2 + $0xc] sm:$0xf]
      %v550 = vld [vmem:[%s2 + $0x10] sm:$0xf]
      %v551 = vld [vmem:[%s2 + $0x14] sm:$0xf]
      %v552 = vld [vmem:[%s3] sm:$0x1]
      %v554 = vlaneseq
      %v555 = vshrl.u32 %v554, 7
      %v556 = vsub.s32 0, %v555
      %v557 = vrot.slane %v552, %v556
      %v565 = vunpack.c.l.b16 %v546
      %v566 = vunpack.c.l.b16 %v547
      %v567 = vunpack.c.l.b16 %v548
      %v568 = vunpack.c.l.b16 %v549
      %v569 = vunpack.c.l.b16 %v550
      %v570 = vunpack.c.l.b16 %v551
      %v571 = vpack.c.b16 %v566, %v565
      %v572 = vpack.c.b16 %v568, %v567
      %v573 = vpack.c.b16 %v570, %v569
      %vm577 = vcmask 392192
      %v579 = vsel %vm577, %v530, 0
      %v582 = vsel %vm577, %v531, 0
      %v585 = vsel %vm577, %v532, 0
      %v588 = vsel %vm577, %v533, 0
      %v591 = vsel %vm577, %v534, 0
      %v594 = vsel %vm577, %v535, 0
      %v597 = vsel %vm577, %v536, 0
      %v600 = vsel %vm577, %v537, 0
      %v603 = vsel %vm577, %v538, 0
      %v606 = vsel %vm577, %v539, 0
      %v609 = vsel %vm577, %v540, 0
      %v612 = vsel %vm577, %v541, 0
      %v615 = vsel %vm577, %v542, 0
      %v618 = vsel %vm577, %v543, 0
      %v621 = vsel %vm577, %v544, 0
      %v624 = vsel %vm577, %v545, 0
      %626 = vmatprep.subr.bf16.mxu0 0
      %627 = vmatpush1.bf16.msra.mxu0 %v571
      %628 = vmatprep.subr.bf16.mxu0 0
      %629 = vmatpush1.bf16.msra.mxu0 %v572
      %630 = vmatprep.subr.bf16.mxu0 0
      %631 = vmatpush1.bf16.msra.mxu0 %v573
      %632 = vmatprep.subr.bf16.mxu0 0
      %633 = vmatpush1.bf16.msra.mxu0 0
      %634 = vmatprep.subr.bf16.mxu0 0
      %635 = vmatpush1.bf16.msra.mxu0 0
      %636 = vmatprep.subr.bf16.mxu0 0
      %637 = vmatpush1.bf16.msra.mxu0 0
      %638 = vmatprep.subr.bf16.mxu0 0
      %639 = vmatpush1.bf16.msra.mxu0 0
      %640 = vmatprep.subr.bf16.mxu0 0
      %641 = vmatpush1.bf16.msra.mxu0 0
      %642 = vmatprep.subr.bf16.mxu0 0
      %643 = vmatpush1.bf16.msra.mxu0 0
      %644 = vmatprep.subr.bf16.mxu0 0
      %645 = vmatpush1.bf16.msra.mxu0 0
      %646 = vmatprep.subr.bf16.mxu0 0
      %647 = vmatpush1.bf16.msra.mxu0 0
      %648 = vmatprep.subr.bf16.mxu0 0
      %649 = vmatpush1.bf16.msra.mxu0 0
      %650 = vmatprep.subr.bf16.mxu0 0
      %651 = vmatpush1.bf16.msra.mxu0 0
      %652 = vmatprep.subr.bf16.mxu0 0
      %653 = vmatpush1.bf16.msra.mxu0 0
      %654 = vmatprep.subr.bf16.mxu0 0
      %655 = vmatpush1.bf16.msra.mxu0 0
      %656 = vmatprep.subr.bf16.mxu0 0
      %657 = vmatpush1.bf16.msra.mxu0 0
      %658 = vmatprep.mubr.bf16.mxu0 0
      %659 = vmatmul.mubr.bf16.gmra.mrb[0].mxu0 %v579
      %v660 = vpop.f32.mrb[0].mxu0
      %v661 = vadd.f32 %v557, %v660
      %v662 = vpop.f32.mrb[0].mxu0
      %v663 = vpop.f32.mrb[0].mxu0
      %v664 = vadd.f32 %v557, %v663
      %v665 = vpop.f32.mrb[0].mxu0
      %666 = vmatprep.mubr.bf16.mxu0 0
      %667 = vmatmul.mubr.bf16.gmra.mrb[0].mxu0 %v582
      %v668 = vpop.f32.mrb[0].mxu0
      %v669 = vadd.f32 %v557, %v668
      %v670 = vpop.f32.mrb[0].mxu0
      %v671 = vpop.f32.mrb[0].mxu0
      %v672 = vadd.f32 %v557, %v671
      %v673 = vpop.f32.mrb[0].mxu0
      %674 = vmatprep.mubr.bf16.mxu0 0
      %675 = vmatmul.mubr.bf16.gmra.mrb[0].mxu0 %v585
      %v676 = vpop.f32.mrb[0].mxu0
      %v677 = vadd.f32 %v557, %v676
      %v678 = vpop.f32.mrb[0].mxu0
      %v679 = vpop.f32.mrb[0].mxu0
      %v680 = vadd.f32 %v557, %v679
      %v681 = vpop.f32.mrb[0].mxu0
      %682 = vmatprep.mubr.bf16.mxu0 0
      %683 = vmatmul.mubr.bf16.gmra.mrb[0].mxu0 %v588
      %v684 = vpop.f32.mrb[0].mxu0
      %v685 = vadd.f32 %v557, %v684
      %v686 = vpop.f32.mrb[0].mxu0
      %v687 = vpop.f32.mrb[0].mxu0
      %v688 = vadd.f32 %v557, %v687
      %v689 = vpop.f32.mrb[0].mxu0
      %690 = vmatprep.mubr.bf16.mxu0 0
      %691 = vmatmul.mubr.bf16.gmra.mrb[0].mxu0 %v591
      %v692 = vpop.f32.mrb[0].mxu0
      %v693 = vadd.f32 %v557, %v692
      %v694 = vpop.f32.mrb[0].mxu0
      %v695 = vpop.f32.mrb[0].mxu0
      %v696 = vadd.f32 %v557, %v695
      %v697 = vpop.f32.mrb[0].mxu0
      %698 = vmatprep.mubr.bf16.mxu0 0
      %699 = vmatmul.mubr.bf16.gmra.mrb[0].mxu0 %v594
      %v700 = vpop.f32.mrb[0].mxu0
      %v701 = vadd.f32 %v557, %v700
      %v702 = vpop.f32.mrb[0].mxu0
      %v703 = vpop.f32.mrb[0].mxu0
      %v704 = vadd.f32 %v557, %v703
      %v705 = vpop.f32.mrb[0].mxu0
      %706 = vmatprep.mubr.bf16.mxu0 0
      %707 = vmatmul.mubr.bf16.gmra.mrb[0].mxu0 %v597
      %v708 = vpop.f32.mrb[0].mxu0
      %v709 = vadd.f32 %v557, %v708
      %v710 = vpop.f32.mrb[0].mxu0
      %v711 = vpop.f32.mrb[0].mxu0
      %v712 = vadd.f32 %v557, %v711
      %v713 = vpop.f32.mrb[0].mxu0
      %714 = vmatprep.mubr.bf16.mxu0 0
      %715 = vmatmul.mubr.bf16.gmra.mrb[0].mxu0 %v600
      %v716 = vpop.f32.mrb[0].mxu0
      %v717 = vadd.f32 %v557, %v716
      %v718 = vpop.f32.mrb[0].mxu0
      %v719 = vpop.f32.mrb[0].mxu0
      %v720 = vadd.f32 %v557, %v719
      %v721 = vpop.f32.mrb[0].mxu0
      %722 = vmatprep.mubr.bf16.mxu0 0
      %723 = vmatmul.mubr.bf16.gmra.mrb[0].mxu0 %v603
      %v724 = vpop.f32.mrb[0].mxu0
      %v725 = vadd.f32 %v557, %v724
      %v726 = vpop.f32.mrb[0].mxu0
      %v727 = vpop.f32.mrb[0].mxu0
      %v728 = vadd.f32 %v557, %v727
      %v729 = vpop.f32.mrb[0].mxu0
      %730 = vmatprep.mubr.bf16.mxu0 0
      %731 = vmatmul.mubr.bf16.gmra.mrb[0].mxu0 %v606
      %v732 = vpop.f32.mrb[0].mxu0
      %v733 = vadd.f32 %v557, %v732
      %v734 = vpop.f32.mrb[0].mxu0
      %v735 = vpop.f32.mrb[0].mxu0
      %v736 = vadd.f32 %v557, %v735
      %v737 = vpop.f32.mrb[0].mxu0
      %738 = vmatprep.mubr.bf16.mxu0 0
      %739 = vmatmul.mubr.bf16.gmra.mrb[0].mxu0 %v609
      %v740 = vpop.f32.mrb[0].mxu0
      %v741 = vadd.f32 %v557, %v740
      %v742 = vpop.f32.mrb[0].mxu0
      %v743 = vpop.f32.mrb[0].mxu0
      %v744 = vadd.f32 %v557, %v743
      %v745 = vpop.f32.mrb[0].mxu0
      %746 = vmatprep.mubr.bf16.mxu0 0
      %747 = vmatmul.mubr.bf16.gmra.mrb[0].mxu0 %v612
      %v748 = vpop.f32.mrb[0].mxu0
      %v749 = vadd.f32 %v557, %v748
      %v750 = vpop.f32.mrb[0].mxu0
      %v751 = vpop.f32.mrb[0].mxu0
      %v752 = vadd.f32 %v557, %v751
      %v753 = vpop.f32.mrb[0].mxu0
      %754 = vmatprep.mubr.bf16.mxu0 0
      %755 = vmatmul.mubr.bf16.gmra.mrb[0].mxu0 %v615
      %v756 = vpop.f32.mrb[0].mxu0
      %v757 = vadd.f32 %v557, %v756
      %v758 = vpop.f32.mrb[0].mxu0
      %v759 = vpop.f32.mrb[0].mxu0
      %v760 = vadd.f32 %v557, %v759
      %v761 = vpop.f32.mrb[0].mxu0
      %762 = vmatprep.mubr.bf16.mxu0 0
      %763 = vmatmul.mubr.bf16.gmra.mrb[0].mxu0 %v618
      %v764 = vpop.f32.mrb[0].mxu0
      %v765 = vadd.f32 %v557, %v764
      %v766 = vpop.f32.mrb[0].mxu0
      %v767 = vpop.f32.mrb[0].mxu0
      %v768 = vadd.f32 %v557, %v767
      %v769 = vpop.f32.mrb[0].mxu0
      %770 = vmatprep.mubr.bf16.mxu0 0
      %771 = vmatmul.mubr.bf16.gmra.mrb[0].mxu0 %v621
      %v772 = vpop.f32.mrb[0].mxu0
      %v773 = vadd.f32 %v557, %v772
      %v774 = vpop.f32.mrb[0].mxu0
      %v775 = vpop.f32.mrb[0].mxu0
      %v776 = vadd.f32 %v557, %v775
      %v777 = vpop.f32.mrb[0].mxu0
      %778 = vmatprep.mubr.bf16.mxu0 0
      %779 = vmatmul.mubr.bf16.gmra.mrb[0].mxu0 %v624
      %v780 = vpop.f32.mrb[0].mxu0
      %v781 = vadd.f32 %v557, %v780
      %v782 = vpop.f32.mrb[0].mxu0
      %v783 = vpop.f32.mrb[0].mxu0
      %v784 = vadd.f32 %v557, %v783
      %v785 = vpop.f32.mrb[0].mxu0
      %786 = vdwg.mxu0
      %v787 = vpack.c.bf16 %v664, %v661
      %v788 = vpack.c.bf16 %v672, %v669
      %v789 = vpack.c.bf16 %v680, %v677
      %v790 = vpack.c.bf16 %v688, %v685
      %v791 = vpack.c.bf16 %v696, %v693
      %v792 = vpack.c.bf16 %v704, %v701
      %v793 = vpack.c.bf16 %v712, %v709
      %v794 = vpack.c.bf16 %v720, %v717
      %v795 = vpack.c.bf16 %v728, %v725
      %v796 = vpack.c.bf16 %v736, %v733
      %v797 = vpack.c.bf16 %v744, %v741
      %v798 = vpack.c.bf16 %v752, %v749
      %v799 = vpack.c.bf16 %v760, %v757
      %v800 = vpack.c.bf16 %v768, %v765
      %v801 = vpack.c.bf16 %v776, %v773
      %v802 = vpack.c.bf16 %v784, %v781
      %v819 = vunpack.c.l.b16 %v787
      %v820 = vunpack.c.h.b16 %v787
      %v821 = vunpack.c.l.b16 %v788
      %v822 = vunpack.c.h.b16 %v788
      %v823 = vunpack.c.l.b16 %v789
      %v824 = vunpack.c.h.b16 %v789
      %v825 = vunpack.c.l.b16 %v790
      %v826 = vunpack.c.h.b16 %v790
      %v827 = vunpack.c.l.b16 %v791
      %v828 = vunpack.c.h.b16 %v791
      %v829 = vunpack.c.l.b16 %v792
      %v830 = vunpack.c.h.b16 %v792
      %v831 = vunpack.c.l.b16 %v793
      %v832 = vunpack.c.h.b16 %v793
      %v833 = vunpack.c.l.b16 %v794
      %v834 = vunpack.c.h.b16 %v794
      %v835 = vunpack.c.l.b16 %v795
      %v836 = vunpack.c.h.b16 %v795
      %v837 = vunpack.c.l.b16 %v796
      %v838 = vunpack.c.h.b16 %v796
      %v839 = vunpack.c.l.b16 %v797
      %v840 = vunpack.c.h.b16 %v797
      %v841 = vunpack.c.l.b16 %v798
      %v842 = vunpack.c.h.b16 %v798
      %v843 = vunpack.c.l.b16 %v799
      %v844 = vunpack.c.h.b16 %v799
      %v845 = vunpack.c.l.b16 %v800
      %v846 = vunpack.c.h.b16 %v800
      %v847 = vunpack.c.l.b16 %v801
      %v848 = vunpack.c.h.b16 %v801
      %v849 = vunpack.c.l.b16 %v802
      %v850 = vunpack.c.h.b16 %v802
      %v851 = vpack.c.b16 %v819, %v819
      %v852 = vpack.c.b16 %v820, %v820
      %v853 = vpack.c.b16 %v821, %v821
      %v854 = vpack.c.b16 %v822, %v822
      %v855 = vpack.c.b16 %v823, %v823
      %v856 = vpack.c.b16 %v824, %v824
      %v857 = vpack.c.b16 %v825, %v825
      %v858 = vpack.c.b16 %v826, %v826
      %v859 = vpack.c.b16 %v827, %v827
      %v860 = vpack.c.b16 %v828, %v828
      %v861 = vpack.c.b16 %v829, %v829
      %v862 = vpack.c.b16 %v830, %v830
      %v863 = vpack.c.b16 %v831, %v831
      %v864 = vpack.c.b16 %v832, %v832
      %v865 = vpack.c.b16 %v833, %v833
      %v866 = vpack.c.b16 %v834, %v834
      %v867 = vpack.c.b16 %v835, %v835
      %v868 = vpack.c.b16 %v836, %v836
      %v869 = vpack.c.b16 %v837, %v837
      %v870 = vpack.c.b16 %v838, %v838
      %v871 = vpack.c.b16 %v839, %v839
      %v872 = vpack.c.b16 %v840, %v840
      %v873 = vpack.c.b16 %v841, %v841
      %v874 = vpack.c.b16 %v842, %v842
      %v875 = vpack.c.b16 %v843, %v843
      %v876 = vpack.c.b16 %v844, %v844
      %v877 = vpack.c.b16 %v845, %v845
      %v878 = vpack.c.b16 %v846, %v846
      %v879 = vpack.c.b16 %v847, %v847
      %v880 = vpack.c.b16 %v848, %v848
      %v881 = vpack.c.b16 %v849, %v849
      %v882 = vpack.c.b16 %v850, %v850
      %vm915 = vcmask 60416
      %916 = vst.msk [vmem:[%s224] sm:$0xf] %vm915, %v851
      %917 = vst.msk [vmem:[%s224 + $0x4] sm:$0xf] %vm915, %v852
      %918 = vst.msk [vmem:[%s224 + $0x8] sm:$0xf] %vm915, %v853
      %919 = vst.msk [vmem:[%s224 + $0xc] sm:$0xf] %vm915, %v854
      %920 = vst.msk [vmem:[%s224 + $0x10] sm:$0xf] %vm915, %v855
      %921 = vst.msk [vmem:[%s224 + $0x14] sm:$0xf] %vm915, %v856
      %922 = vst.msk [vmem:[%s224 + $0x18] sm:$0xf] %vm915, %v857
      %923 = vst.msk [vmem:[%s224 + $0x1c] sm:$0xf] %vm915, %v858
      %924 = vst.msk [vmem:[%s224 + $0x20] sm:$0xf] %vm915, %v859
      %925 = vst.msk [vmem:[%s224 + $0x24] sm:$0xf] %vm915, %v860
      %926 = vst.msk [vmem:[%s224 + $0x28] sm:$0xf] %vm915, %v861
      %927 = vst.msk [vmem:[%s224 + $0x2c] sm:$0xf] %vm915, %v862
      %928 = vst.msk [vmem:[%s224 + $0x30] sm:$0xf] %vm915, %v863
      %929 = vst.msk [vmem:[%s224 + $0x34] sm:$0xf] %vm915, %v864
      %930 = vst.msk [vmem:[%s224 + $0x38] sm:$0xf] %vm915, %v865
      %931 = vst.msk [vmem:[%s224 + $0x3c] sm:$0xf] %vm915, %v866
      %932 = vst.msk [vmem:[%s224 + $0x40] sm:$0xf] %vm915, %v867
      %933 = vst.msk [vmem:[%s224 + $0x44] sm:$0xf] %vm915, %v868
      %934 = vst.msk [vmem:[%s224 + $0x48] sm:$0xf] %vm915, %v869
      %935 = vst.msk [vmem:[%s224 + $0x4c] sm:$0xf] %vm915, %v870
      %936 = vst.msk [vmem:[%s224 + $0x50] sm:$0xf] %vm915, %v871
      %937 = vst.msk [vmem:[%s224 + $0x54] sm:$0xf] %vm915, %v872
      %938 = vst.msk [vmem:[%s224 + $0x58] sm:$0xf] %vm915, %v873
      %939 = vst.msk [vmem:[%s224 + $0x5c] sm:$0xf] %vm915, %v874
      %940 = vst.msk [vmem:[%s224 + $0x60] sm:$0xf] %vm915, %v875
      %941 = vst.msk [vmem:[%s224 + $0x64] sm:$0xf] %vm915, %v876
      %942 = vst.msk [vmem:[%s224 + $0x68] sm:$0xf] %vm915, %v877
      %943 = vst.msk [vmem:[%s224 + $0x6c] sm:$0xf] %vm915, %v878
      %944 = vst.msk [vmem:[%s224 + $0x70] sm:$0xf] %vm915, %v879
      %945 = vst.msk [vmem:[%s224 + $0x74] sm:$0xf] %vm915, %v880
      %946 = vst.msk [vmem:[%s224 + $0x78] sm:$0xf] %vm915, %v881
      %947 = vst.msk [vmem:[%s224 + $0x7c] sm:$0xf] %vm915, %v882
      %vm948 = vcmask 64512
      %v949 = vsel %vm948, %v661, inf
      %v950 = vsel %vm948, %v664, inf
      %v951 = vsel %vm948, %v669, inf
      %v952 = vsel %vm948, %v672, inf
      %v953 = vsel %vm948, %v677, inf
      %v954 = vmin.f32 %v949, %v953
      %v955 = vsel %vm948, %v680, inf
      %v956 = vmin.f32 %v950, %v955
      %v957 = vsel %vm948, %v685, inf
      %v958 = vmin.f32 %v951, %v957
      %v959 = vsel %vm948, %v688, inf
      %v960 = vmin.f32 %v952, %v959
      %v961 = vsel %vm948, %v693, inf
      %v962 = vmin.f32 %v954, %v961
      %v963 = vsel %vm948, %v696, inf
      %v964 = vmin.f32 %v956, %v963
      %v965 = vsel %vm948, %v701, inf
      %v966 = vmin.f32 %v958, %v965
      %v967 = vsel %vm948, %v704, inf
      %v968 = vmin.f32 %v960, %v967
      %v969 = vsel %vm948, %v709, inf
      %v970 = vmin.f32 %v962, %v969
      %v971 = vsel %vm948, %v712, inf
      %v972 = vmin.f32 %v964, %v971
      %v973 = vsel %vm948, %v717, inf
      %v974 = vmin.f32 %v966, %v973
      %v975 = vsel %vm948, %v720, inf
      %v976 = vmin.f32 %v968, %v975
      %v977 = vsel %vm948, %v725, inf
      %v978 = vmin.f32 %v970, %v977
      %v979 = vsel %vm948, %v728, inf
      %v980 = vmin.f32 %v972, %v979
      %v981 = vsel %vm948, %v733, inf
      %v982 = vmin.f32 %v974, %v981
      %v983 = vsel %vm948, %v736, inf
      %v984 = vmin.f32 %v976, %v983
      %v985 = vsel %vm948, %v741, inf
      %v986 = vmin.f32 %v978, %v985
      %v987 = vsel %vm948, %v744, inf
      %v988 = vmin.f32 %v980, %v987
      %v989 = vsel %vm948, %v749, inf
      %v990 = vmin.f32 %v982, %v989
      %v991 = vsel %vm948, %v752, inf
      %v992 = vmin.f32 %v984, %v991
      %v993 = vsel %vm948, %v757, inf
      %v994 = vmin.f32 %v986, %v993
      %v995 = vsel %vm948, %v760, inf
      %v996 = vmin.f32 %v988, %v995
      %v997 = vsel %vm948, %v765, inf
      %v998 = vmin.f32 %v990, %v997
      %v999 = vsel %vm948, %v768, inf
      %v1000 = vmin.f32 %v992, %v999
      %v1001 = vsel %vm948, %v773, inf
      %v1002 = vmin.f32 %v994, %v1001
      %v1003 = vsel %vm948, %v776, inf
      %v1004 = vmin.f32 %v996, %v1003
      %v1005 = vsel %vm948, %v781, inf
      %v1006 = vmin.f32 %v998, %v1005
      %v1007 = vsel %vm948, %v784, inf
      %v1008 = vmin.f32 %v1000, %v1007
      %v1009 = vmin.f32 %v1002, %v1004
      %v1010 = vmin.f32 %v1006, %v1008
      %v1011 = vmin.f32 %v1009, %v1010
      %v1012 = vrot.slane %v1011, 4
      %v1013 = vmin.f32 %v1011, %v1012
      %v1014 = vrot.slane %v1013, 2
      %v1015 = vmin.f32 %v1013, %v1014
      %v1016 = vrot.slane %v1015, 1
      %v1017 = vmin.f32 %v1015, %v1016
      %v1018 = vsel %vm948, %v661, -inf
      %v1019 = vsel %vm948, %v664, -inf
      %v1020 = vsel %vm948, %v669, -inf
      %v1021 = vsel %vm948, %v672, -inf
      %v1022 = vsel %vm948, %v677, -inf
      %v1023 = vmax.f32 %v1018, %v1022
      %v1024 = vsel %vm948, %v680, -inf
      %v1025 = vmax.f32 %v1019, %v1024
      %v1026 = vsel %vm948, %v685, -inf
      %v1027 = vmax.f32 %v1020, %v1026
      %v1028 = vsel %vm948, %v688, -inf
      %v1029 = vmax.f32 %v1021, %v1028
      %v1030 = vsel %vm948, %v693, -inf
      %v1031 = vmax.f32 %v1023, %v1030
      %v1032 = vsel %vm948, %v696, -inf
      %v1033 = vmax.f32 %v1025, %v1032
      %v1034 = vsel %vm948, %v701, -inf
      %v1035 = vmax.f32 %v1027, %v1034
      %v1036 = vsel %vm948, %v704, -inf
      %v1037 = vmax.f32 %v1029, %v1036
      %v1038 = vsel %vm948, %v709, -inf
      %v1039 = vmax.f32 %v1031, %v1038
      %v1040 = vsel %vm948, %v712, -inf
      %v1041 = vmax.f32 %v1033, %v1040
      %v1042 = vsel %vm948, %v717, -inf
      %v1043 = vmax.f32 %v1035, %v1042
      %v1044 = vsel %vm948, %v720, -inf
      %v1045 = vmax.f32 %v1037, %v1044
      %v1046 = vsel %vm948, %v725, -inf
      %v1047 = vmax.f32 %v1039, %v1046
      %v1048 = vsel %vm948, %v728, -inf
      %v1049 = vmax.f32 %v1041, %v1048
      %v1050 = vsel %vm948, %v733, -inf
      %v1051 = vmax.f32 %v1043, %v1050
      %v1052 = vsel %vm948, %v736, -inf
      %v1053 = vmax.f32 %v1045, %v1052
      %v1054 = vsel %vm948, %v741, -inf
      %v1055 = vmax.f32 %v1047, %v1054
      %v1056 = vsel %vm948, %v744, -inf
      %v1057 = vmax.f32 %v1049, %v1056
      %v1058 = vsel %vm948, %v749, -inf
      %v1059 = vmax.f32 %v1051, %v1058
      %v1060 = vsel %vm948, %v752, -inf
      %v1061 = vmax.f32 %v1053, %v1060
      %v1062 = vsel %vm948, %v757, -inf
      %v1063 = vmax.f32 %v1055, %v1062
      %v1064 = vsel %vm948, %v760, -inf
      %v1065 = vmax.f32 %v1057, %v1064
      %v1066 = vsel %vm948, %v765, -inf
      %v1067 = vmax.f32 %v1059, %v1066
      %v1068 = vsel %vm948, %v768, -inf
      %v1069 = vmax.f32 %v1061, %v1068
      %v1070 = vsel %vm948, %v773, -inf
      %v1071 = vmax.f32 %v1063, %v1070
      %v1072 = vsel %vm948, %v776, -inf
      %v1073 = vmax.f32 %v1065, %v1072
      %v1074 = vsel %vm948, %v781, -inf
      %v1075 = vmax.f32 %v1067, %v1074
      %v1076 = vsel %vm948, %v784, -inf
      %v1077 = vmax.f32 %v1069, %v1076
      %v1078 = vmax.f32 %v1071, %v1073
      %v1079 = vmax.f32 %v1075, %v1077
      %v1080 = vmax.f32 %v1078, %v1079
      %v1081 = vrot.slane %v1080, 4
      %v1082 = vmax.f32 %v1080, %v1081
      %v1083 = vrot.slane %v1082, 2
      %v1084 = vmax.f32 %v1082, %v1083
      %v1085 = vrot.slane %v1084, 1
      %v1086 = vmax.f32 %v1084, %v1085
      %p1087 = scmp.eq.s32.totalorder %s17, 0
      // Predicated region
      $region37: #{inverted_residual_forward.7} parent=35 // pred_check
        %p1088 = pneg %p1087
      $region38: #{inverted_residual_forward.7} parent=35 // pred_check_branch
        %1090 = sbr.rel (%p1088) target = $region40
      $region39: #{inverted_residual_forward.7} parent=35 // pred_region
        %vm1091 = vcmask 57344
        %1092 = vst.msk [vmem:[#allocation2] sm:$0x1] %vm1091, %v1017
        %1093 = vst.msk [vmem:[#allocation2 + $0x1] sm:$0x1] %vm1091, %v1086
      $region40: #{inverted_residual_forward.7} parent=35 // pred_fallthru
        _
      %p1094 = scmp.ne.s32.totalorder %s17, 0
      // Predicated region
      $region41: #{inverted_residual_forward.7} parent=35 // pred_check
        %p1095 = pneg %p1094
      $region42: #{inverted_residual_forward.7} parent=35 // pred_check_branch
        %1097 = sbr.rel (%p1095) target = $region44
      $region43: #{inverted_residual_forward.7} parent=35 // pred_region
        %v1098 = vld [vmem:[#allocation2] sm:$0x1]
        %v1099 = vmin.f32 %v1098, %v1017
        %vm1100 = vcmask 57344
        %1101 = vst.msk [vmem:[#allocation2] sm:$0x1] %vm1100, %v1099
        %v1102 = vld [vmem:[#allocation2 + $0x1] sm:$0x1]
        %v1103 = vmax.f32 %v1102, %v1086
        %1104 = vst.msk [vmem:[#allocation2 + $0x1] sm:$0x1] %vm1100, %v1103
      $region44: #{inverted_residual_forward.7} parent=35 // pred_fallthru
        _
      %p1105 = scmp.eq.s32.totalorder %s17, 1
      // Predicated region
      $region45: #{inverted_residual_forward.7} parent=35 // pred_check
        %p1106 = pneg %p1105
      $region46: #{inverted_residual_forward.7} parent=35 // pred_check_branch
        %1108 = sbr.rel (%p1106) target = $region48
      $region47: #{inverted_residual_forward.7} parent=35 // pred_region
        %v1109 = vld [vmem:[#allocation2] sm:$0x1]
        %vm1110 = vcmask 57344
        %v1111 = vsel %vm1110, %v1109, inf
        %1112 = vmin.xlane.f32.xlu0 %v1111
        %v1113 = vpop.xlane.xlu0 %1112
        %v1114 = vmin.f32 %v1113, 0.0
        %v1115 = vld [vmem:[#allocation2 + $0x1] sm:$0x1]
        %v1116 = vsel %vm1110, %v1115, -inf
        %1117 = vmax.xlane.f32.xlu0 %v1116
        %v1118 = vpop.xlane.xlu0 %1117
        %v1119 = vmax.f32 %v1118, 0.0
        %v1120 = vsub.f32 %v1119, %v1114
        %v1121 = vmul.f32 %v1120, 0.003921569
        %v1122 = vmax.f32 %v1121, 1e-08
        %v1123 = vsub.f32 0.0, %v1114
        %v1124 = vrcp.pop %v1122
        %v1125 = vmul.f32 %v1123, %v1124
        %v1126 = vround.ne.pseudo %v1125
        %v1127 = vmul.f32 1.0, %v1124
        %1128 = vst [vmem:[%s5] sm:$0x1] %v1127
        %1129 = vst [vmem:[%s5 + $0x1] sm:$0x1] %v1122
        %1130 = vst [vmem:[%s5 + $0x2] sm:$0x1] %v1126
      $region48: #{inverted_residual_forward.7} parent=35 // pred_fallthru
        _
      %s1131 = smul.u32 32, %s17
      %p1132 = scmp.lt.s32.totalorder %s1131, 63
      %s1133 = scalar_select %p1132, %s1131, 63
      %s1134 = smul.addr %s1133, 4
      %s1135 = scalar_lea.vmem %s4, %s1134
      // Predicated region
      $region49: #{inverted_residual_forward.7} parent=35 // pred_check
        %p1136 = pneg %p124
      $region50: #{inverted_residual_forward.7} parent=35 // pred_check_branch
        %1138 = sbr.rel (%p1136) target = $region52
      $region51: #{inverted_residual_forward.7} parent=35 // pred_region
        %s1139 = smul.u32 32, %s17
      $region52: #{inverted_residual_forward.7} parent=35 // pred_fallthru
        _
      // Predicated region
      $region53: #{inverted_residual_forward.7} parent=35 // pred_check
        %p1140 = pneg %p145
      $region54: #{inverted_residual_forward.7} parent=35 // pred_check_branch
        %1142 = sbr.rel (%p1140) target = $region56
      $region55: #{inverted_residual_forward.7} parent=35 // pred_region
        _
      $region56: #{inverted_residual_forward.7} parent=35 // pred_fallthru
        _
      // Predicated region
      $region57: #{inverted_residual_forward.7} parent=35 // pred_check
        %p1143 = pneg %p145
      $region58: #{inverted_residual_forward.7} parent=35 // pred_check_branch
        %1145 = sbr.rel (%p1143) target = $region60
      $region59: #{inverted_residual_forward.7} parent=35 // pred_region
        _
      $region60: #{inverted_residual_forward.7} parent=35 // pred_fallthru
        _
    $region36: #{inverted_residual_forward.7} parent=5 // pred_fallthru
      _
    %p1146 = scmp.le.s32.totalorder 2, %s12
    // Predicated region
    $region61: #{inverted_residual_forward.7} parent=5 // pred_check
      %p1147 = pneg %p1146
    $region62: #{inverted_residual_forward.7} parent=5 // pred_check_branch
      %1149 = sbr.rel (%p1147) target = $region64
    $region63: #{inverted_residual_forward.7} parent=5 // pred_region
      %s1150 = ssub.s32 %s12, 2
      // Predicated region
      $region65: #{inverted_residual_forward.7} parent=63 // pred_check
        %p1151 = pneg %p130
      $region66: #{inverted_residual_forward.7} parent=63 // pred_check_branch
        %1153 = sbr.rel (%p1151) target = $region68
      $region67: #{inverted_residual_forward.7} parent=63 // pred_region
        %s1154 = smul.u32 32, %s18
        %p1155 = scmp.lt.s32.totalorder %s1154, 63
        %s1156 = scalar_select %p1155, %s1154, 63
        %s1157 = smul.addr %s1156, 4
        %s1158 = scalar_lea.vmem %s4, %s1157
      $region68: #{inverted_residual_forward.7} parent=63 // pred_fallthru
        _
    $region64: #{inverted_residual_forward.7} parent=5 // pred_fallthru
      _
  $region6: #{inverted_residual_forward.7} parent=0 // loop_footer
    %s16 = sadd.s32 1, %s12
  $region7: #{inverted_residual_forward.7} parent=0 // loop_footer_branch
    %11 = sbr.rel target = $region3
  $region8: #{inverted_residual_forward.7} parent=0 // loop_exit
    _

// kernel: inverted_residual_forward.5
$region0: #{inverted_residual_forward.5}
  #allocation0 [shape = 'u32[]', space=smem, size = 0x4, offset = 0x4, fixed_abs, tag = 'smem constant byte address 0x4 - core index']
  #allocation1 [shape = 'u32[144,128]{1,0:T(1,128)}', space=vmem, size = 0x12000, scoped, tag = 'internal scratch']
  #allocation2 [shape = 'f32[2,48]{1,0:T(2,128)}', space=vmem, size = 0x400, scoped, tag = 'scratch operand']
  %s0 = inlined_call_operand.vmem [shape: f32[3,128], index: 0, kind: input, shape index: {}]
  %s1 = inlined_call_operand.vmem [shape: bf16[512,8], index: 1, kind: input, shape index: {}]
  %s2 = inlined_call_operand.vmem [shape: bf16[8,48], index: 2, kind: input, shape index: {}]
  %s3 = inlined_call_operand.vmem [shape: f32[1,48], index: 3, kind: input, shape index: {}]
  %s4 = inlined_call_operand.vmem [shape: bf16[512,48], index: 4, kind: output, shape index: {0}]
  %s5 = inlined_call_operand.vmem [shape: f32[3,128], index: 5, kind: output, shape index: {1}]
  %6 = xla_tuple %s4, %s5
  %s7 = sld [smem:[#allocation0]]
  $region69: #{inverted_residual_forward.5} parent=0
    _
  %s9 = ssub.s32 1, %s7
  %s10 = scalar_select 0, %s9, %s7
  loop: start=0, step=1, limit=4
  $region2: #{inverted_residual_forward.5} parent=0 // loop_pre_header
    _
  $region3: #{inverted_residual_forward.5} parent=0 // loop_header
    %s12 = sphi 0, %s16
    %p13 = scmp.ge.s32.totalorder %s12, 4
    %s20 = sphi 0, %s20
    %s22 = sphi 0, %s20
    %s23 = sphi 0, %s22
    %s37 = sphi 0, %s23
    %s43 = sphi 0, %s45
    %s46 = sphi 0, %s43
    %s47 = sphi 0, %s46
    %s63 = sphi 0, %s47
    %s67 = sphi 0, %s67
    %s69 = sphi 0, %s67
    %s70 = sphi 0, %s69
    %s84 = sphi 0, %s70
    %s88 = sphi 0, %s88
    %s90 = sphi 0, %s88
    %s91 = sphi 0, %s90
    %s105 = sphi 0, %s91
    %s111 = sphi 0, %s113
    %s114 = sphi 0, %s111
    %s115 = sphi 0, %s114
    %s131 = sphi 0, %s115
    %s135 = sphi 0, %s135
    %s137 = sphi 0, %s135
    %s138 = sphi 0, %s137
    %s152 = sphi 0, %s138
  $region4: #{inverted_residual_forward.5} parent=0 // loop_header_branch
    %15 = sbr.rel (%p13) target = $region8
  $region5: #{inverted_residual_forward.5} parent=0 // loop_body
    %s17 = ssub.s32 %s12, 1
    %s18 = ssub.s32 %s12, 2
    %s19 = sadd.s32 %s12, 1
    %s21 = sadd.s32 %s20, 1
    %p24 = scmp.eq.s32.totalorder %s12, 1
    %p25 = scmp.ne.s32.totalorder %s20, %s22
    %p26 = scmp.eq.s32.totalorder %s12, 0
    %p27 = por %p25, %p26
    %p28 = scmp.ne.s32.totalorder %s20, %s22
    %p29 = scmp.eq.s32.totalorder %s17, 1
    %p30 = por %p28, %p29
    %p31 = scmp.ne.s32.totalorder %s22, %s23
    %p32 = scmp.eq.s32.totalorder %s17, 0
    %p33 = por %p31, %p32
    %p34 = scmp.ne.s32.totalorder %s22, %s23
    %p35 = scmp.eq.s32.totalorder %s18, 1
    %p36 = por %p34, %p35
    %p38 = scmp.ne.s32.totalorder %s23, %s37
    %p39 = scmp.eq.s32.totalorder %s18, 0
    %p40 = por %p38, %p39
    %s41 = ssub.s32 %s12, %s19
    %p42 = scmp.eq.s32.totalorder %s41, 0
    %s44 = sadd.s32 %s43, 1
    %s45 = scalar_select %p42, %s43, %s44
    %p48 = pneg %p42
    %p49 = scmp.eq.s32.totalorder %s12, 1
    %p50 = por %p48, %p49
    %p51 = scmp.ne.s32.totalorder %s43, %s46
    %p52 = scmp.eq.s32.totalorder %s12, 0
    %p53 = por %p51, %p52
    %p54 = scmp.ne.s32.totalorder %s43, %s46
    %p55 = scmp.eq.s32.totalorder %s17, 1
    %p56 = por %p54, %p55
    %p57 = scmp.ne.s32.totalorder %s46, %s47
    %p58 = scmp.eq.s32.totalorder %s17, 0
    %p59 = por %p57, %p58
    %p60 = scmp.ne.s32.totalorder %s46, %s47
    %p61 = scmp.eq.s32.totalorder %s18, 1
    %p62 = por %p60, %p61
    %p64 = scmp.ne.s32.totalorder %s47, %s63
    %p65 = scmp.eq.s32.totalorder %s18, 0
    %p66 = por %p64, %p65
    %s68 = sadd.s32 %s67, 1
    %p71 = scmp.eq.s32.totalorder %s12, 1
    %p72 = scmp.ne.s32.totalorder %s67, %s69
    %p73 = scmp.eq.s32.totalorder %s12, 0
    %p74 = por %p72, %p73
    %p75 = scmp.ne.s32.totalorder %s67, %s69
    %p76 = scmp.eq.s32.totalorder %s17, 1
    %p77 = por %p75, %p76
    %p78 = scmp.ne.s32.totalorder %s69, %s70
    %p79 = scmp.eq.s32.totalorder %s17, 0
    %p80 = por %p78, %p79
    %p81 = scmp.ne.s32.totalorder %s69, %s70
    %p82 = scmp.eq.s32.totalorder %s18, 1
    %p83 = por %p81, %p82
    %p85 = scmp.ne.s32.totalorder %s70, %s84
    %p86 = scmp.eq.s32.totalorder %s18, 0
    %p87 = por %p85, %p86
    %s89 = sadd.s32 %s88, 1
    %p92 = scmp.eq.s32.totalorder %s12, 1
    %p93 = scmp.ne.s32.totalorder %s88, %s90
    %p94 = scmp.eq.s32.totalorder %s12, 0
    %p95 = por %p93, %p94
    %p96 = scmp.ne.s32.totalorder %s88, %s90
    %p97 = scmp.eq.s32.totalorder %s17, 1
    %p98 = por %p96, %p97
    %p99 = scmp.ne.s32.totalorder %s90, %s91
    %p100 = scmp.eq.s32.totalorder %s17, 0
    %p101 = por %p99, %p100
    %p102 = scmp.ne.s32.totalorder %s90, %s91
    %p103 = scmp.eq.s32.totalorder %s18, 1
    %p104 = por %p102, %p103
    %p106 = scmp.ne.s32.totalorder %s91, %s105
    %p107 = scmp.eq.s32.totalorder %s18, 0
    %p108 = por %p106, %p107
    %s109 = ssub.s32 %s12, %s19
    %p110 = scmp.eq.s32.totalorder %s109, 0
    %s112 = sadd.s32 %s111, 1
    %s113 = scalar_select %p110, %s111, %s112
    %p116 = pneg %p110
    %p117 = scmp.eq.s32.totalorder %s12, 1
    %p118 = por %p116, %p117
    %p119 = scmp.ne.s32.totalorder %s111, %s114
    %p120 = scmp.eq.s32.totalorder %s12, 0
    %p121 = por %p119, %p120
    %p122 = scmp.ne.s32.totalorder %s111, %s114
    %p123 = scmp.eq.s32.totalorder %s17, 1
    %p124 = por %p122, %p123
    %p125 = scmp.ne.s32.totalorder %s114, %s115
    %p126 = scmp.eq.s32.totalorder %s17, 0
    %p127 = por %p125, %p126
    %p128 = scmp.ne.s32.totalorder %s114, %s115
    %p129 = scmp.eq.s32.totalorder %s18, 1
    %p130 = por %p128, %p129
    %p132 = scmp.ne.s32.totalorder %s115, %s131
    %p133 = scmp.eq.s32.totalorder %s18, 0
    %p134 = por %p132, %p133
    %s136 = sadd.s32 %s135, 1
    %p139 = scmp.eq.s32.totalorder %s12, 1
    %p140 = scmp.ne.s32.totalorder %s135, %s137
    %p141 = scmp.eq.s32.totalorder %s12, 0
    %p142 = por %p140, %p141
    %p143 = scmp.ne.s32.totalorder %s135, %s137
    %p144 = scmp.eq.s32.totalorder %s17, 1
    %p145 = por %p143, %p144
    %p146 = scmp.ne.s32.totalorder %s137, %s138
    %p147 = scmp.eq.s32.totalorder %s17, 0
    %p148 = por %p146, %p147
    %p149 = scmp.ne.s32.totalorder %s137, %s138
    %p150 = scmp.eq.s32.totalorder %s18, 1
    %p151 = por %p149, %p150
    %p153 = scmp.ne.s32.totalorder %s138, %s152
    %p154 = scmp.eq.s32.totalorder %s18, 0
    %p155 = por %p153, %p154
    %p156 = scmp.le.s32.totalorder 1, %s12
    %p157 = scmp.lt.s32.totalorder %s12, 3
    %p158 = pnand %p156, %p157
    %p159 = pneg %p158
    // Predicated region
    $region9: #{inverted_residual_forward.5} parent=5 // pred_check
      _
    $region10: #{inverted_residual_forward.5} parent=5 // pred_check_branch
      %161 = sbr.rel (%p158) target = $region12
    $region11: #{inverted_residual_forward.5} parent=5 // pred_region
      %s162 = ssub.s32 %s12, 1
      // Predicated region
      $region13: #{inverted_residual_forward.5} parent=11 // pred_check
        %p163 = pneg %p33
      $region14: #{inverted_residual_forward.5} parent=11 // pred_check_branch
        %165 = sbr.rel (%p163) target = $region16
      $region15: #{inverted_residual_forward.5} parent=11 // pred_region
        _
      $region16: #{inverted_residual_forward.5} parent=11 // pred_fallthru
        _
      // Predicated region
      $region17: #{inverted_residual_forward.5} parent=11 // pred_check
        %p166 = pneg %p80
      $region18: #{inverted_residual_forward.5} parent=11 // pred_check_branch
        %168 = sbr.rel (%p166) target = $region20
      $region19: #{inverted_residual_forward.5} parent=11 // pred_region
        _
      $region20: #{inverted_residual_forward.5} parent=11 // pred_fallthru
        _
      // Predicated region
      $region21: #{inverted_residual_forward.5} parent=11 // pred_check
        %p169 = pneg %p101
      $region22: #{inverted_residual_forward.5} parent=11 // pred_check_branch
        %171 = sbr.rel (%p169) target = $region24
      $region23: #{inverted_residual_forward.5} parent=11 // pred_region
        _
      $region24: #{inverted_residual_forward.5} parent=11 // pred_fallthru
        _
    $region12: #{inverted_residual_forward.5} parent=5 // pred_fallthru
      _
    %p172 = scmp.lt.s32.totalorder %s12, 2
    // Predicated region
    $region25: #{inverted_residual_forward.5} parent=5 // pred_check
      %p173 = pneg %p172
    $region26: #{inverted_residual_forward.5} parent=5 // pred_check_branch
      %175 = sbr.rel (%p173) target = $region28
    $region27: #{inverted_residual_forward.5} parent=5 // pred_region
      // Predicated region
      $region29: #{inverted_residual_forward.5} parent=27 // pred_check
        %p176 = pneg %p53
      $region30: #{inverted_residual_forward.5} parent=27 // pred_check_branch
        %178 = sbr.rel (%p176) target = $region32
      $region31: #{inverted_residual_forward.5} parent=27 // pred_region
        %s179 = smul.u32 32, %s12
        %p180 = scmp.lt.s32.totalorder %s179, 63
        %s181 = scalar_select %p180, %s179, 63
        %s182 = smul.addr %s181, 4
        %s183 = scalar_lea.vmem %s1, %s182
        %s184 = smul.u32 32, %s12
      $region32: #{inverted_residual_forward.5} parent=27 // pred_fallthru
        _
    $region28: #{inverted_residual_forward.5} parent=5 // pred_fallthru
      _
    %p185 = scmp.le.s32.totalorder 1, %s12
    %p186 = scmp.lt.s32.totalorder %s12, 3
    %p187 = pnand %p185, %p186
    %p188 = pneg %p187
    // Predicated region
    $region33: #{inverted_residual_forward.5} parent=5 // pred_check
      _
    $region34: #{inverted_residual_forward.5} parent=5 // pred_check_branch
      %190 = sbr.rel (%p187) target = $region36
    $region35: #{inverted_residual_forward.5} parent=5 // pred_region
      %s191 = ssub.s32 %s12, 1
      %p192 = pneg %p33
      %p193 = pneg %p30
      %s194 = smul.u32 32, %s17
      %p195 = scmp.lt.s32.totalorder %s194, 63
      %s196 = scalar_select %p195, %s194, 63
      %s197 = smul.addr %s196, 4
      %s198 = scalar_lea.vmem %s1, %s197
      %p199 = pneg %p59
      %p200 = pneg %p56
      %p201 = pneg %p80
      %p202 = pneg %p77
      %p203 = pneg %p101
      %p204 = pneg %p98
      %p205 = pneg %p127
      %p206 = pneg %p124
      %s207 = smul.u32 32, %s17
      %p208 = scmp.lt.s32.totalorder %s207, 63
      %s209 = scalar_select %p208, %s207, 63
      %s210 = smul.addr %s209, 4
      %s211 = scalar_lea.vmem %s4, %s210
      %p212 = pneg %p148
      %p213 = pneg %p145
      %s214 = smul.u32 32, %s17
      %p215 = scmp.lt.s32.totalorder %s214, 63
      %s216 = scalar_select %p215, %s214, 63
      %s217 = smul.addr %s216, 4
      %s218 = scalar_lea.vmem %s1, %s217
      %s219 = smul.u32 32, %s17
      %s220 = smul.u32 32, %s17
      %p221 = scmp.lt.s32.totalorder %s220, 63
      %s222 = scalar_select %p221, %s220, 63
      %s223 = smul.addr %s222, 4
      %s224 = scalar_lea.vmem %s4, %s223
      %s225 = smul.u32 32, %s17
      %v227 = vld [vmem:[%s218] sm:$0xf]
      %v228 = vld [vmem:[%s218 + $0x4] sm:$0xf]
      %v229 = vld [vmem:[%s218 + $0x8] sm:$0xf]
      %v230 = vld [vmem:[%s218 + $0xc] sm:$0xf]
      %v231 = vld [vmem:[%s218 + $0x10] sm:$0xf]
      %v232 = vld [vmem:[%s218 + $0x14] sm:$0xf]
      %v233 = vld [vmem:[%s218 + $0x18] sm:$0xf]
      %v234 = vld [vmem:[%s218 + $0x1c] sm:$0xf]
      %v235 = vld [vmem:[%s218 + $0x20] sm:$0xf]
      %v236 = vld [vmem:[%s218 + $0x24] sm:$0xf]
      %v237 = vld [vmem:[%s218 + $0x28] sm:$0xf]
      %v238 = vld [vmem:[%s218 + $0x2c] sm:$0xf]
      %v239 = vld [vmem:[%s218 + $0x30] sm:$0xf]
      %v240 = vld [vmem:[%s218 + $0x34] sm:$0xf]
      %v241 = vld [vmem:[%s218 + $0x38] sm:$0xf]
      %v242 = vld [vmem:[%s218 + $0x3c] sm:$0xf]
      %v243 = vld [vmem:[%s218 + $0x40] sm:$0xf]
      %v244 = vld [vmem:[%s218 + $0x44] sm:$0xf]
      %v245 = vld [vmem:[%s218 + $0x48] sm:$0xf]
      %v246 = vld [vmem:[%s218 + $0x4c] sm:$0xf]
      %v247 = vld [vmem:[%s218 + $0x50] sm:$0xf]
      %v248 = vld [vmem:[%s218 + $0x54] sm:$0xf]
      %v249 = vld [vmem:[%s218 + $0x58] sm:$0xf]
      %v250 = vld [vmem:[%s218 + $0x5c] sm:$0xf]
      %v251 = vld [vmem:[%s218 + $0x60] sm:$0xf]
      %v252 = vld [vmem:[%s218 + $0x64] sm:$0xf]
      %v253 = vld [vmem:[%s218 + $0x68] sm:$0xf]
      %v254 = vld [vmem:[%s218 + $0x6c] sm:$0xf]
      %v255 = vld [vmem:[%s218 + $0x70] sm:$0xf]
      %v256 = vld [vmem:[%s218 + $0x74] sm:$0xf]
      %v257 = vld [vmem:[%s218 + $0x78] sm:$0xf]
      %v258 = vld [vmem:[%s218 + $0x7c] sm:$0xf]
      %v259 = vld [vmem:[%s2] sm:$0xf]
      %v260 = vld [vmem:[%s3] sm:$0x1]
      %v262 = vlaneseq
      %v263 = vshrl.u32 %v262, 7
      %v264 = vsub.s32 0, %v263
      %v265 = vrot.slane %v260, %v264
      %v299 = vunpack.c.l.b16 %v227
      %v300 = vunpack.c.l.b16 %v228
      %v301 = vunpack.c.l.b16 %v229
      %v302 = vunpack.c.l.b16 %v230
      %v303 = vunpack.c.l.b16 %v231
      %v304 = vunpack.c.l.b16 %v232
      %v305 = vunpack.c.l.b16 %v233
      %v306 = vunpack.c.l.b16 %v234
      %v307 = vunpack.c.l.b16 %v235
      %v308 = vunpack.c.l.b16 %v236
      %v309 = vunpack.c.l.b16 %v237
      %v310 = vunpack.c.l.b16 %v238
      %v311 = vunpack.c.l.b16 %v239
      %v312 = vunpack.c.l.b16 %v240
      %v313 = vunpack.c.l.b16 %v241
      %v314 = vunpack.c.l.b16 %v242
      %v315 = vunpack.c.l.b16 %v243
      %v316 = vunpack.c.l.b16 %v244
      %v317 = vunpack.c.l.b16 %v245
      %v318 = vunpack.c.l.b16 %v246
      %v319 = vunpack.c.l.b16 %v247
      %v320 = vunpack.c.l.b16 %v248
      %v321 = vunpack.c.l.b16 %v249
      %v322 = vunpack.c.l.b16 %v250
      %v323 = vunpack.c.l.b16 %v251
      %v324 = vunpack.c.l.b16 %v252
      %v325 = vunpack.c.l.b16 %v253
      %v326 = vunpack.c.l.b16 %v254
      %v327 = vunpack.c.l.b16 %v255
      %v328 = vunpack.c.l.b16 %v256
      %v329 = vunpack.c.l.b16 %v257
      %v330 = vunpack.c.l.b16 %v258
      %v331 = vpack.c.b16 %v300, %v299
      %v332 = vpack.c.b16 %v302, %v301
      %v333 = vpack.c.b16 %v304, %v303
      %v334 = vpack.c.b16 %v306, %v305
      %v335 = vpack.c.b16 %v308, %v307
      %v336 = vpack.c.b16 %v310, %v309
      %v337 = vpack.c.b16 %v312, %v311
      %v338 = vpack.c.b16 %v314, %v313
      %v339 = vpack.c.b16 %v316, %v315
      %v340 = vpack.c.b16 %v318, %v317
      %v341 = vpack.c.b16 %v320, %v319
      %v342 = vpack.c.b16 %v322, %v321
      %v343 = vpack.c.b16 %v324, %v323
      %v344 = vpack.c.b16 %v326, %v325
      %v345 = vpack.c.b16 %v328, %v327
      %v346 = vpack.c.b16 %v330, %v329
      %vm347 = vcmask 64512
      %v349 = vsel %vm347, %v331, 0
      %v352 = vsel %vm347, %v332, 0
      %v355 = vsel %vm347, %v333, 0
      %v358 = vsel %vm347, %v334, 0
      %v361 = vsel %vm347, %v335, 0
      %v364 = vsel %vm347, %v336, 0
      %v367 = vsel %vm347, %v337, 0
      %v370 = vsel %vm347, %v338, 0
      %v373 = vsel %vm347, %v339, 0
      %v376 = vsel %vm347, %v340, 0
      %v379 = vsel %vm347, %v341, 0
      %v382 = vsel %vm347, %v342, 0
      %v385 = vsel %vm347, %v343, 0
      %v388 = vsel %vm347, %v344, 0
      %v391 = vsel %vm347, %v345, 0
      %v394 = vsel %vm347, %v346, 0
      %vm396 = vcmask 1043456
      %v398 = vsel %vm396, %v259, 0
      %400 = vmatprep.subr.bf16.mxu0 0
      %401 = vmatpush1.bf16.msra.mxu0 %v398
      %402 = vmatprep.subr.bf16.mxu0 0
      %403 = vmatpush1.bf16.msra.mxu0 0
      %404 = vmatprep.subr.bf16.mxu0 0
      %405 = vmatpush1.bf16.msra.mxu0 0
      %406 = vmatprep.subr.bf16.mxu0 0
      %407 = vmatpush1.bf16.msra.mxu0 0
      %408 = vmatprep.subr.bf16.mxu0 0
      %409 = vmatpush1.bf16.msra.mxu0 0
      %410 = vmatprep.subr.bf16.mxu0 0
      %411 = vmatpush1.bf16.msra.mxu0 0
      %412 = vmatprep.subr.bf16.mxu0 0
      %413 = vmatpush1.bf16.msra.mxu0 0
      %414 = vmatprep.subr.bf16.mxu0 0
      %415 = vmatpush1.bf16.msra.mxu0 0
      %416 = vmatprep.subr.bf16.mxu0 0
      %417 = vmatpush1.bf16.msra.mxu0 0
      %418 = vmatprep.subr.bf16.mxu0 0
      %419 = vmatpush1.bf16.msra.mxu0 0
      %420 = vmatprep.subr.bf16.mxu0 0
      %421 = vmatpush1.bf16.msra.mxu0 0
      %422 = vmatprep.subr.bf16.mxu0 0
      %423 = vmatpush1.bf16.msra.mxu0 0
      %424 = vmatprep.subr.bf16.mxu0 0
      %425 = vmatpush1.bf16.msra.mxu0 0
      %426 = vmatprep.subr.bf16.mxu0 0
      %427 = vmatpush1.bf16.msra.mxu0 0
      %428 = vmatprep.subr.bf16.mxu0 0
      %429 = vmatpush1.bf16.msra.mxu0 0
      %430 = vmatprep.subr.bf16.mxu0 0
      %431 = vmatpush1.bf16.msra.mxu0 0
      %432 = vmatprep.mubr.bf16.mxu0 0
      %433 = vmatmul.mubr.bf16.gmra.mrb[0].mxu0 %v349
      %v434 = vpop.f32.mrb[0].mxu0
      %v435 = vadd.f32 %v265, %v434
      %v436 = vpop.f32.mrb[0].mxu0
      %v437 = vpop.f32.mrb[0].mxu0
      %v438 = vadd.f32 %v265, %v437
      %v439 = vpop.f32.mrb[0].mxu0
      %440 = vmatprep.mubr.bf16.mxu0 0
      %441 = vmatmul.mubr.bf16.gmra.mrb[0].mxu0 %v352
      %v442 = vpop.f32.mrb[0].mxu0
      %v443 = vadd.f32 %v265, %v442
      %v444 = vpop.f32.mrb[0].mxu0
      %v445 = vpop.f32.mrb[0].mxu0
      %v446 = vadd.f32 %v265, %v445
      %v447 = vpop.f32.mrb[0].mxu0
      %448 = vmatprep.mubr.bf16.mxu0 0
      %449 = vmatmul.mubr.bf16.gmra.mrb[0].mxu0 %v355
      %v450 = vpop.f32.mrb[0].mxu0
      %v451 = vadd.f32 %v265, %v450
      %v452 = vpop.f32.mrb[0].mxu0
      %v453 = vpop.f32.mrb[0].mxu0
      %v454 = vadd.f32 %v265, %v453
      %v455 = vpop.f32.mrb[0].mxu0
      %456 = vmatprep.mubr.bf16.mxu0 0
      %457 = vmatmul.mubr.bf16.gmra.mrb[0].mxu0 %v358
      %v458 = vpop.f32.mrb[0].mxu0
      %v459 = vadd.f32 %v265, %v458
      %v460 = vpop.f32.mrb[0].mxu0
      %v461 = vpop.f32.mrb[0].mxu0
      %v462 = vadd.f32 %v265, %v461
      %v463 = vpop.f32.mrb[0].mxu0
      %464 = vmatprep.mubr.bf16.mxu0 0
      %465 = vmatmul.mubr.bf16.gmra.mrb[0].mxu0 %v361
      %v466 = vpop.f32.mrb[0].mxu0
      %v467 = vadd.f32 %v265, %v466
      %v468 = vpop.f32.mrb[0].mxu0
      %v469 = vpop.f32.mrb[0].mxu0
      %v470 = vadd.f32 %v265, %v469
      %v471 = vpop.f32.mrb[0].mxu0
      %472 = vmatprep.mubr.bf16.mxu0 0
      %473 = vmatmul.mubr.bf16.gmra.mrb[0].mxu0 %v364
      %v474 = vpop.f32.mrb[0].mxu0
      %v475 = vadd.f32 %v265, %v474
      %v476 = vpop.f32.mrb[0].mxu0
      %v477 = vpop.f32.mrb[0].mxu0
      %v478 = vadd.f32 %v265, %v477
      %v479 = vpop.f32.mrb[0].mxu0
      %480 = vmatprep.mubr.bf16.mxu0 0
      %481 = vmatmul.mubr.bf16.gmra.mrb[0].mxu0 %v367
      %v482 = vpop.f32.mrb[0].mxu0
      %v483 = vadd.f32 %v265, %v482
      %v484 = vpop.f32.mrb[0].mxu0
      %v485 = vpop.f32.mrb[0].mxu0
      %v486 = vadd.f32 %v265, %v485
      %v487 = vpop.f32.mrb[0].mxu0
      %488 = vmatprep.mubr.bf16.mxu0 0
      %489 = vmatmul.mubr.bf16.gmra.mrb[0].mxu0 %v370
      %v490 = vpop.f32.mrb[0].mxu0
      %v491 = vadd.f32 %v265, %v490
      %v492 = vpop.f32.mrb[0].mxu0
      %v493 = vpop.f32.mrb[0].mxu0
      %v494 = vadd.f32 %v265, %v493
      %v495 = vpop.f32.mrb[0].mxu0
      %496 = vmatprep.mubr.bf16.mxu0 0
      %497 = vmatmul.mubr.bf16.gmra.mrb[0].mxu0 %v373
      %v498 = vpop.f32.mrb[0].mxu0
      %v499 = vadd.f32 %v265, %v498
      %v500 = vpop.f32.mrb[0].mxu0
      %v501 = vpop.f32.mrb[0].mxu0
      %v502 = vadd.f32 %v265, %v501
      %v503 = vpop.f32.mrb[0].mxu0
      %504 = vmatprep.mubr.bf16.mxu0 0
      %505 = vmatmul.mubr.bf16.gmra.mrb[0].mxu0 %v376
      %v506 = vpop.f32.mrb[0].mxu0
      %v507 = vadd.f32 %v265, %v506
      %v508 = vpop.f32.mrb[0].mxu0
      %v509 = vpop.f32.mrb[0].mxu0
      %v510 = vadd.f32 %v265, %v509
      %v511 = vpop.f32.mrb[0].mxu0
      %512 = vmatprep.mubr.bf16.mxu0 0
      %513 = vmatmul.mubr.bf16.gmra.mrb[0].mxu0 %v379
      %v514 = vpop.f32.mrb[0].mxu0
      %v515 = vadd.f32 %v265, %v514
      %v516 = vpop.f32.mrb[0].mxu0
      %v517 = vpop.f32.mrb[0].mxu0
      %v518 = vadd.f32 %v265, %v517
      %v519 = vpop.f32.mrb[0].mxu0
      %520 = vmatprep.mubr.bf16.mxu0 0
      %521 = vmatmul.mubr.bf16.gmra.mrb[0].mxu0 %v382
      %v522 = vpop.f32.mrb[0].mxu0
      %v523 = vadd.f32 %v265, %v522
      %v524 = vpop.f32.mrb[0].mxu0
      %v525 = vpop.f32.mrb[0].mxu0
      %v526 = vadd.f32 %v265, %v525
      %v527 = vpop.f32.mrb[0].mxu0
      %528 = vmatprep.mubr.bf16.mxu0 0
      %529 = vmatmul.mubr.bf16.gmra.mrb[0].mxu0 %v385
      %v530 = vpop.f32.mrb[0].mxu0
      %v531 = vadd.f32 %v265, %v530
      %v532 = vpop.f32.mrb[0].mxu0
      %v533 = vpop.f32.mrb[0].mxu0
      %v534 = vadd.f32 %v265, %v533
      %v535 = vpop.f32.mrb[0].mxu0
      %536 = vmatprep.mubr.bf16.mxu0 0
      %537 = vmatmul.mubr.bf16.gmra.mrb[0].mxu0 %v388
      %v538 = vpop.f32.mrb[0].mxu0
      %v539 = vadd.f32 %v265, %v538
      %v540 = vpop.f32.mrb[0].mxu0
      %v541 = vpop.f32.mrb[0].mxu0
      %v542 = vadd.f32 %v265, %v541
      %v543 = vpop.f32.mrb[0].mxu0
      %544 = vmatprep.mubr.bf16.mxu0 0
      %545 = vmatmul.mubr.bf16.gmra.mrb[0].mxu0 %v391
      %v546 = vpop.f32.mrb[0].mxu0
      %v547 = vadd.f32 %v265, %v546
      %v548 = vpop.f32.mrb[0].mxu0
      %v549 = vpop.f32.mrb[0].mxu0
      %v550 = vadd.f32 %v265, %v549
      %v551 = vpop.f32.mrb[0].mxu0
      %552 = vmatprep.mubr.bf16.mxu0 0
      %553 = vmatmul.mubr.bf16.gmra.mrb[0].mxu0 %v394
      %v554 = vpop.f32.mrb[0].mxu0
      %v555 = vadd.f32 %v265, %v554
      %v556 = vpop.f32.mrb[0].mxu0
      %v557 = vpop.f32.mrb[0].mxu0
      %v558 = vadd.f32 %v265, %v557
      %v559 = vpop.f32.mrb[0].mxu0
      %560 = vdwg.mxu0
      %v561 = vmax.f32 %v435, 0.0
      %v562 = vmax.f32 %v438, 0.0
      %v563 = vmax.f32 %v443, 0.0
      %v564 = vmax.f32 %v446, 0.0
      %v565 = vmax.f32 %v451, 0.0
      %v566 = vmax.f32 %v454, 0.0
      %v567 = vmax.f32 %v459, 0.0
      %v568 = vmax.f32 %v462, 0.0
      %v569 = vmax.f32 %v467, 0.0
      %v570 = vmax.f32 %v470, 0.0
      %v571 = vmax.f32 %v475, 0.0
      %v572 = vmax.f32 %v478, 0.0
      %v573 = vmax.f32 %v483, 0.0
      %v574 = vmax.f32 %v486, 0.0
      %v575 = vmax.f32 %v491, 0.0
      %v576 = vmax.f32 %v494, 0.0
      %v577 = vmax.f32 %v499, 0.0
      %v578 = vmax.f32 %v502, 0.0
      %v579 = vmax.f32 %v507, 0.0
      %v580 = vmax.f32 %v510, 0.0
      %v581 = vmax.f32 %v515, 0.0
      %v582 = vmax.f32 %v518, 0.0
      %v583 = vmax.f32 %v523, 0.0
      %v584 = vmax.f32 %v526, 0.0
      %v585 = vmax.f32 %v531, 0.0
      %v586 = vmax.f32 %v534, 0.0
      %v587 = vmax.f32 %v539, 0.0
      %v588 = vmax.f32 %v542, 0.0
      %v589 = vmax.f32 %v547, 0.0
      %v590 = vmax.f32 %v550, 0.0
      %v591 = vmax.f32 %v555, 0.0
      %v592 = vmax.f32 %v558, 0.0
      %v593 = vmin.f32 %v561, 6.0
      %v594 = vmin.f32 %v562, 6.0
      %v595 = vmin.f32 %v563, 6.0
      %v596 = vmin.f32 %v564, 6.0
      %v597 = vmin.f32 %v565, 6.0
      %v598 = vmin.f32 %v566, 6.0
      %v599 = vmin.f32 %v567, 6.0
      %v600 = vmin.f32 %v568, 6.0
      %v601 = vmin.f32 %v569, 6.0
      %v602 = vmin.f32 %v570, 6.0
      %v603 = vmin.f32 %v571, 6.0
      %v604 = vmin.f32 %v572, 6.0
      %v605 = vmin.f32 %v573, 6.0
      %v606 = vmin.f32 %v574, 6.0
      %v607 = vmin.f32 %v575, 6.0
      %v608 = vmin.f32 %v576, 6.0
      %v609 = vmin.f32 %v577, 6.0
      %v610 = vmin.f32 %v578, 6.0
      %v611 = vmin.f32 %v579, 6.0
      %v612 = vmin.f32 %v580, 6.0
      %v613 = vmin.f32 %v581, 6.0
      %v614 = vmin.f32 %v582, 6.0
      %v615 = vmin.f32 %v583, 6.0
      %v616 = vmin.f32 %v584, 6.0
      %v617 = vmin.f32 %v585, 6.0
      %v618 = vmin.f32 %v586, 6.0
      %v619 = vmin.f32 %v587, 6.0
      %v620 = vmin.f32 %v588, 6.0
      %v621 = vmin.f32 %v589, 6.0
      %v622 = vmin.f32 %v590, 6.0
      %v623 = vmin.f32 %v591, 6.0
      %v624 = vmin.f32 %v592, 6.0
      %v625 = vpack.c.bf16 %v594, %v593
      %v626 = vpack.c.bf16 %v596, %v595
      %v627 = vpack.c.bf16 %v598, %v597
      %v628 = vpack.c.bf16 %v600, %v599
      %v629 = vpack.c.bf16 %v602, %v601
      %v630 = vpack.c.bf16 %v604, %v603
      %v631 = vpack.c.bf16 %v606, %v605
      %v632 = vpack.c.bf16 %v608, %v607
      %v633 = vpack.c.bf16 %v610, %v609
      %v634 = vpack.c.bf16 %v612, %v611
      %v635 = vpack.c.bf16 %v614, %v613
      %v636 = vpack.c.bf16 %v616, %v615
      %v637 = vpack.c.bf16 %v618, %v617
      %v638 = vpack.c.bf16 %v620, %v619
      %v639 = vpack.c.bf16 %v622, %v621
      %v640 = vpack.c.bf16 %v624, %v623
      %v657 = vunpack.c.l.b16 %v625
      %v658 = vunpack.c.h.b16 %v625
      %v659 = vunpack.c.l.b16 %v626
      %v660 = vunpack.c.h.b16 %v626
      %v661 = vunpack.c.l.b16 %v627
      %v662 = vunpack.c.h.b16 %v627
      %v663 = vunpack.c.l.b16 %v628
      %v664 = vunpack.c.h.b16 %v628
      %v665 = vunpack.c.l.b16 %v629
      %v666 = vunpack.c.h.b16 %v629
      %v667 = vunpack.c.l.b16 %v630
      %v668 = vunpack.c.h.b16 %v630
      %v669 = vunpack.c.l.b16 %v631
      %v670 = vunpack.c.h.b16 %v631
      %v671 = vunpack.c.l.b16 %v632
      %v672 = vunpack.c.h.b16 %v632
      %v673 = vunpack.c.l.b16 %v633
      %v674 = vunpack.c.h.b16 %v633
      %v675 = vunpack.c.l.b16 %v634
      %v676 = vunpack.c.h.b16 %v634
      %v677 = vunpack.c.l.b16 %v635
      %v678 = vunpack.c.h.b16 %v635
      %v679 = vunpack.c.l.b16 %v636
      %v680 = vunpack.c.h.b16 %v636
      %v681 = vunpack.c.l.b16 %v637
      %v682 = vunpack.c.h.b16 %v637
      %v683 = vunpack.c.l.b16 %v638
      %v684 = vunpack.c.h.b16 %v638
      %v685 = vunpack.c.l.b16 %v639
      %v686 = vunpack.c.h.b16 %v639
      %v687 = vunpack.c.l.b16 %v640
      %v688 = vunpack.c.h.b16 %v640
      %v689 = vpack.c.b16 %v657, %v657
      %v690 = vpack.c.b16 %v658, %v658
      %v691 = vpack.c.b16 %v659, %v659
      %v692 = vpack.c.b16 %v660, %v660
      %v693 = vpack.c.b16 %v661, %v661
      %v694 = vpack.c.b16 %v662, %v662
      %v695 = vpack.c.b16 %v663, %v663
      %v696 = vpack.c.b16 %v664, %v664
      %v697 = vpack.c.b16 %v665, %v665
      %v698 = vpack.c.b16 %v666, %v666
      %v699 = vpack.c.b16 %v667, %v667
      %v700 = vpack.c.b16 %v668, %v668
      %v701 = vpack.c.b16 %v669, %v669
      %v702 = vpack.c.b16 %v670, %v670
      %v703 = vpack.c.b16 %v671, %v671
      %v704 = vpack.c.b16 %v672, %v672
      %v705 = vpack.c.b16 %v673, %v673
      %v706 = vpack.c.b16 %v674, %v674
      %v707 = vpack.c.b16 %v675, %v675
      %v708 = vpack.c.b16 %v676, %v676
      %v709 = vpack.c.b16 %v677, %v677
      %v710 = vpack.c.b16 %v678, %v678
      %v711 = vpack.c.b16 %v679, %v679
      %v712 = vpack.c.b16 %v680, %v680
      %v713 = vpack.c.b16 %v681, %v681
      %v714 = vpack.c.b16 %v682, %v682
      %v715 = vpack.c.b16 %v683, %v683
      %v716 = vpack.c.b16 %v684, %v684
      %v717 = vpack.c.b16 %v685, %v685
      %v718 = vpack.c.b16 %v686, %v686
      %v719 = vpack.c.b16 %v687, %v687
      %v720 = vpack.c.b16 %v688, %v688
      %vm753 = vcmask 388096
      %754 = vst.msk [vmem:[%s224] sm:$0xf] %vm753, %v689
      %755 = vst.msk [vmem:[%s224 + $0x4] sm:$0xf] %vm753, %v690
      %756 = vst.msk [vmem:[%s224 + $0x8] sm:$0xf] %vm753, %v691
      %757 = vst.msk [vmem:[%s224 + $0xc] sm:$0xf] %vm753, %v692
      %758 = vst.msk [vmem:[%s224 + $0x10] sm:$0xf] %vm753, %v693
      %759 = vst.msk [vmem:[%s224 + $0x14] sm:$0xf] %vm753, %v694
      %760 = vst.msk [vmem:[%s224 + $0x18] sm:$0xf] %vm753, %v695
      %761 = vst.msk [vmem:[%s224 + $0x1c] sm:$0xf] %vm753, %v696
      %762 = vst.msk [vmem:[%s224 + $0x20] sm:$0xf] %vm753, %v697
      %763 = vst.msk [vmem:[%s224 + $0x24] sm:$0xf] %vm753, %v698
      %764 = vst.msk [vmem:[%s224 + $0x28] sm:$0xf] %vm753, %v699
      %765 = vst.msk [vmem:[%s224 + $0x2c] sm:$0xf] %vm753, %v700
      %766 = vst.msk [vmem:[%s224 + $0x30] sm:$0xf] %vm753, %v701
      %767 = vst.msk [vmem:[%s224 + $0x34] sm:$0xf] %vm753, %v702
      %768 = vst.msk [vmem:[%s224 + $0x38] sm:$0xf] %vm753, %v703
      %769 = vst.msk [vmem:[%s224 + $0x3c] sm:$0xf] %vm753, %v704
      %770 = vst.msk [vmem:[%s224 + $0x40] sm:$0xf] %vm753, %v705
      %771 = vst.msk [vmem:[%s224 + $0x44] sm:$0xf] %vm753, %v706
      %772 = vst.msk [vmem:[%s224 + $0x48] sm:$0xf] %vm753, %v707
      %773 = vst.msk [vmem:[%s224 + $0x4c] sm:$0xf] %vm753, %v708
      %774 = vst.msk [vmem:[%s224 + $0x50] sm:$0xf] %vm753, %v709
      %775 = vst.msk [vmem:[%s224 + $0x54] sm:$0xf] %vm753, %v710
      %776 = vst.msk [vmem:[%s224 + $0x58] sm:$0xf] %vm753, %v711
      %777 = vst.msk [vmem:[%s224 + $0x5c] sm:$0xf] %vm753, %v712
      %778 = vst.msk [vmem:[%s224 + $0x60] sm:$0xf] %vm753, %v713
      %779 = vst.msk [vmem:[%s224 + $0x64] sm:$0xf] %vm753, %v714
      %780 = vst.msk [vmem:[%s224 + $0x68] sm:$0xf] %vm753, %v715
      %781 = vst.msk [vmem:[%s224 + $0x6c] sm:$0xf] %vm753, %v716
      %782 = vst.msk [vmem:[%s224 + $0x70] sm:$0xf] %vm753, %v717
      %783 = vst.msk [vmem:[%s224 + $0x74] sm:$0xf] %vm753, %v718
      %784 = vst.msk [vmem:[%s224 + $0x78] sm:$0xf] %vm753, %v719
      %785 = vst.msk [vmem:[%s224 + $0x7c] sm:$0xf] %vm753, %v720
      %vm786 = vcmask 392192
      %v787 = vsel %vm786, %v593, inf
      %v788 = vsel %vm786, %v594, inf
      %v789 = vsel %vm786, %v595, inf
      %v790 = vsel %vm786, %v596, inf
      %v791 = vsel %vm786, %v597, inf
      %v792 = vmin.f32 %v787, %v791
      %v793 = vsel %vm786, %v598, inf
      %v794 = vmin.f32 %v788, %v793
      %v795 = vsel %vm786, %v599, inf
      %v796 = vmin.f32 %v789, %v795
      %v797 = vsel %vm786, %v600, inf
      %v798 = vmin.f32 %v790, %v797
      %v799 = vsel %vm786, %v601, inf
      %v800 = vmin.f32 %v792, %v799
      %v801 = vsel %vm786, %v602, inf
      %v802 = vmin.f32 %v794, %v801
      %v803 = vsel %vm786, %v603, inf
      %v804 = vmin.f32 %v796, %v803
      %v805 = vsel %vm786, %v604, inf
      %v806 = vmin.f32 %v798, %v805
      %v807 = vsel %vm786, %v605, inf
      %v808 = vmin.f32 %v800, %v807
      %v809 = vsel %vm786, %v606, inf
      %v810 = vmin.f32 %v802, %v809
      %v811 = vsel %vm786, %v607, inf
      %v812 = vmin.f32 %v804, %v811
      %v813 = vsel %vm786, %v608, inf
      %v814 = vmin.f32 %v806, %v813
      %v815 = vsel %vm786, %v609, inf
      %v816 = vmin.f32 %v808, %v815
      %v817 = vsel %vm786, %v610, inf
      %v818 = vmin.f32 %v810, %v817
      %v819 = vsel %vm786, %v611, inf
      %v820 = vmin.f32 %v812, %v819
      %v821 = vsel %vm786, %v612, inf
      %v822 = vmin.f32 %v814, %v821
      %v823 = vsel %vm786, %v613, inf
      %v824 = vmin.f32 %v816, %v823
      %v825 = vsel %vm786, %v614, inf
      %v826 = vmin.f32 %v818, %v825
      %v827 = vsel %vm786, %v615, inf
      %v828 = vmin.f32 %v820, %v827
      %v829 = vsel %vm786, %v616, inf
      %v830 = vmin.f32 %v822, %v829
      %v831 = vsel %vm786, %v617, inf
      %v832 = vmin.f32 %v824, %v831
      %v833 = vsel %vm786, %v618, inf
      %v834 = vmin.f32 %v826, %v833
      %v835 = vsel %vm786, %v619, inf
      %v836 = vmin.f32 %v828, %v835
      %v837 = vsel %vm786, %v620, inf
      %v838 = vmin.f32 %v830, %v837
      %v839 = vsel %vm786, %v621, inf
      %v840 = vmin.f32 %v832, %v839
      %v841 = vsel %vm786, %v622, inf
      %v842 = vmin.f32 %v834, %v841
      %v843 = vsel %vm786, %v623, inf
      %v844 = vmin.f32 %v836, %v843
      %v845 = vsel %vm786, %v624, inf
      %v846 = vmin.f32 %v838, %v845
      %v847 = vmin.f32 %v840, %v842
      %v848 = vmin.f32 %v844, %v846
      %v849 = vmin.f32 %v847, %v848
      %v850 = vrot.slane %v849, 4
      %v851 = vmin.f32 %v849, %v850
      %v852 = vrot.slane %v851, 2
      %v853 = vmin.f32 %v851, %v852
      %v854 = vrot.slane %v853, 1
      %v855 = vmin.f32 %v853, %v854
      %v856 = vsel %vm786, %v593, -inf
      %v857 = vsel %vm786, %v594, -inf
      %v858 = vsel %vm786, %v595, -inf
      %v859 = vsel %vm786, %v596, -inf
      %v860 = vsel %vm786, %v597, -inf
      %v861 = vmax.f32 %v856, %v860
      %v862 = vsel %vm786, %v598, -inf
      %v863 = vmax.f32 %v857, %v862
      %v864 = vsel %vm786, %v599, -inf
      %v865 = vmax.f32 %v858, %v864
      %v866 = vsel %vm786, %v600, -inf
      %v867 = vmax.f32 %v859, %v866
      %v868 = vsel %vm786, %v601, -inf
      %v869 = vmax.f32 %v861, %v868
      %v870 = vsel %vm786, %v602, -inf
      %v871 = vmax.f32 %v863, %v870
      %v872 = vsel %vm786, %v603, -inf
      %v873 = vmax.f32 %v865, %v872
      %v874 = vsel %vm786, %v604, -inf
      %v875 = vmax.f32 %v867, %v874
      %v876 = vsel %vm786, %v605, -inf
      %v877 = vmax.f32 %v869, %v876
      %v878 = vsel %vm786, %v606, -inf
      %v879 = vmax.f32 %v871, %v878
      %v880 = vsel %vm786, %v607, -inf
      %v881 = vmax.f32 %v873, %v880
      %v882 = vsel %vm786, %v608, -inf
      %v883 = vmax.f32 %v875, %v882
      %v884 = vsel %vm786, %v609, -inf
      %v885 = vmax.f32 %v877, %v884
      %v886 = vsel %vm786, %v610, -inf
      %v887 = vmax.f32 %v879, %v886
      %v888 = vsel %vm786, %v611, -inf
      %v889 = vmax.f32 %v881, %v888
      %v890 = vsel %vm786, %v612, -inf
      %v891 = vmax.f32 %v883, %v890
      %v892 = vsel %vm786, %v613, -inf
      %v893 = vmax.f32 %v885, %v892
      %v894 = vsel %vm786, %v614, -inf
      %v895 = vmax.f32 %v887, %v894
      %v896 = vsel %vm786, %v615, -inf
      %v897 = vmax.f32 %v889, %v896
      %v898 = vsel %vm786, %v616, -inf
      %v899 = vmax.f32 %v891, %v898
      %v900 = vsel %vm786, %v617, -inf
      %v901 = vmax.f32 %v893, %v900
      %v902 = vsel %vm786, %v618, -inf
      %v903 = vmax.f32 %v895, %v902
      %v904 = vsel %vm786, %v619, -inf
      %v905 = vmax.f32 %v897, %v904
      %v906 = vsel %vm786, %v620, -inf
      %v907 = vmax.f32 %v899, %v906
      %v908 = vsel %vm786, %v621, -inf
      %v909 = vmax.f32 %v901, %v908
      %v910 = vsel %vm786, %v622, -inf
      %v911 = vmax.f32 %v903, %v910
      %v912 = vsel %vm786, %v623, -inf
      %v913 = vmax.f32 %v905, %v912
      %v914 = vsel %vm786, %v624, -inf
      %v915 = vmax.f32 %v907, %v914
      %v916 = vmax.f32 %v909, %v911
      %v917 = vmax.f32 %v913, %v915
      %v918 = vmax.f32 %v916, %v917
      %v919 = vrot.slane %v918, 4
      %v920 = vmax.f32 %v918, %v919
      %v921 = vrot.slane %v920, 2
      %v922 = vmax.f32 %v920, %v921
      %v923 = vrot.slane %v922, 1
      %v924 = vmax.f32 %v922, %v923
      %p925 = scmp.eq.s32.totalorder %s17, 0
      // Predicated region
      $region37: #{inverted_residual_forward.5} parent=35 // pred_check
        %p926 = pneg %p925
      $region38: #{inverted_residual_forward.5} parent=35 // pred_check_branch
        %928 = sbr.rel (%p926) target = $region40
      $region39: #{inverted_residual_forward.5} parent=35 // pred_region
        %vm929 = vcmask 385024
        %930 = vst.msk [vmem:[#allocation2] sm:$0x1] %vm929, %v855
        %931 = vst.msk [vmem:[#allocation2 + $0x1] sm:$0x1] %vm929, %v924
      $region40: #{inverted_residual_forward.5} parent=35 // pred_fallthru
        _
      %p932 = scmp.ne.s32.totalorder %s17, 0
      // Predicated region
      $region41: #{inverted_residual_forward.5} parent=35 // pred_check
        %p933 = pneg %p932
      $region42: #{inverted_residual_forward.5} parent=35 // pred_check_branch
        %935 = sbr.rel (%p933) target = $region44
      $region43: #{inverted_residual_forward.5} parent=35 // pred_region
        %v936 = vld [vmem:[#allocation2] sm:$0x1]
        %v937 = vmin.f32 %v936, %v855
        %vm938 = vcmask 385024
        %939 = vst.msk [vmem:[#allocation2] sm:$0x1] %vm938, %v937
        %v940 = vld [vmem:[#allocation2 + $0x1] sm:$0x1]
        %v941 = vmax.f32 %v940, %v924
        %942 = vst.msk [vmem:[#allocation2 + $0x1] sm:$0x1] %vm938, %v941
      $region44: #{inverted_residual_forward.5} parent=35 // pred_fallthru
        _
      %p943 = scmp.eq.s32.totalorder %s17, 1
      // Predicated region
      $region45: #{inverted_residual_forward.5} parent=35 // pred_check
        %p944 = pneg %p943
      $region46: #{inverted_residual_forward.5} parent=35 // pred_check_branch
        %946 = sbr.rel (%p944) target = $region48
      $region47: #{inverted_residual_forward.5} parent=35 // pred_region
        %v947 = vld [vmem:[#allocation2] sm:$0x1]
        %vm948 = vcmask 385024
        %v949 = vsel %vm948, %v947, inf
        %950 = vmin.xlane.f32.xlu0 %v949
        %v951 = vpop.xlane.xlu0 %950
        %v952 = vmin.f32 %v951, 0.0
        %v953 = vld [vmem:[#allocation2 + $0x1] sm:$0x1]
        %v954 = vsel %vm948, %v953, -inf
        %955 = vmax.xlane.f32.xlu0 %v954
        %v956 = vpop.xlane.xlu0 %955
        %v957 = vmax.f32 %v956, 0.0
        %v958 = vsub.f32 %v957, %v952
        %v959 = vmul.f32 %v958, 0.003921569
        %v960 = vmax.f32 %v959, 1e-08
        %v961 = vsub.f32 0.0, %v952
        %v962 = vrcp.pop %v960
        %v963 = vmul.f32 %v961, %v962
        %v964 = vround.ne.pseudo %v963
        %v965 = vmul.f32 1.0, %v962
        %966 = vst [vmem:[%s5] sm:$0x1] %v965
        %967 = vst [vmem:[%s5 + $0x1] sm:$0x1] %v960
        %968 = vst [vmem:[%s5 + $0x2] sm:$0x1] %v964
      $region48: #{inverted_residual_forward.5} parent=35 // pred_fallthru
        _
      %s969 = smul.u32 32, %s17
      %p970 = scmp.lt.s32.totalorder %s969, 63
      %s971 = scalar_select %p970, %s969, 63
      %s972 = smul.addr %s971, 4
      %s973 = scalar_lea.vmem %s4, %s972
      // Predicated region
      $region49: #{inverted_residual_forward.5} parent=35 // pred_check
        %p974 = pneg %p124
      $region50: #{inverted_residual_forward.5} parent=35 // pred_check_branch
        %976 = sbr.rel (%p974) target = $region52
      $region51: #{inverted_residual_forward.5} parent=35 // pred_region
        %s977 = smul.u32 32, %s17
      $region52: #{inverted_residual_forward.5} parent=35 // pred_fallthru
        _
      // Predicated region
      $region53: #{inverted_residual_forward.5} parent=35 // pred_check
        %p978 = pneg %p145
      $region54: #{inverted_residual_forward.5} parent=35 // pred_check_branch
        %980 = sbr.rel (%p978) target = $region56
      $region55: #{inverted_residual_forward.5} parent=35 // pred_region
        _
      $region56: #{inverted_residual_forward.5} parent=35 // pred_fallthru
        _
      // Predicated region
      $region57: #{inverted_residual_forward.5} parent=35 // pred_check
        %p981 = pneg %p145
      $region58: #{inverted_residual_forward.5} parent=35 // pred_check_branch
        %983 = sbr.rel (%p981) target = $region60
      $region59: #{inverted_residual_forward.5} parent=35 // pred_region
        _
      $region60: #{inverted_residual_forward.5} parent=35 // pred_fallthru
        _
    $region36: #{inverted_residual_forward.5} parent=5 // pred_fallthru
      _
    %p984 = scmp.le.s32.totalorder 2, %s12
    // Predicated region
    $region61: #{inverted_residual_forward.5} parent=5 // pred_check
      %p985 = pneg %p984
    $region62: #{inverted_residual_forward.5} parent=5 // pred_check_branch
      %987 = sbr.rel (%p985) target = $region64
    $region63: #{inverted_residual_forward.5} parent=5 // pred_region
      %s988 = ssub.s32 %s12, 2
      // Predicated region
      $region65: #{inverted_residual_forward.5} parent=63 // pred_check
        %p989 = pneg %p130
      $region66: #{inverted_residual_forward.5} parent=63 // pred_check_branch
        %991 = sbr.rel (%p989) target = $region68
      $region67: #{inverted_residual_forward.5} parent=63 // pred_region
        %s992 = smul.u32 32, %s18
        %p993 = scmp.lt.s32.totalorder %s992, 63
        %s994 = scalar_select %p993, %s992, 63
        %s995 = smul.addr %s994, 4
        %s996 = scalar_lea.vmem %s4, %s995
      $region68: #{inverted_residual_forward.5} parent=63 // pred_fallthru
        _
    $region64: #{inverted_residual_forward.5} parent=5 // pred_fallthru
      _
  $region6: #{inverted_residual_forward.5} parent=0 // loop_footer
    %s16 = sadd.s32 1, %s12
  $region7: #{inverted_residual_forward.5} parent=0 // loop_footer_branch
    %11 = sbr.rel target = $region3
  $region8: #{inverted_residual_forward.5} parent=0 // loop_exit
    _

// kernel: inverted_residual_forward.8
$region0: #{inverted_residual_forward.8}
  #allocation0 [shape = 'u32[]', space=smem, size = 0x4, offset = 0x4, fixed_abs, tag = 'smem constant byte address 0x4 - core index']
  #allocation1 [shape = 'u32[144,128]{1,0:T(1,128)}', space=vmem, size = 0x12000, scoped, tag = 'internal scratch']
  #allocation2 [shape = 'f32[2,128]{1,0:T(2,128)}', space=vmem, size = 0x400, scoped, tag = 'scratch operand']
  %s0 = inlined_call_operand.vmem [shape: f32[3,128], index: 0, kind: input, shape index: {}]
  %s1 = inlined_call_operand.vmem [shape: bf16[32,128], index: 1, kind: input, shape index: {}]
  %s2 = inlined_call_operand.vmem [shape: bf16[32,128], index: 2, kind: input, shape index: {}]
  %s3 = inlined_call_operand.vmem [shape: f32[32,128], index: 3, kind: output, shape index: {0}]
  %s4 = inlined_call_operand.vmem [shape: f32[3,128], index: 4, kind: output, shape index: {1}]
  %5 = xla_tuple %s3, %s4
  %s6 = sld [smem:[#allocation0]]
  $region65: #{inverted_residual_forward.8} parent=0
    _
  %s8 = ssub.s32 1, %s6
  %s9 = scalar_select 0, %s8, %s6
  loop: start=0, step=1, limit=4
  $region2: #{inverted_residual_forward.8} parent=0 // loop_pre_header
    _
  $region3: #{inverted_residual_forward.8} parent=0 // loop_header
    %s11 = sphi 0, %s15
    %p12 = scmp.ge.s32.totalorder %s11, 4
    %s19 = sphi 0, %s19
    %s21 = sphi 0, %s19
    %s22 = sphi 0, %s21
    %s36 = sphi 0, %s22
    %s42 = sphi 0, %s44
    %s45 = sphi 0, %s42
    %s46 = sphi 0, %s45
    %s62 = sphi 0, %s46
    %s68 = sphi 0, %s70
    %s71 = sphi 0, %s68
    %s72 = sphi 0, %s71
    %s88 = sphi 0, %s72
    %s94 = sphi 0, %s96
    %s97 = sphi 0, %s94
    %s98 = sphi 0, %s97
    %s114 = sphi 0, %s98
    %s118 = sphi 0, %s118
    %s120 = sphi 0, %s118
    %s121 = sphi 0, %s120
    %s135 = sphi 0, %s121
  $region4: #{inverted_residual_forward.8} parent=0 // loop_header_branch
    %14 = sbr.rel (%p12) target = $region8
  $region5: #{inverted_residual_forward.8} parent=0 // loop_body
    %s16 = ssub.s32 %s11, 1
    %s17 = ssub.s32 %s11, 2
    %s18 = sadd.s32 %s11, 1
    %s20 = sadd.s32 %s19, 1
    %p23 = scmp.eq.s32.totalorder %s11, 1
    %p24 = scmp.ne.s32.totalorder %s19, %s21
    %p25 = scmp.eq.s32.totalorder %s11, 0
    %p26 = por %p24, %p25
    %p27 = scmp.ne.s32.totalorder %s19, %s21
    %p28 = scmp.eq.s32.totalorder %s16, 1
    %p29 = por %p27, %p28
    %p30 = scmp.ne.s32.totalorder %s21, %s22
    %p31 = scmp.eq.s32.totalorder %s16, 0
    %p32 = por %p30, %p31
    %p33 = scmp.ne.s32.totalorder %s21, %s22
    %p34 = scmp.eq.s32.totalorder %s17, 1
    %p35 = por %p33, %p34
    %p37 = scmp.ne.s32.totalorder %s22, %s36
    %p38 = scmp.eq.s32.totalorder %s17, 0
    %p39 = por %p37, %p38
    %s40 = ssub.s32 %s11, %s18
    %p41 = scmp.eq.s32.totalorder %s40, 0
    %s43 = sadd.s32 %s42, 1
    %s44 = scalar_select %p41, %s42, %s43
    %p47 = pneg %p41
    %p48 = scmp.eq.s32.totalorder %s11, 1
    %p49 = por %p47, %p48
    %p50 = scmp.ne.s32.totalorder %s42, %s45
    %p51 = scmp.eq.s32.totalorder %s11, 0
    %p52 = por %p50, %p51
    %p53 = scmp.ne.s32.totalorder %s42, %s45
    %p54 = scmp.eq.s32.totalorder %s16, 1
    %p55 = por %p53, %p54
    %p56 = scmp.ne.s32.totalorder %s45, %s46
    %p57 = scmp.eq.s32.totalorder %s16, 0
    %p58 = por %p56, %p57
    %p59 = scmp.ne.s32.totalorder %s45, %s46
    %p60 = scmp.eq.s32.totalorder %s17, 1
    %p61 = por %p59, %p60
    %p63 = scmp.ne.s32.totalorder %s46, %s62
    %p64 = scmp.eq.s32.totalorder %s17, 0
    %p65 = por %p63, %p64
    %s66 = ssub.s32 %s11, %s18
    %p67 = scmp.eq.s32.totalorder %s66, 0
    %s69 = sadd.s32 %s68, 1
    %s70 = scalar_select %p67, %s68, %s69
    %p73 = pneg %p67
    %p74 = scmp.eq.s32.totalorder %s11, 1
    %p75 = por %p73, %p74
    %p76 = scmp.ne.s32.totalorder %s68, %s71
    %p77 = scmp.eq.s32.totalorder %s11, 0
    %p78 = por %p76, %p77
    %p79 = scmp.ne.s32.totalorder %s68, %s71
    %p80 = scmp.eq.s32.totalorder %s16, 1
    %p81 = por %p79, %p80
    %p82 = scmp.ne.s32.totalorder %s71, %s72
    %p83 = scmp.eq.s32.totalorder %s16, 0
    %p84 = por %p82, %p83
    %p85 = scmp.ne.s32.totalorder %s71, %s72
    %p86 = scmp.eq.s32.totalorder %s17, 1
    %p87 = por %p85, %p86
    %p89 = scmp.ne.s32.totalorder %s72, %s88
    %p90 = scmp.eq.s32.totalorder %s17, 0
    %p91 = por %p89, %p90
    %s92 = ssub.s32 %s11, %s18
    %p93 = scmp.eq.s32.totalorder %s92, 0
    %s95 = sadd.s32 %s94, 1
    %s96 = scalar_select %p93, %s94, %s95
    %p99 = pneg %p93
    %p100 = scmp.eq.s32.totalorder %s11, 1
    %p101 = por %p99, %p100
    %p102 = scmp.ne.s32.totalorder %s94, %s97
    %p103 = scmp.eq.s32.totalorder %s11, 0
    %p104 = por %p102, %p103
    %p105 = scmp.ne.s32.totalorder %s94, %s97
    %p106 = scmp.eq.s32.totalorder %s16, 1
    %p107 = por %p105, %p106
    %p108 = scmp.ne.s32.totalorder %s97, %s98
    %p109 = scmp.eq.s32.totalorder %s16, 0
    %p110 = por %p108, %p109
    %p111 = scmp.ne.s32.totalorder %s97, %s98
    %p112 = scmp.eq.s32.totalorder %s17, 1
    %p113 = por %p111, %p112
    %p115 = scmp.ne.s32.totalorder %s98, %s114
    %p116 = scmp.eq.s32.totalorder %s17, 0
    %p117 = por %p115, %p116
    %s119 = sadd.s32 %s118, 1
    %p122 = scmp.eq.s32.totalorder %s11, 1
    %p123 = scmp.ne.s32.totalorder %s118, %s120
    %p124 = scmp.eq.s32.totalorder %s11, 0
    %p125 = por %p123, %p124
    %p126 = scmp.ne.s32.totalorder %s118, %s120
    %p127 = scmp.eq.s32.totalorder %s16, 1
    %p128 = por %p126, %p127
    %p129 = scmp.ne.s32.totalorder %s120, %s121
    %p130 = scmp.eq.s32.totalorder %s16, 0
    %p131 = por %p129, %p130
    %p132 = scmp.ne.s32.totalorder %s120, %s121
    %p133 = scmp.eq.s32.totalorder %s17, 1
    %p134 = por %p132, %p133
    %p136 = scmp.ne.s32.totalorder %s121, %s135
    %p137 = scmp.eq.s32.totalorder %s17, 0
    %p138 = por %p136, %p137
    %p139 = scmp.le.s32.totalorder 1, %s11
    %p140 = scmp.lt.s32.totalorder %s11, 3
    %p141 = pnand %p139, %p140
    %p142 = pneg %p141
    // Predicated region
    $region9: #{inverted_residual_forward.8} parent=5 // pred_check
      _
    $region10: #{inverted_residual_forward.8} parent=5 // pred_check_branch
      %144 = sbr.rel (%p141) target = $region12
    $region11: #{inverted_residual_forward.8} parent=5 // pred_region
      %s145 = ssub.s32 %s11, 1
      // Predicated region
      $region13: #{inverted_residual_forward.8} parent=11 // pred_check
        %p146 = pneg %p32
      $region14: #{inverted_residual_forward.8} parent=11 // pred_check_branch
        %148 = sbr.rel (%p146) target = $region16
      $region15: #{inverted_residual_forward.8} parent=11 // pred_region
        _
      $region16: #{inverted_residual_forward.8} parent=11 // pred_fallthru
        _
    $region12: #{inverted_residual_forward.8} parent=5 // pred_fallthru
      _
    %p149 = scmp.lt.s32.totalorder %s11, 2
    // Predicated region
    $region17: #{inverted_residual_forward.8} parent=5 // pred_check
      %p150 = pneg %p149
    $region18: #{inverted_residual_forward.8} parent=5 // pred_check_branch
      %152 = sbr.rel (%p150) target = $region20
    $region19: #{inverted_residual_forward.8} parent=5 // pred_region
      // Predicated region
      $region21: #{inverted_residual_forward.8} parent=19 // pred_check
        %p153 = pneg %p52
      $region22: #{inverted_residual_forward.8} parent=19 // pred_check_branch
        %155 = sbr.rel (%p153) target = $region24
      $region23: #{inverted_residual_forward.8} parent=19 // pred_region
        %s156 = smul.u32 2, %s11
        %p157 = scmp.lt.s32.totalorder %s156, 3
        %s158 = scalar_select %p157, %s156, 3
        %s159 = smul.addr %s158, 4
        %s160 = scalar_lea.vmem %s1, %s159
        %s161 = smul.u32 2, %s11
      $region24: #{inverted_residual_forward.8} parent=19 // pred_fallthru
        _
      // Predicated region
      $region25: #{inverted_residual_forward.8} parent=19 // pred_check
        %p162 = pneg %p78
      $region26: #{inverted_residual_forward.8} parent=19 // pred_check_branch
        %164 = sbr.rel (%p162) target = $region28
      $region27: #{inverted_residual_forward.8} parent=19 // pred_region
        %s165 = smul.u32 2, %s11
        %p166 = scmp.lt.s32.totalorder %s165, 3
        %s167 = scalar_select %p166, %s165, 3
        %s168 = smul.addr %s167, 4
        %s169 = scalar_lea.vmem %s2, %s168
        %s170 = smul.u32 2, %s11
      $region28: #{inverted_residual_forward.8} parent=19 // pred_fallthru
        _
    $region20: #{inverted_residual_forward.8} parent=5 // pred_fallthru
      _
    %p171 = scmp.le.s32.totalorder 1, %s11
    %p172 = scmp.lt.s32.totalorder %s11, 3
    %p173 = pnand %p171, %p172
    %p174 = pneg %p173
    // Predicated region
    $region29: #{inverted_residual_forward.8} parent=5 // pred_check
      _
    $region30: #{inverted_residual_forward.8} parent=5 // pred_check_branch
      %176 = sbr.rel (%p173) target = $region32
    $region31: #{inverted_residual_forward.8} parent=5 // pred_region
      %s177 = ssub.s32 %s11, 1
      %p178 = pneg %p32
      %p179 = pneg %p29
      %s180 = smul.u32 2, %s16
      %p181 = scmp.lt.s32.totalorder %s180, 3
      %s182 = scalar_select %p181, %s180, 3
      %s183 = smul.addr %s182, 4
      %s184 = scalar_lea.vmem %s1, %s183
      %p185 = pneg %p58
      %p186 = pneg %p55
      %s187 = smul.u32 2, %s16
      %p188 = scmp.lt.s32.totalorder %s187, 3
      %s189 = scalar_select %p188, %s187, 3
      %s190 = smul.addr %s189, 4
      %s191 = scalar_lea.vmem %s2, %s190
      %p192 = pneg %p84
      %p193 = pneg %p81
      %p194 = pneg %p110
      %p195 = pneg %p107
      %s196 = smul.u32 2, %s16
      %p197 = scmp.lt.s32.totalorder %s196, 3
      %s198 = scalar_select %p197, %s196, 3
      %s199 = smul.addr %s198, 8
      %s200 = scalar_lea.vmem %s3, %s199
      %p201 = pneg %p131
      %p202 = pneg %p128
      %s203 = smul.u32 2, %s16
      %p204 = scmp.lt.s32.totalorder %s203, 3
      %s205 = scalar_select %p204, %s203, 3
      %s206 = smul.addr %s205, 4
      %s207 = scalar_lea.vmem %s1, %s206
      %s208 = smul.u32 2, %s16
      %s209 = smul.u32 2, %s16
      %p210 = scmp.lt.s32.totalorder %s209, 3
      %s211 = scalar_select %p210, %s209, 3
      %s212 = smul.addr %s211, 4
      %s213 = scalar_lea.vmem %s2, %s212
      %s214 = smul.u32 2, %s16
      %s215 = smul.u32 2, %s16
      %p216 = scmp.lt.s32.totalorder %s215, 3
      %s217 = scalar_select %p216, %s215, 3
      %s218 = smul.addr %s217, 8
      %s219 = scalar_lea.vmem %s3, %s218
      %s220 = smul.u32 2, %s16
      %v221 = vld [vmem:[%s0] sm:$0x1]
      %v222 = vld [vmem:[%s0 + $0x1] sm:$0x1]
      %v223 = vld [vmem:[%s0 + $0x2] sm:$0x1]
      %v224 = vld [vmem:[%s213] sm:$0xf]
      %v225 = vld [vmem:[%s213 + $0x4] sm:$0xf]
      %v226 = vunpack.c.l.bf16 %v224
      %v227 = vunpack.c.l.bf16 %v225
      %s229 = vtos %v221
      %v230 = vstv %s229
      %v232 = vmul.f32 %v226, %v230
      %v233 = vmul.f32 %v227, %v230
      %v234 = vround.ne.pseudo %v232
      %v235 = vround.ne.pseudo %v233
      %s237 = vtos %v223
      %v238 = vstv %s237
      %v240 = vadd.f32 %v234, %v238
      %v241 = vadd.f32 %v235, %v238
      %v242 = vmax.f32 %v240, 0.0
      %v243 = vmax.f32 %v241, 0.0
      %v244 = vmin.f32 %v242, 255.0
      %v245 = vmin.f32 %v243, 255.0
      %v246 = vsub.f32 %v244, %v238
      %v247 = vsub.f32 %v245, %v238
      %s249 = vtos %v222
      %v250 = vstv %s249
      %v252 = vmul.f32 %v246, %v250
      %v253 = vmul.f32 %v247, %v250
      %v254 = vld [vmem:[%s207] sm:$0xf]
      %v255 = vld [vmem:[%s207 + $0x4] sm:$0xf]
      %v256 = vunpack.c.l.bf16 %v254
      %v257 = vunpack.c.l.bf16 %v255
      %v258 = vadd.f32 %v256, %v252
      %v259 = vadd.f32 %v257, %v253
      %260 = vst [vmem:[%s219] sm:$0xff] %v258
      %261 = vst [vmem:[%s219 + $0x8] sm:$0xff] %v259
      %v262 = vmin.f32 %v258, %v259
      %v263 = vrot.slane %v262, 4
      %v264 = vmin.f32 %v262, %v263
      %v265 = vrot.slane %v264, 2
      %v266 = vmin.f32 %v264, %v265
      %v267 = vrot.slane %v266, 1
      %v268 = vmin.f32 %v266, %v267
      %v269 = vmax.f32 %v258, %v259
      %v270 = vrot.slane %v269, 4
      %v271 = vmax.f32 %v269, %v270
      %v272 = vrot.slane %v271, 2
      %v273 = vmax.f32 %v271, %v272
      %v274 = vrot.slane %v273, 1
      %v275 = vmax.f32 %v273, %v274
      %p276 = scmp.eq.s32.totalorder %s16, 0
      // Predicated region
      $region33: #{inverted_residual_forward.8} parent=31 // pred_check
        %p277 = pneg %p276
      $region34: #{inverted_residual_forward.8} parent=31 // pred_check_branch
        %279 = sbr.rel (%p277) target = $region36
      $region35: #{inverted_residual_forward.8} parent=31 // pred_region
        %280 = vst [vmem:[#allocation2] sm:$0x1] %v268
        %281 = vst [vmem:[#allocation2 + $0x1] sm:$0x1] %v275
      $region36: #{inverted_residual_forward.8} parent=31 // pred_fallthru
        _
      %p282 = scmp.ne.s32.totalorder %s16, 0
      // Predicated region
      $region37: #{inverted_residual_forward.8} parent=31 // pred_check
        %p283 = pneg %p282
      $region38: #{inverted_residual_forward.8} parent=31 // pred_check_branch
        %285 = sbr.rel (%p283) target = $region40
      $region39: #{inverted_residual_forward.8} parent=31 // pred_region
        %v286 = vld [vmem:[#allocation2] sm:$0x1]
        %v287 = vmin.f32 %v286, %v268
        %288 = vst [vmem:[#allocation2] sm:$0x1] %v287
        %v289 = vld [vmem:[#allocation2 + $0x1] sm:$0x1]
        %v290 = vmax.f32 %v289, %v275
        %291 = vst [vmem:[#allocation2 + $0x1] sm:$0x1] %v290
      $region40: #{inverted_residual_forward.8} parent=31 // pred_fallthru
        _
      %p292 = scmp.eq.s32.totalorder %s16, 1
      // Predicated region
      $region41: #{inverted_residual_forward.8} parent=31 // pred_check
        %p293 = pneg %p292
      $region42: #{inverted_residual_forward.8} parent=31 // pred_check_branch
        %295 = sbr.rel (%p293) target = $region44
      $region43: #{inverted_residual_forward.8} parent=31 // pred_region
        %v296 = vld [vmem:[#allocation2] sm:$0x1]
        %vm297 = vcmask 1040384
        %v298 = vsel %vm297, %v296, inf
        %299 = vmin.xlane.f32.xlu0 %v298
        %v300 = vpop.xlane.xlu0 %299
        %v301 = vmin.f32 %v300, 0.0
        %v302 = vld [vmem:[#allocation2 + $0x1] sm:$0x1]
        %v303 = vsel %vm297, %v302, -inf
        %304 = vmax.xlane.f32.xlu0 %v303
        %v305 = vpop.xlane.xlu0 %304
        %v306 = vmax.f32 %v305, 0.0
        %v307 = vsub.f32 %v306, %v301
        %v308 = vmul.f32 %v307, 0.003921569
        %v309 = vmax.f32 %v308, 1e-08
        %v310 = vsub.f32 0.0, %v301
        %v311 = vrcp.pop %v309
        %v312 = vmul.f32 %v310, %v311
        %v313 = vround.ne.pseudo %v312
        %v314 = vmul.f32 1.0, %v311
        %315 = vst [vmem:[%s4] sm:$0x1] %v314
        %316 = vst [vmem:[%s4 + $0x1] sm:$0x1] %v309
        %317 = vst [vmem:[%s4 + $0x2] sm:$0x1] %v313
      $region44: #{inverted_residual_forward.8} parent=31 // pred_fallthru
        _
      %s318 = smul.u32 2, %s16
      %p319 = scmp.lt.s32.totalorder %s318, 3
      %s320 = scalar_select %p319, %s318, 3
      %s321 = smul.addr %s320, 8
      %s322 = scalar_lea.vmem %s3, %s321
      // Predicated region
      $region45: #{inverted_residual_forward.8} parent=31 // pred_check
        %p323 = pneg %p107
      $region46: #{inverted_residual_forward.8} parent=31 // pred_check_branch
        %325 = sbr.rel (%p323) target = $region48
      $region47: #{inverted_residual_forward.8} parent=31 // pred_region
        %s326 = smul.u32 2, %s16
      $region48: #{inverted_residual_forward.8} parent=31 // pred_fallthru
        _
      // Predicated region
      $region49: #{inverted_residual_forward.8} parent=31 // pred_check
        %p327 = pneg %p128
      $region50: #{inverted_residual_forward.8} parent=31 // pred_check_branch
        %329 = sbr.rel (%p327) target = $region52
      $region51: #{inverted_residual_forward.8} parent=31 // pred_region
        _
      $region52: #{inverted_residual_forward.8} parent=31 // pred_fallthru
        _
      // Predicated region
      $region53: #{inverted_residual_forward.8} parent=31 // pred_check
        %p330 = pneg %p128
      $region54: #{inverted_residual_forward.8} parent=31 // pred_check_branch
        %332 = sbr.rel (%p330) target = $region56
      $region55: #{inverted_residual_forward.8} parent=31 // pred_region
        _
      $region56: #{inverted_residual_forward.8} parent=31 // pred_fallthru
        _
    $region32: #{inverted_residual_forward.8} parent=5 // pred_fallthru
      _
    %p333 = scmp.le.s32.totalorder 2, %s11
    // Predicated region
    $region57: #{inverted_residual_forward.8} parent=5 // pred_check
      %p334 = pneg %p333
    $region58: #{inverted_residual_forward.8} parent=5 // pred_check_branch
      %336 = sbr.rel (%p334) target = $region60
    $region59: #{inverted_residual_forward.8} parent=5 // pred_region
      %s337 = ssub.s32 %s11, 2
      // Predicated region
      $region61: #{inverted_residual_forward.8} parent=59 // pred_check
        %p338 = pneg %p113
      $region62: #{inverted_residual_forward.8} parent=59 // pred_check_branch
        %340 = sbr.rel (%p338) target = $region64
      $region63: #{inverted_residual_forward.8} parent=59 // pred_region
        %s341 = smul.u32 2, %s17
        %p342 = scmp.lt.s32.totalorder %s341, 3
        %s343 = scalar_select %p342, %s341, 3
        %s344 = smul.addr %s343, 8
        %s345 = scalar_lea.vmem %s3, %s344
      $region64: #{inverted_residual_forward.8} parent=59 // pred_fallthru
        _
    $region60: #{inverted_residual_forward.8} parent=5 // pred_fallthru
      _
  $region6: #{inverted_residual_forward.8} parent=0 // loop_footer
    %s15 = sadd.s32 1, %s11
  $region7: #{inverted_residual_forward.8} parent=0 // loop_footer_branch
    %10 = sbr.rel target = $region3
  $region8: #{inverted_residual_forward.8} parent=0 // loop_exit
    _

// kernel: inverted_residual_forward.6
$region0: #{inverted_residual_forward.6}
  #allocation0 [shape = 'u32[]', space=smem, size = 0x4, offset = 0x4, fixed_abs, tag = 'smem constant byte address 0x4 - core index']
  #allocation1 [shape = 'u32[144,128]{1,0:T(1,128)}', space=vmem, size = 0x12000, scoped, tag = 'internal scratch']
  #allocation2 [shape = 'f32[1,18,18,48]{3,2,1,0:T(8,128)}', space=vmem, size = 0x36000, scoped, tag = 'scratch operand']
  #allocation3 [shape = 'f32[2,48]{1,0:T(2,128)}', space=vmem, size = 0x400, scoped, tag = 'scratch operand']
  %s0 = inlined_call_operand.vmem [shape: f32[3,128], index: 0, kind: input, shape index: {}]
  %s1 = inlined_call_operand.vmem [shape: bf16[2,16,16,48], index: 1, kind: input, shape index: {}]
  %s2 = inlined_call_operand.vmem [shape: f32[3,3,48], index: 2, kind: input, shape index: {}]
  %s3 = inlined_call_operand.vmem [shape: f32[1,48], index: 3, kind: input, shape index: {}]
  %s4 = inlined_call_operand.vmem [shape: bf16[2,16,16,48], index: 4, kind: output, shape index: {0}]
  %s5 = inlined_call_operand.vmem [shape: f32[3,128], index: 5, kind: output, shape index: {1}]
  %6 = xla_tuple %s4, %s5
  %s7 = sld [smem:[#allocation0]]
  $region73: #{inverted_residual_forward.6} parent=0
    _
  %s9 = ssub.s32 1, %s7
  %s10 = scalar_select 0, %s9, %s7
  loop: start=0, step=1, limit=4
  $region2: #{inverted_residual_forward.6} parent=0 // loop_pre_header
    _
  $region3: #{inverted_residual_forward.6} parent=0 // loop_header
    %s12 = sphi 0, %s16
    %p13 = scmp.ge.s32.totalorder %s12, 4
    %s20 = sphi 0, %s20
    %s22 = sphi 0, %s20
    %s23 = sphi 0, %s22
    %s37 = sphi 0, %s23
    %s43 = sphi 0, %s45
    %s46 = sphi 0, %s43
    %s47 = sphi 0, %s46
    %s63 = sphi 0, %s47
    %s67 = sphi 0, %s67
    %s69 = sphi 0, %s67
    %s70 = sphi 0, %s69
    %s84 = sphi 0, %s70
    %s88 = sphi 0, %s88
    %s90 = sphi 0, %s88
    %s91 = sphi 0, %s90
    %s105 = sphi 0, %s91
    %s111 = sphi 0, %s113
    %s114 = sphi 0, %s111
    %s115 = sphi 0, %s114
    %s131 = sphi 0, %s115
    %s135 = sphi 0, %s135
    %s137 = sphi 0, %s135
    %s138 = sphi 0, %s137
    %s152 = sphi 0, %s138
  $region4: #{inverted_residual_forward.6} parent=0 // loop_header_branch
    %15 = sbr.rel (%p13) target = $region8
  $region5: #{inverted_residual_forward.6} parent=0 // loop_body
    %s17 = ssub.s32 %s12, 1
    %s18 = ssub.s32 %s12, 2
    %s19 = sadd.s32 %s12, 1
    %s21 = sadd.s32 %s20, 1
    %p24 = scmp.eq.s32.totalorder %s12, 1
    %p25 = scmp.ne.s32.totalorder %s20, %s22
    %p26 = scmp.eq.s32.totalorder %s12, 0
    %p27 = por %p25, %p26
    %p28 = scmp.ne.s32.totalorder %s20, %s22
    %p29 = scmp.eq.s32.totalorder %s17, 1
    %p30 = por %p28, %p29
    %p31 = scmp.ne.s32.totalorder %s22, %s23
    %p32 = scmp.eq.s32.totalorder %s17, 0
    %p33 = por %p31, %p32
    %p34 = scmp.ne.s32.totalorder %s22, %s23
    %p35 = scmp.eq.s32.totalorder %s18, 1
    %p36 = por %p34, %p35
    %p38 = scmp.ne.s32.totalorder %s23, %s37
    %p39 = scmp.eq.s32.totalorder %s18, 0
    %p40 = por %p38, %p39
    %s41 = ssub.s32 %s12, %s19
    %p42 = scmp.eq.s32.totalorder %s41, 0
    %s44 = sadd.s32 %s43, 1
    %s45 = scalar_select %p42, %s43, %s44
    %p48 = pneg %p42
    %p49 = scmp.eq.s32.totalorder %s12, 1
    %p50 = por %p48, %p49
    %p51 = scmp.ne.s32.totalorder %s43, %s46
    %p52 = scmp.eq.s32.totalorder %s12, 0
    %p53 = por %p51, %p52
    %p54 = scmp.ne.s32.totalorder %s43, %s46
    %p55 = scmp.eq.s32.totalorder %s17, 1
    %p56 = por %p54, %p55
    %p57 = scmp.ne.s32.totalorder %s46, %s47
    %p58 = scmp.eq.s32.totalorder %s17, 0
    %p59 = por %p57, %p58
    %p60 = scmp.ne.s32.totalorder %s46, %s47
    %p61 = scmp.eq.s32.totalorder %s18, 1
    %p62 = por %p60, %p61
    %p64 = scmp.ne.s32.totalorder %s47, %s63
    %p65 = scmp.eq.s32.totalorder %s18, 0
    %p66 = por %p64, %p65
    %s68 = sadd.s32 %s67, 1
    %p71 = scmp.eq.s32.totalorder %s12, 1
    %p72 = scmp.ne.s32.totalorder %s67, %s69
    %p73 = scmp.eq.s32.totalorder %s12, 0
    %p74 = por %p72, %p73
    %p75 = scmp.ne.s32.totalorder %s67, %s69
    %p76 = scmp.eq.s32.totalorder %s17, 1
    %p77 = por %p75, %p76
    %p78 = scmp.ne.s32.totalorder %s69, %s70
    %p79 = scmp.eq.s32.totalorder %s17, 0
    %p80 = por %p78, %p79
    %p81 = scmp.ne.s32.totalorder %s69, %s70
    %p82 = scmp.eq.s32.totalorder %s18, 1
    %p83 = por %p81, %p82
    %p85 = scmp.ne.s32.totalorder %s70, %s84
    %p86 = scmp.eq.s32.totalorder %s18, 0
    %p87 = por %p85, %p86
    %s89 = sadd.s32 %s88, 1
    %p92 = scmp.eq.s32.totalorder %s12, 1
    %p93 = scmp.ne.s32.totalorder %s88, %s90
    %p94 = scmp.eq.s32.totalorder %s12, 0
    %p95 = por %p93, %p94
    %p96 = scmp.ne.s32.totalorder %s88, %s90
    %p97 = scmp.eq.s32.totalorder %s17, 1
    %p98 = por %p96, %p97
    %p99 = scmp.ne.s32.totalorder %s90, %s91
    %p100 = scmp.eq.s32.totalorder %s17, 0
    %p101 = por %p99, %p100
    %p102 = scmp.ne.s32.totalorder %s90, %s91
    %p103 = scmp.eq.s32.totalorder %s18, 1
    %p104 = por %p102, %p103
    %p106 = scmp.ne.s32.totalorder %s91, %s105
    %p107 = scmp.eq.s32.totalorder %s18, 0
    %p108 = por %p106, %p107
    %s109 = ssub.s32 %s12, %s19
    %p110 = scmp.eq.s32.totalorder %s109, 0
    %s112 = sadd.s32 %s111, 1
    %s113 = scalar_select %p110, %s111, %s112
    %p116 = pneg %p110
    %p117 = scmp.eq.s32.totalorder %s12, 1
    %p118 = por %p116, %p117
    %p119 = scmp.ne.s32.totalorder %s111, %s114
    %p120 = scmp.eq.s32.totalorder %s12, 0
    %p121 = por %p119, %p120
    %p122 = scmp.ne.s32.totalorder %s111, %s114
    %p123 = scmp.eq.s32.totalorder %s17, 1
    %p124 = por %p122, %p123
    %p125 = scmp.ne.s32.totalorder %s114, %s115
    %p126 = scmp.eq.s32.totalorder %s17, 0
    %p127 = por %p125, %p126
    %p128 = scmp.ne.s32.totalorder %s114, %s115
    %p129 = scmp.eq.s32.totalorder %s18, 1
    %p130 = por %p128, %p129
    %p132 = scmp.ne.s32.totalorder %s115, %s131
    %p133 = scmp.eq.s32.totalorder %s18, 0
    %p134 = por %p132, %p133
    %s136 = sadd.s32 %s135, 1
    %p139 = scmp.eq.s32.totalorder %s12, 1
    %p140 = scmp.ne.s32.totalorder %s135, %s137
    %p141 = scmp.eq.s32.totalorder %s12, 0
    %p142 = por %p140, %p141
    %p143 = scmp.ne.s32.totalorder %s135, %s137
    %p144 = scmp.eq.s32.totalorder %s17, 1
    %p145 = por %p143, %p144
    %p146 = scmp.ne.s32.totalorder %s137, %s138
    %p147 = scmp.eq.s32.totalorder %s17, 0
    %p148 = por %p146, %p147
    %p149 = scmp.ne.s32.totalorder %s137, %s138
    %p150 = scmp.eq.s32.totalorder %s18, 1
    %p151 = por %p149, %p150
    %p153 = scmp.ne.s32.totalorder %s138, %s152
    %p154 = scmp.eq.s32.totalorder %s18, 0
    %p155 = por %p153, %p154
    %p156 = scmp.le.s32.totalorder 1, %s12
    %p157 = scmp.lt.s32.totalorder %s12, 3
    %p158 = pnand %p156, %p157
    %p159 = pneg %p158
    // Predicated region
    $region9: #{inverted_residual_forward.6} parent=5 // pred_check
      _
    $region10: #{inverted_residual_forward.6} parent=5 // pred_check_branch
      %161 = sbr.rel (%p158) target = $region12
    $region11: #{inverted_residual_forward.6} parent=5 // pred_region
      %s162 = ssub.s32 %s12, 1
      // Predicated region
      $region13: #{inverted_residual_forward.6} parent=11 // pred_check
        %p163 = pneg %p33
      $region14: #{inverted_residual_forward.6} parent=11 // pred_check_branch
        %165 = sbr.rel (%p163) target = $region16
      $region15: #{inverted_residual_forward.6} parent=11 // pred_region
        _
      $region16: #{inverted_residual_forward.6} parent=11 // pred_fallthru
        _
      // Predicated region
      $region17: #{inverted_residual_forward.6} parent=11 // pred_check
        %p166 = pneg %p80
      $region18: #{inverted_residual_forward.6} parent=11 // pred_check_branch
        %168 = sbr.rel (%p166) target = $region20
      $region19: #{inverted_residual_forward.6} parent=11 // pred_region
        _
      $region20: #{inverted_residual_forward.6} parent=11 // pred_fallthru
        _
      // Predicated region
      $region21: #{inverted_residual_forward.6} parent=11 // pred_check
        %p169 = pneg %p101
      $region22: #{inverted_residual_forward.6} parent=11 // pred_check_branch
        %171 = sbr.rel (%p169) target = $region24
      $region23: #{inverted_residual_forward.6} parent=11 // pred_region
        _
      $region24: #{inverted_residual_forward.6} parent=11 // pred_fallthru
        _
    $region12: #{inverted_residual_forward.6} parent=5 // pred_fallthru
      _
    %p172 = scmp.lt.s32.totalorder %s12, 2
    // Predicated region
    $region25: #{inverted_residual_forward.6} parent=5 // pred_check
      %p173 = pneg %p172
    $region26: #{inverted_residual_forward.6} parent=5 // pred_check_branch
      %175 = sbr.rel (%p173) target = $region28
    $region27: #{inverted_residual_forward.6} parent=5 // pred_region
      // Predicated region
      $region29: #{inverted_residual_forward.6} parent=27 // pred_check
        %p176 = pneg %p53
      $region30: #{inverted_residual_forward.6} parent=27 // pred_check_branch
        %178 = sbr.rel (%p176) target = $region32
      $region31: #{inverted_residual_forward.6} parent=27 // pred_region
        %p179 = scmp.lt.s32.totalorder %s12, 1
        %s180 = scalar_select %p179, %s12, 1
        %s181 = smul.addr %s180, 32
        %s182 = smul.addr %s181, 4
        %s183 = scalar_lea.vmem %s1, %s182
      $region32: #{inverted_residual_forward.6} parent=27 // pred_fallthru
        _
    $region28: #{inverted_residual_forward.6} parent=5 // pred_fallthru
      _
    %p184 = scmp.le.s32.totalorder 1, %s12
    %p185 = scmp.lt.s32.totalorder %s12, 3
    %p186 = pnand %p184, %p185
    %p187 = pneg %p186
    // Predicated region
    $region33: #{inverted_residual_forward.6} parent=5 // pred_check
      _
    $region34: #{inverted_residual_forward.6} parent=5 // pred_check_branch
      %189 = sbr.rel (%p186) target = $region36
    $region35: #{inverted_residual_forward.6} parent=5 // pred_region
      %s190 = ssub.s32 %s12, 1
      %p191 = pneg %p33
      %p192 = pneg %p30
      %p193 = scmp.lt.s32.totalorder %s17, 1
      %s194 = scalar_select %p193, %s17, 1
      %s195 = smul.addr %s194, 32
      %s196 = smul.addr %s195, 4
      %s197 = scalar_lea.vmem %s1, %s196
      %p198 = pneg %p59
      %p199 = pneg %p56
      %p200 = pneg %p80
      %p201 = pneg %p77
      %p202 = pneg %p101
      %p203 = pneg %p98
      %p204 = pneg %p127
      %p205 = pneg %p124
      %p206 = scmp.lt.s32.totalorder %s17, 1
      %s207 = scalar_select %p206, %s17, 1
      %s208 = smul.addr %s207, 32
      %s209 = smul.addr %s208, 4
      %s210 = scalar_lea.vmem %s4, %s209
      %p211 = pneg %p148
      %p212 = pneg %p145
      %p213 = scmp.lt.s32.totalorder %s17, 1
      %s214 = scalar_select %p213, %s17, 1
      %s215 = smul.addr %s214, 32
      %s216 = smul.addr %s215, 4
      %s217 = scalar_lea.vmem %s1, %s216
      %p218 = scmp.lt.s32.totalorder %s17, 1
      %s219 = scalar_select %p218, %s17, 1
      %s220 = smul.addr %s219, 32
      %s221 = smul.addr %s220, 4
      %s222 = scalar_lea.vmem %s4, %s221
      %v223 = vld [vmem:[%s217] sm:$0xf]
      %v224 = vld [vmem:[%s217 + $0x4] sm:$0xf]
      %v225 = vld [vmem:[%s217 + $0x8] sm:$0xf]
      %v226 = vld [vmem:[%s217 + $0xc] sm:$0xf]
      %v227 = vld [vmem:[%s217 + $0x10] sm:$0xf]
      %v228 = vld [vmem:[%s217 + $0x14] sm:$0xf]
      %v229 = vld [vmem:[%s217 + $0x18] sm:$0xf]
      %v230 = vld [vmem:[%s217 + $0x1c] sm:$0xf]
      %v231 = vld [vmem:[%s217 + $0x20] sm:$0xf]
      %v232 = vld [vmem:[%s217 + $0x24] sm:$0xf]
      %v233 = vld [vmem:[%s217 + $0x28] sm:$0xf]
      %v234 = vld [vmem:[%s217 + $0x2c] sm:$0xf]
      %v235 = vld [vmem:[%s217 + $0x30] sm:$0xf]
      %v236 = vld [vmem:[%s217 + $0x34] sm:$0xf]
      %v237 = vld [vmem:[%s217 + $0x38] sm:$0xf]
      %v238 = vld [vmem:[%s217 + $0x3c] sm:$0xf]
      %v239 = vld [vmem:[%s217 + $0x40] sm:$0xf]
      %v240 = vld [vmem:[%s217 + $0x44] sm:$0xf]
      %v241 = vld [vmem:[%s217 + $0x48] sm:$0xf]
      %v242 = vld [vmem:[%s217 + $0x4c] sm:$0xf]
      %v243 = vld [vmem:[%s217 + $0x50] sm:$0xf]
      %v244 = vld [vmem:[%s217 + $0x54] sm:$0xf]
      %v245 = vld [vmem:[%s217 + $0x58] sm:$0xf]
      %v246 = vld [vmem:[%s217 + $0x5c] sm:$0xf]
      %v247 = vld [vmem:[%s217 + $0x60] sm:$0xf]
      %v248 = vld [vmem:[%s217 + $0x64] sm:$0xf]
      %v249 = vld [vmem:[%s217 + $0x68] sm:$0xf]
      %v250 = vld [vmem:[%s217 + $0x6c] sm:$0xf]
      %v251 = vld [vmem:[%s217 + $0x70] sm:$0xf]
      %v252 = vld [vmem:[%s217 + $0x74] sm:$0xf]
      %v253 = vld [vmem:[%s217 + $0x78] sm:$0xf]
      %v254 = vld [vmem:[%s217 + $0x7c] sm:$0xf]
      %v255 = vunpack.c.l.bf16 %v223
      %v256 = vunpack.c.l.bf16 %v224
      %v257 = vunpack.c.l.bf16 %v225
      %v258 = vunpack.c.l.bf16 %v226
      %v259 = vunpack.c.l.bf16 %v227
      %v260 = vunpack.c.l.bf16 %v228
      %v261 = vunpack.c.l.bf16 %v229
      %v262 = vunpack.c.l.bf16 %v230
      %v263 = vunpack.c.l.bf16 %v231
      %v264 = vunpack.c.l.bf16 %v232
      %v265 = vunpack.c.l.bf16 %v233
      %v266 = vunpack.c.l.bf16 %v234
      %v267 = vunpack.c.l.bf16 %v235
      %v268 = vunpack.c.l.bf16 %v236
      %v269 = vunpack.c.l.bf16 %v237
      %v270 = vunpack.c.l.bf16 %v238
      %v271 = vunpack.c.l.bf16 %v239
      %v272 = vunpack.c.l.bf16 %v240
      %v273 = vunpack.c.l.bf16 %v241
      %v274 = vunpack.c.l.bf16 %v242
      %v275 = vunpack.c.l.bf16 %v243
      %v276 = vunpack.c.l.bf16 %v244
      %v277 = vunpack.c.l.bf16 %v245
      %v278 = vunpack.c.l.bf16 %v246
      %v279 = vunpack.c.l.bf16 %v247
      %v280 = vunpack.c.l.bf16 %v248
      %v281 = vunpack.c.l.bf16 %v249
      %v282 = vunpack.c.l.bf16 %v250
      %v283 = vunpack.c.l.bf16 %v251
      %v284 = vunpack.c.l.bf16 %v252
      %v285 = vunpack.c.l.bf16 %v253
      %v286 = vunpack.c.l.bf16 %v254
      %v287 = vld [vmem:[%s0] sm:$0x1]
      %v288 = vld [vmem:[%s0 + $0x1] sm:$0x1]
      %v289 = vld [vmem:[%s0 + $0x2] sm:$0x1]
      %s291 = vtos %v287
      %v292 = vstv %s291
      %v294 = vmul.f32 %v255, %v292
      %v295 = vmul.f32 %v256, %v292
      %v296 = vmul.f32 %v257, %v292
      %v297 = vmul.f32 %v258, %v292
      %v298 = vmul.f32 %v259, %v292
      %v299 = vmul.f32 %v260, %v292
      %v300 = vmul.f32 %v261, %v292
      %v301 = vmul.f32 %v262, %v292
      %v302 = vmul.f32 %v263, %v292
      %v303 = vmul.f32 %v264, %v292
      %v304 = vmul.f32 %v265, %v292
      %v305 = vmul.f32 %v266, %v292
      %v306 = vmul.f32 %v267, %v292
      %v307 = vmul.f32 %v268, %v292
      %v308 = vmul.f32 %v269, %v292
      %v309 = vmul.f32 %v270, %v292
      %v310 = vmul.f32 %v271, %v292
      %v311 = vmul.f32 %v272, %v292
      %v312 = vmul.f32 %v273, %v292
      %v313 = vmul.f32 %v274, %v292
      %v314 = vmul.f32 %v275, %v292
      %v315 = vmul.f32 %v276, %v292
      %v316 = vmul.f32 %v277, %v292
      %v317 = vmul.f32 %v278, %v292
      %v318 = vmul.f32 %v279, %v292
      %v319 = vmul.f32 %v280, %v292
      %v320 = vmul.f32 %v281, %v292
      %v321 = vmul.f32 %v282, %v292
      %v322 = vmul.f32 %v283, %v292
      %v323 = vmul.f32 %v284, %v292
      %v324 = vmul.f32 %v285, %v292
      %v325 = vmul.f32 %v286, %v292
      %v326 = vround.ne.pseudo %v294
      %v327 = vround.ne.pseudo %v295
      %v328 = vround.ne.pseudo %v296
      %v329 = vround.ne.pseudo %v297
      %v330 = vround.ne.pseudo %v298
      %v331 = vround.ne.pseudo %v299
      %v332 = vround.ne.pseudo %v300
      %v333 = vround.ne.pseudo %v301
      %v334 = vround.ne.pseudo %v302
      %v335 = vround.ne.pseudo %v303
      %v336 = vround.ne.pseudo %v304
      %v337 = vround.ne.pseudo %v305
      %v338 = vround.ne.pseudo %v306
      %v339 = vround.ne.pseudo %v307
      %v340 = vround.ne.pseudo %v308
      %v341 = vround.ne.pseudo %v309
      %v342 = vround.ne.pseudo %v310
      %v343 = vround.ne.pseudo %v311
      %v344 = vround.ne.pseudo %v312
      %v345 = vround.ne.pseudo %v313
      %v346 = vround.ne.pseudo %v314
      %v347 = vround.ne.pseudo %v315
      %v348 = vround.ne.pseudo %v316
      %v349 = vround.ne.pseudo %v317
      %v350 = vround.ne.pseudo %v318
      %v351 = vround.ne.pseudo %v319
      %v352 = vround.ne.pseudo %v320
      %v353 = vround.ne.pseudo %v321
      %v354 = vround.ne.pseudo %v322
      %v355 = vround.ne.pseudo %v323
      %v356 = vround.ne.pseudo %v324
      %v357 = vround.ne.pseudo %v325
      %s359 = vtos %v289
      %v360 = vstv %s359
      %v362 = vadd.f32 %v326, %v360
      %v363 = vadd.f32 %v327, %v360
      %v364 = vadd.f32 %v328, %v360
      %v365 = vadd.f32 %v329, %v360
      %v366 = vadd.f32 %v330, %v360
      %v367 = vadd.f32 %v331, %v360
      %v368 = vadd.f32 %v332, %v360
      %v369 = vadd.f32 %v333, %v360
      %v370 = vadd.f32 %v334, %v360
      %v371 = vadd.f32 %v335, %v360
      %v372 = vadd.f32 %v336, %v360
      %v373 = vadd.f32 %v337, %v360
      %v374 = vadd.f32 %v338, %v360
      %v375 = vadd.f32 %v339, %v360
      %v376 = vadd.f32 %v340, %v360
      %v377 = vadd.f32 %v341, %v360
      %v378 = vadd.f32 %v342, %v360
      %v379 = vadd.f32 %v343, %v360
      %v380 = vadd.f32 %v344, %v360
      %v381 = vadd.f32 %v345, %v360
      %v382 = vadd.f32 %v346, %v360
      %v383 = vadd.f32 %v347, %v360
      %v384 = vadd.f32 %v348, %v360
      %v385 = vadd.f32 %v349, %v360
      %v386 = vadd.f32 %v350, %v360
      %v387 = vadd.f32 %v351, %v360
      %v388 = vadd.f32 %v352, %v360
      %v389 = vadd.f32 %v353, %v360
      %v390 = vadd.f32 %v354, %v360
      %v391 = vadd.f32 %v355, %v360
      %v392 = vadd.f32 %v356, %v360
      %v393 = vadd.f32 %v357, %v360
      %v394 = vmax.f32 %v362, 0.0
      %v395 = vmax.f32 %v363, 0.0
      %v396 = vmax.f32 %v364, 0.0
      %v397 = vmax.f32 %v365, 0.0
      %v398 = vmax.f32 %v366, 0.0
      %v399 = vmax.f32 %v367, 0.0
      %v400 = vmax.f32 %v368, 0.0
      %v401 = vmax.f32 %v369, 0.0
      %v402 = vmax.f32 %v370, 0.0
      %v403 = vmax.f32 %v371, 0.0
      %v404 = vmax.f32 %v372, 0.0
      %v405 = vmax.f32 %v373, 0.0
      %v406 = vmax.f32 %v374, 0.0
      %v407 = vmax.f32 %v375, 0.0
      %v408 = vmax.f32 %v376, 0.0
      %v409 = vmax.f32 %v377, 0.0
      %v410 = vmax.f32 %v378, 0.0
      %v411 = vmax.f32 %v379, 0.0
      %v412 = vmax.f32 %v380, 0.0
      %v413 = vmax.f32 %v381, 0.0
      %v414 = vmax.f32 %v382, 0.0
      %v415 = vmax.f32 %v383, 0.0
      %v416 = vmax.f32 %v384, 0.0
      %v417 = vmax.f32 %v385, 0.0
      %v418 = vmax.f32 %v386, 0.0
      %v419 = vmax.f32 %v387, 0.0
      %v420 = vmax.f32 %v388, 0.0
      %v421 = vmax.f32 %v389, 0.0
      %v422 = vmax.f32 %v390, 0.0
      %v423 = vmax.f32 %v391, 0.0
      %v424 = vmax.f32 %v392, 0.0
      %v425 = vmax.f32 %v393, 0.0
      %v426 = vmin.f32 %v394, 255.0
      %v427 = vmin.f32 %v395, 255.0
      %v428 = vmin.f32 %v396, 255.0
      %v429 = vmin.f32 %v397, 255.0
      %v430 = vmin.f32 %v398, 255.0
      %v431 = vmin.f32 %v399, 255.0
      %v432 = vmin.f32 %v400, 255.0
      %v433 = vmin.f32 %v401, 255.0
      %v434 = vmin.f32 %v402, 255.0
      %v435 = vmin.f32 %v403, 255.0
      %v436 = vmin.f32 %v404, 255.0
      %v437 = vmin.f32 %v405, 255.0
      %v438 = vmin.f32 %v406, 255.0
      %v439 = vmin.f32 %v407, 255.0
      %v440 = vmin.f32 %v408, 255.0
      %v441 = vmin.f32 %v409, 255.0
      %v442 = vmin.f32 %v410, 255.0
      %v443 = vmin.f32 %v411, 255.0
      %v444 = vmin.f32 %v412, 255.0
      %v445 = vmin.f32 %v413, 255.0
      %v446 = vmin.f32 %v414, 255.0
      %v447 = vmin.f32 %v415, 255.0
      %v448 = vmin.f32 %v416, 255.0
      %v449 = vmin.f32 %v417, 255.0
      %v450 = vmin.f32 %v418, 255.0
      %v451 = vmin.f32 %v419, 255.0
      %v452 = vmin.f32 %v420, 255.0
      %v453 = vmin.f32 %v421, 255.0
      %v454 = vmin.f32 %v422, 255.0
      %v455 = vmin.f32 %v423, 255.0
      %v456 = vmin.f32 %v424, 255.0
      %v457 = vmin.f32 %v425, 255.0
      %v458 = vsub.f32 %v426, %v360
      %v459 = vsub.f32 %v427, %v360
      %v460 = vsub.f32 %v428, %v360
      %v461 = vsub.f32 %v429, %v360
      %v462 = vsub.f32 %v430, %v360
      %v463 = vsub.f32 %v431, %v360
      %v464 = vsub.f32 %v432, %v360
      %v465 = vsub.f32 %v433, %v360
      %v466 = vsub.f32 %v434, %v360
      %v467 = vsub.f32 %v435, %v360
      %v468 = vsub.f32 %v436, %v360
      %v469 = vsub.f32 %v437, %v360
      %v470 = vsub.f32 %v438, %v360
      %v471 = vsub.f32 %v439, %v360
      %v472 = vsub.f32 %v440, %v360
      %v473 = vsub.f32 %v441, %v360
      %v474 = vsub.f32 %v442, %v360
      %v475 = vsub.f32 %v443, %v360
      %v476 = vsub.f32 %v444, %v360
      %v477 = vsub.f32 %v445, %v360
      %v478 = vsub.f32 %v446, %v360
      %v479 = vsub.f32 %v447, %v360
      %v480 = vsub.f32 %v448, %v360
      %v481 = vsub.f32 %v449, %v360
      %v482 = vsub.f32 %v450, %v360
      %v483 = vsub.f32 %v451, %v360
      %v484 = vsub.f32 %v452, %v360
      %v485 = vsub.f32 %v453, %v360
      %v486 = vsub.f32 %v454, %v360
      %v487 = vsub.f32 %v455, %v360
      %v488 = vsub.f32 %v456, %v360
      %v489 = vsub.f32 %v457, %v360
      %s491 = vtos %v288
      %v492 = vstv %s491
      %v494 = vmul.f32 %v458, %v492
      %v495 = vmul.f32 %v459, %v492
      %v496 = vmul.f32 %v460, %v492
      %v497 = vmul.f32 %v461, %v492
      %v498 = vmul.f32 %v462, %v492
      %v499 = vmul.f32 %v463, %v492
      %v500 = vmul.f32 %v464, %v492
      %v501 = vmul.f32 %v465, %v492
      %v502 = vmul.f32 %v466, %v492
      %v503 = vmul.f32 %v467, %v492
      %v504 = vmul.f32 %v468, %v492
      %v505 = vmul.f32 %v469, %v492
      %v506 = vmul.f32 %v470, %v492
      %v507 = vmul.f32 %v471, %v492
      %v508 = vmul.f32 %v472, %v492
      %v509 = vmul.f32 %v473, %v492
      %v510 = vmul.f32 %v474, %v492
      %v511 = vmul.f32 %v475, %v492
      %v512 = vmul.f32 %v476, %v492
      %v513 = vmul.f32 %v477, %v492
      %v514 = vmul.f32 %v478, %v492
      %v515 = vmul.f32 %v479, %v492
      %v516 = vmul.f32 %v480, %v492
      %v517 = vmul.f32 %v481, %v492
      %v518 = vmul.f32 %v482, %v492
      %v519 = vmul.f32 %v483, %v492
      %v520 = vmul.f32 %v484, %v492
      %v521 = vmul.f32 %v485, %v492
      %v522 = vmul.f32 %v486, %v492
      %v523 = vmul.f32 %v487, %v492
      %v524 = vmul.f32 %v488, %v492
      %v525 = vmul.f32 %v489, %v492
      %p526 = scmp.eq.s32.totalorder %s17, 0
      // Predicated region
      $region37: #{inverted_residual_forward.6} parent=35 // pred_check
        %p527 = pneg %p526
      $region38: #{inverted_residual_forward.6} parent=35 // pred_check_branch
        %529 = sbr.rel (%p527) target = $region40
      $region39: #{inverted_residual_forward.6} parent=35 // pred_region
        %vm530 = vcmask 392192
        %531 = vst.msk [vmem:[#allocation2] sm:$0xff] %vm530, 0.0
        %532 = vst.msk [vmem:[#allocation2 + $0x8] sm:$0xff] %vm530, 0.0
        %vm533 = vcmask 386048
        %534 = vst.msk [vmem:[#allocation2 + $0x10] sm:$0x3] %vm533, 0.0
        %535 = vst.msk [vmem:[#allocation2 + $0x18] sm:$0xff] %vm530, 0.0
        %536 = vst.msk [vmem:[#allocation2 + $0x20] sm:$0xff] %vm530, 0.0
        %537 = vst.msk [vmem:[#allocation2 + $0x28] sm:$0x3] %vm533, 0.0
        %538 = vst.msk [vmem:[#allocation2 + $0x30] sm:$0xff] %vm530, 0.0
        %539 = vst.msk [vmem:[#allocation2 + $0x38] sm:$0xff] %vm530, 0.0
        %540 = vst.msk [vmem:[#allocation2 + $0x40] sm:$0x3] %vm533, 0.0
        %541 = vst.msk [vmem:[#allocation2 + $0x48] sm:$0xff] %vm530, 0.0
        %542 = vst.msk [vmem:[#allocation2 + $0x50] sm:$0xff] %vm530, 0.0
        %543 = vst.msk [vmem:[#allocation2 + $0x58] sm:$0x3] %vm533, 0.0
        %544 = vst.msk [vmem:[#allocation2 + $0x60] sm:$0xff] %vm530, 0.0
        %545 = vst.msk [vmem:[#allocation2 + $0x68] sm:$0xff] %vm530, 0.0
        %546 = vst.msk [vmem:[#allocation2 + $0x70] sm:$0x3] %vm533, 0.0
        %547 = vst.msk [vmem:[#allocation2 + $0x78] sm:$0xff] %vm530, 0.0
        %548 = vst.msk [vmem:[#allocation2 + $0x80] sm:$0xff] %vm530, 0.0
        %549 = vst.msk [vmem:[#allocation2 + $0x88] sm:$0x3] %vm533, 0.0
        %550 = vst.msk [vmem:[#allocation2 + $0x90] sm:$0xff] %vm530, 0.0
        %551 = vst.msk [vmem:[#allocation2 + $0x98] sm:$0xff] %vm530, 0.0
        %552 = vst.msk [vmem:[#allocation2 + $0xa0] sm:$0x3] %vm533, 0.0
        %553 = vst.msk [vmem:[#allocation2 + $0xa8] sm:$0xff] %vm530, 0.0
        %554 = vst.msk [vmem:[#allocation2 + $0xb0] sm:$0xff] %vm530, 0.0
        %555 = vst.msk [vmem:[#allocation2 + $0xb8] sm:$0x3] %vm533, 0.0
        %556 = vst.msk [vmem:[#allocation2 + $0xc0] sm:$0xff] %vm530, 0.0
        %557 = vst.msk [vmem:[#allocation2 + $0xc8] sm:$0xff] %vm530, 0.0
        %558 = vst.msk [vmem:[#allocation2 + $0xd0] sm:$0x3] %vm533, 0.0
        %559 = vst.msk [vmem:[#allocation2 + $0xd8] sm:$0xff] %vm530, 0.0
        %560 = vst.msk [vmem:[#allocation2 + $0xe0] sm:$0xff] %vm530, 0.0
        %561 = vst.msk [vmem:[#allocation2 + $0xe8] sm:$0x3] %vm533, 0.0
        %562 = vst.msk [vmem:[#allocation2 + $0xf0] sm:$0xff] %vm530, 0.0
        %563 = vst.msk [vmem:[#allocation2 + $0xf8] sm:$0xff] %vm530, 0.0
        %564 = vst.msk [vmem:[#allocation2 + $0x100] sm:$0x3] %vm533, 0.0
        %565 = vst.msk [vmem:[#allocation2 + $0x108] sm:$0xff] %vm530, 0.0
        %566 = vst.msk [vmem:[#allocation2 + $0x110] sm:$0xff] %vm530, 0.0
        %567 = vst.msk [vmem:[#allocation2 + $0x118] sm:$0x3] %vm533, 0.0
        %568 = vst.msk [vmem:[#allocation2 + $0x120] sm:$0xff] %vm530, 0.0
        %569 = vst.msk [vmem:[#allocation2 + $0x128] sm:$0xff] %vm530, 0.0
        %570 = vst.msk [vmem:[#allocation2 + $0x130] sm:$0x3] %vm533, 0.0
        %571 = vst.msk [vmem:[#allocation2 + $0x138] sm:$0xff] %vm530, 0.0
        %572 = vst.msk [vmem:[#allocation2 + $0x140] sm:$0xff] %vm530, 0.0
        %573 = vst.msk [vmem:[#allocation2 + $0x148] sm:$0x3] %vm533, 0.0
        %574 = vst.msk [vmem:[#allocation2 + $0x150] sm:$0xff] %vm530, 0.0
        %575 = vst.msk [vmem:[#allocation2 + $0x158] sm:$0xff] %vm530, 0.0
        %576 = vst.msk [vmem:[#allocation2 + $0x160] sm:$0x3] %vm533, 0.0
        %577 = vst.msk [vmem:[#allocation2 + $0x168] sm:$0xff] %vm530, 0.0
        %578 = vst.msk [vmem:[#allocation2 + $0x170] sm:$0xff] %vm530, 0.0
        %579 = vst.msk [vmem:[#allocation2 + $0x178] sm:$0x3] %vm533, 0.0
        %580 = vst.msk [vmem:[#allocation2 + $0x180] sm:$0xff] %vm530, 0.0
        %581 = vst.msk [vmem:[#allocation2 + $0x188] sm:$0xff] %vm530, 0.0
        %582 = vst.msk [vmem:[#allocation2 + $0x190] sm:$0x3] %vm533, 0.0
        %583 = vst.msk [vmem:[#allocation2 + $0x198] sm:$0xff] %vm530, 0.0
        %584 = vst.msk [vmem:[#allocation2 + $0x1a0] sm:$0xff] %vm530, 0.0
        %585 = vst.msk [vmem:[#allocation2 + $0x1a8] sm:$0x3] %vm533, 0.0
      $region40: #{inverted_residual_forward.6} parent=35 // pred_fallthru
        _
      %s586 = scalar_lea.vmem [#allocation2], 24
      %vm587 = vcmask 392192
      %588 = vst.msk [vmem:[%s586 + $0x1] sm:$0xff] %vm587, %v494
      %589 = vst.msk [vmem:[%s586 + $0x9] sm:$0xff] %vm587, %v495
      %590 = vst.msk [vmem:[%s586 + $0x19] sm:$0xff] %vm587, %v496
      %591 = vst.msk [vmem:[%s586 + $0x21] sm:$0xff] %vm587, %v497
      %592 = vst.msk [vmem:[%s586 + $0x31] sm:$0xff] %vm587, %v498
      %593 = vst.msk [vmem:[%s586 + $0x39] sm:$0xff] %vm587, %v499
      %594 = vst.msk [vmem:[%s586 + $0x49] sm:$0xff] %vm587, %v500
      %595 = vst.msk [vmem:[%s586 + $0x51] sm:$0xff] %vm587, %v501
      %596 = vst.msk [vmem:[%s586 + $0x61] sm:$0xff] %vm587, %v502
      %597 = vst.msk [vmem:[%s586 + $0x69] sm:$0xff] %vm587, %v503
      %598 = vst.msk [vmem:[%s586 + $0x79] sm:$0xff] %vm587, %v504
      %599 = vst.msk [vmem:[%s586 + $0x81] sm:$0xff] %vm587, %v505
      %600 = vst.msk [vmem:[%s586 + $0x91] sm:$0xff] %vm587, %v506
      %601 = vst.msk [vmem:[%s586 + $0x99] sm:$0xff] %vm587, %v507
      %602 = vst.msk [vmem:[%s586 + $0xa9] sm:$0xff] %vm587, %v508
      %603 = vst.msk [vmem:[%s586 + $0xb1] sm:$0xff] %vm587, %v509
      %604 = vst.msk [vmem:[%s586 + $0xc1] sm:$0xff] %vm587, %v510
      %605 = vst.msk [vmem:[%s586 + $0xc9] sm:$0xff] %vm587, %v511
      %606 = vst.msk [vmem:[%s586 + $0xd9] sm:$0xff] %vm587, %v512
      %607 = vst.msk [vmem:[%s586 + $0xe1] sm:$0xff] %vm587, %v513
      %608 = vst.msk [vmem:[%s586 + $0xf1] sm:$0xff] %vm587, %v514
      %609 = vst.msk [vmem:[%s586 + $0xf9] sm:$0xff] %vm587, %v515
      %610 = vst.msk [vmem:[%s586 + $0x109] sm:$0xff] %vm587, %v516
      %611 = vst.msk [vmem:[%s586 + $0x111] sm:$0xff] %vm587, %v517
      %612 = vst.msk [vmem:[%s586 + $0x121] sm:$0xff] %vm587, %v518
      %613 = vst.msk [vmem:[%s586 + $0x129] sm:$0xff] %vm587, %v519
      %614 = vst.msk [vmem:[%s586 + $0x139] sm:$0xff] %vm587, %v520
      %615 = vst.msk [vmem:[%s586 + $0x141] sm:$0xff] %vm587, %v521
      %616 = vst.msk [vmem:[%s586 + $0x151] sm:$0xff] %vm587, %v522
      %617 = vst.msk [vmem:[%s586 + $0x159] sm:$0xff] %vm587, %v523
      %618 = vst.msk [vmem:[%s586 + $0x169] sm:$0xff] %vm587, %v524
      %619 = vst.msk [vmem:[%s586 + $0x171] sm:$0xff] %vm587, %v525
      %v620 = vld [vmem:[%s2] sm:$0x7]
      %v621 = vld [vmem:[%s2 + $0x4] sm:$0x7]
      %v622 = vld [vmem:[%s2 + $0x8] sm:$0x7]
      %v623 = vld [vmem:[%s3] sm:$0x1]
      %v624 = vld [vmem:[#allocation2] sm:$0xff]
      %v625 = vld [vmem:[#allocation2 + $0x8] sm:$0xff]
      %v626 = vld [vmem:[#allocation2 + $0x18] sm:$0xff]
      %v627 = vld [vmem:[#allocation2 + $0x20] sm:$0xff]
      %v628 = vld [vmem:[#allocation2 + $0x30] sm:$0xff]
      %v629 = vld [vmem:[#allocation2 + $0x38] sm:$0xff]
      %v630 = vld [vmem:[#allocation2 + $0x48] sm:$0xff]
      %v631 = vld [vmem:[#allocation2 + $0x50] sm:$0xff]
      %v632 = vld [vmem:[#allocation2 + $0x60] sm:$0xff]
      %v633 = vld [vmem:[#allocation2 + $0x68] sm:$0xff]
      %v634 = vld [vmem:[#allocation2 + $0x78] sm:$0xff]
      %v635 = vld [vmem:[#allocation2 + $0x80] sm:$0xff]
      %v636 = vld [vmem:[#allocation2 + $0x90] sm:$0xff]
      %v637 = vld [vmem:[#allocation2 + $0x98] sm:$0xff]
      %v638 = vld [vmem:[#allocation2 + $0xa8] sm:$0xff]
      %v639 = vld [vmem:[#allocation2 + $0xb0] sm:$0xff]
      %v640 = vld [vmem:[#allocation2 + $0xc0] sm:$0xff]
      %v641 = vld [vmem:[#allocation2 + $0xc8] sm:$0xff]
      %v642 = vld [vmem:[#allocation2 + $0xd8] sm:$0xff]
      %v643 = vld [vmem:[#allocation2 + $0xe0] sm:$0xff]
      %v644 = vld [vmem:[#allocation2 + $0xf0] sm:$0xff]
      %v645 = vld [vmem:[#allocation2 + $0xf8] sm:$0xff]
      %v646 = vld [vmem:[#allocation2 + $0x108] sm:$0xff]
      %v647 = vld [vmem:[#allocation2 + $0x110] sm:$0xff]
      %v648 = vld [vmem:[#allocation2 + $0x120] sm:$0xff]
      %v649 = vld [vmem:[#allocation2 + $0x128] sm:$0xff]
      %v650 = vld [vmem:[#allocation2 + $0x138] sm:$0xff]
      %v651 = vld [vmem:[#allocation2 + $0x140] sm:$0xff]
      %v652 = vld [vmem:[#allocation2 + $0x150] sm:$0xff]
      %v653 = vld [vmem:[#allocation2 + $0x158] sm:$0xff]
      %v654 = vld [vmem:[#allocation2 + $0x168] sm:$0xff]
      %v655 = vld [vmem:[#allocation2 + $0x170] sm:$0xff]
      %v656 = vlaneseq
      %v657 = vshrl.u32 %v656, 7
      %v658 = vsub.s32 0, %v657
      %v659 = vrot.slane %v620, %v658
      %v660 = vmul.f32 %v624, %v659
      %v661 = vmul.f32 %v625, %v659
      %v662 = vmul.f32 %v626, %v659
      %v663 = vmul.f32 %v627, %v659
      %v664 = vmul.f32 %v628, %v659
      %v665 = vmul.f32 %v629, %v659
      %v666 = vmul.f32 %v630, %v659
      %v667 = vmul.f32 %v631, %v659
      %v668 = vmul.f32 %v632, %v659
      %v669 = vmul.f32 %v633, %v659
      %v670 = vmul.f32 %v634, %v659
      %v671 = vmul.f32 %v635, %v659
      %v672 = vmul.f32 %v636, %v659
      %v673 = vmul.f32 %v637, %v659
      %v674 = vmul.f32 %v638, %v659
      %v675 = vmul.f32 %v639, %v659
      %v676 = vmul.f32 %v640, %v659
      %v677 = vmul.f32 %v641, %v659
      %v678 = vmul.f32 %v642, %v659
      %v679 = vmul.f32 %v643, %v659
      %v680 = vmul.f32 %v644, %v659
      %v681 = vmul.f32 %v645, %v659
      %v682 = vmul.f32 %v646, %v659
      %v683 = vmul.f32 %v647, %v659
      %v684 = vmul.f32 %v648, %v659
      %v685 = vmul.f32 %v649, %v659
      %v686 = vmul.f32 %v650, %v659
      %v687 = vmul.f32 %v651, %v659
      %v688 = vmul.f32 %v652, %v659
      %v689 = vmul.f32 %v653, %v659
      %v690 = vmul.f32 %v654, %v659
      %v691 = vmul.f32 %v655, %v659
      %v692 = vadd.f32 %v660, 0.0
      %v693 = vadd.f32 %v661, 0.0
      %v694 = vadd.f32 %v662, 0.0
      %v695 = vadd.f32 %v663, 0.0
      %v696 = vadd.f32 %v664, 0.0
      %v697 = vadd.f32 %v665, 0.0
      %v698 = vadd.f32 %v666, 0.0
      %v699 = vadd.f32 %v667, 0.0
      %v700 = vadd.f32 %v668, 0.0
      %v701 = vadd.f32 %v669, 0.0
      %v702 = vadd.f32 %v670, 0.0
      %v703 = vadd.f32 %v671, 0.0
      %v704 = vadd.f32 %v672, 0.0
      %v705 = vadd.f32 %v673, 0.0
      %v706 = vadd.f32 %v674, 0.0
      %v707 = vadd.f32 %v675, 0.0
      %v708 = vadd.f32 %v676, 0.0
      %v709 = vadd.f32 %v677, 0.0
      %v710 = vadd.f32 %v678, 0.0
      %v711 = vadd.f32 %v679, 0.0
      %v712 = vadd.f32 %v680, 0.0
      %v713 = vadd.f32 %v681, 0.0
      %v714 = vadd.f32 %v682, 0.0
      %v715 = vadd.f32 %v683, 0.0
      %v716 = vadd.f32 %v684, 0.0
      %v717 = vadd.f32 %v685, 0.0
      %v718 = vadd.f32 %v686, 0.0
      %v719 = vadd.f32 %v687, 0.0
      %v720 = vadd.f32 %v688, 0.0
      %v721 = vadd.f32 %v689, 0.0
      %v722 = vadd.f32 %v690, 0.0
      %v723 = vadd.f32 %v691, 0.0
      %v724 = vld [vmem:[#allocation2 + $0x1] sm:$0xff]
      %v725 = vld [vmem:[#allocation2 + $0x9] sm:$0xff]
      %v726 = vld [vmem:[#allocation2 + $0x19] sm:$0xff]
      %v727 = vld [vmem:[#allocation2 + $0x21] sm:$0xff]
      %v728 = vld [vmem:[#allocation2 + $0x31] sm:$0xff]
      %v729 = vld [vmem:[#allocation2 + $0x39] sm:$0xff]
      %v730 = vld [vmem:[#allocation2 + $0x49] sm:$0xff]
      %v731 = vld [vmem:[#allocation2 + $0x51] sm:$0xff]
      %v732 = vld [vmem:[#allocation2 + $0x61] sm:$0xff]
      %v733 = vld [vmem:[#allocation2 + $0x69] sm:$0xff]
      %v734 = vld [vmem:[#allocation2 + $0x79] sm:$0xff]
      %v735 = vld [vmem:[#allocation2 + $0x81] sm:$0xff]
      %v736 = vld [vmem:[#allocation2 + $0x91] sm:$0xff]
      %v737 = vld [vmem:[#allocation2 + $0x99] sm:$0xff]
      %v738 = vld [vmem:[#allocation2 + $0xa9] sm:$0xff]
      %v739 = vld [vmem:[#allocation2 + $0xb1] sm:$0xff]
      %v740 = vld [vmem:[#allocation2 + $0xc1] sm:$0xff]
      %v741 = vld [vmem:[#allocation2 + $0xc9] sm:$0xff]
      %v742 = vld [vmem:[#allocation2 + $0xd9] sm:$0xff]
      %v743 = vld [vmem:[#allocation2 + $0xe1] sm:$0xff]
      %v744 = vld [vmem:[#allocation2 + $0xf1] sm:$0xff]
      %v745 = vld [vmem:[#allocation2 + $0xf9] sm:$0xff]
      %v746 = vld [vmem:[#allocation2 + $0x109] sm:$0xff]
      %v747 = vld [vmem:[#allocation2 + $0x111] sm:$0xff]
      %v748 = vld [vmem:[#allocation2 + $0x121] sm:$0xff]
      %v749 = vld [vmem:[#allocation2 + $0x129] sm:$0xff]
      %v750 = vld [vmem:[#allocation2 + $0x139] sm:$0xff]
      %v751 = vld [vmem:[#allocation2 + $0x141] sm:$0xff]
      %v752 = vld [vmem:[#allocation2 + $0x151] sm:$0xff]
      %v753 = vld [vmem:[#allocation2 + $0x159] sm:$0xff]
      %v754 = vld [vmem:[#allocation2 + $0x169] sm:$0xff]
      %v755 = vld [vmem:[#allocation2 + $0x171] sm:$0xff]
      %v756 = vlaneseq
      %v757 = vshrl.u32 %v756, 7
      %v758 = vsub.s32 1, %v757
      %v759 = vrot.slane %v620, %v758
      %v760 = vmul.f32 %v724, %v759
      %v761 = vmul.f32 %v725, %v759
      %v762 = vmul.f32 %v726, %v759
      %v763 = vmul.f32 %v727, %v759
      %v764 = vmul.f32 %v728, %v759
      %v765 = vmul.f32 %v729, %v759
      %v766 = vmul.f32 %v730, %v759
      %v767 = vmul.f32 %v731, %v759
      %v768 = vmul.f32 %v732, %v759
      %v769 = vmul.f32 %v733, %v759
      %v770 = vmul.f32 %v734, %v759
      %v771 = vmul.f32 %v735, %v759
      %v772 = vmul.f32 %v736, %v759
      %v773 = vmul.f32 %v737, %v759
      %v774 = vmul.f32 %v738, %v759
      %v775 = vmul.f32 %v739, %v759
      %v776 = vmul.f32 %v740, %v759
      %v777 = vmul.f32 %v741, %v759
      %v778 = vmul.f32 %v742, %v759
      %v779 = vmul.f32 %v743, %v759
      %v780 = vmul.f32 %v744, %v759
      %v781 = vmul.f32 %v745, %v759
      %v782 = vmul.f32 %v746, %v759
      %v783 = vmul.f32 %v747, %v759
      %v784 = vmul.f32 %v748, %v759
      %v785 = vmul.f32 %v749, %v759
      %v786 = vmul.f32 %v750, %v759
      %v787 = vmul.f32 %v751, %v759
      %v788 = vmul.f32 %v752, %v759
      %v789 = vmul.f32 %v753, %v759
      %v790 = vmul.f32 %v754, %v759
      %v791 = vmul.f32 %v755, %v759
      %v792 = vadd.f32 %v692, %v760
      %v793 = vadd.f32 %v693, %v761
      %v794 = vadd.f32 %v694, %v762
      %v795 = vadd.f32 %v695, %v763
      %v796 = vadd.f32 %v696, %v764
      %v797 = vadd.f32 %v697, %v765
      %v798 = vadd.f32 %v698, %v766
      %v799 = vadd.f32 %v699, %v767
      %v800 = vadd.f32 %v700, %v768
      %v801 = vadd.f32 %v701, %v769
      %v802 = vadd.f32 %v702, %v770
      %v803 = vadd.f32 %v703, %v771
      %v804 = vadd.f32 %v704, %v772
      %v805 = vadd.f32 %v705, %v773
      %v806 = vadd.f32 %v706, %v774
      %v807 = vadd.f32 %v707, %v775
      %v808 = vadd.f32 %v708, %v776
      %v809 = vadd.f32 %v709, %v777
      %v810 = vadd.f32 %v710, %v778
      %v811 = vadd.f32 %v711, %v779
      %v812 = vadd.f32 %v712, %v780
      %v813 = vadd.f32 %v713, %v781
      %v814 = vadd.f32 %v714, %v782
      %v815 = vadd.f32 %v715, %v783
      %v816 = vadd.f32 %v716, %v784
      %v817 = vadd.f32 %v717, %v785
      %v818 = vadd.f32 %v718, %v786
      %v819 = vadd.f32 %v719, %v787
      %v820 = vadd.f32 %v720, %v788
      %v821 = vadd.f32 %v721, %v789
      %v822 = vadd.f32 %v722, %v790
      %v823 = vadd.f32 %v723, %v791
      %v824 = vld [vmem:[#allocation2 + $0x2] sm:$0xff]
      %v825 = vld [vmem:[#allocation2 + $0xa] sm:$0xff]
      %v826 = vld [vmem:[#allocation2 + $0x1a] sm:$0xff]
      %v827 = vld [vmem:[#allocation2 + $0x22] sm:$0xff]
      %v828 = vld [vmem:[#allocation2 + $0x32] sm:$0xff]
      %v829 = vld [vmem:[#allocation2 + $0x3a] sm:$0xff]
      %v830 = vld [vmem:[#allocation2 + $0x4a] sm:$0xff]
      %v831 = vld [vmem:[#allocation2 + $0x52] sm:$0xff]
      %v832 = vld [vmem:[#allocation2 + $0x62] sm:$0xff]
      %v833 = vld [vmem:[#allocation2 + $0x6a] sm:$0xff]
      %v834 = vld [vmem:[#allocation2 + $0x7a] sm:$0xff]
      %v835 = vld [vmem:[#allocation2 + $0x82] sm:$0xff]
      %v836 = vld [vmem:[#allocation2 + $0x92] sm:$0xff]
      %v837 = vld [vmem:[#allocation2 + $0x9a] sm:$0xff]
      %v838 = vld [vmem:[#allocation2 + $0xaa] sm:$0xff]
      %v839 = vld [vmem:[#allocation2 + $0xb2] sm:$0xff]
      %v840 = vld [vmem:[#allocation2 + $0xc2] sm:$0xff]
      %v841 = vld [vmem:[#allocation2 + $0xca] sm:$0xff]
      %v842 = vld [vmem:[#allocation2 + $0xda] sm:$0xff]
      %v843 = vld [vmem:[#allocation2 + $0xe2] sm:$0xff]
      %v844 = vld [vmem:[#allocation2 + $0xf2] sm:$0xff]
      %v845 = vld [vmem:[#allocation2 + $0xfa] sm:$0xff]
      %v846 = vld [vmem:[#allocation2 + $0x10a] sm:$0xff]
      %v847 = vld [vmem:[#allocation2 + $0x112] sm:$0xff]
      %v848 = vld [vmem:[#allocation2 + $0x122] sm:$0xff]
      %v849 = vld [vmem:[#allocation2 + $0x12a] sm:$0xff]
      %v850 = vld [vmem:[#allocation2 + $0x13a] sm:$0xff]
      %v851 = vld [vmem:[#allocation2 + $0x142] sm:$0xff]
      %v852 = vld [vmem:[#allocation2 + $0x152] sm:$0xff]
      %v853 = vld [vmem:[#allocation2 + $0x15a] sm:$0xff]
      %v854 = vld [vmem:[#allocation2 + $0x16a] sm:$0xff]
      %v855 = vld [vmem:[#allocation2 + $0x172] sm:$0xff]
      %v856 = vlaneseq
      %v857 = vshrl.u32 %v856, 7
      %v858 = vsub.s32 2, %v857
      %v859 = vrot.slane %v620, %v858
      %v860 = vmul.f32 %v824, %v859
      %v861 = vmul.f32 %v825, %v859
      %v862 = vmul.f32 %v826, %v859
      %v863 = vmul.f32 %v827, %v859
      %v864 = vmul.f32 %v828, %v859
      %v865 = vmul.f32 %v829, %v859
      %v866 = vmul.f32 %v830, %v859
      %v867 = vmul.f32 %v831, %v859
      %v868 = vmul.f32 %v832, %v859
      %v869 = vmul.f32 %v833, %v859
      %v870 = vmul.f32 %v834, %v859
      %v871 = vmul.f32 %v835, %v859
      %v872 = vmul.f32 %v836, %v859
      %v873 = vmul.f32 %v837, %v859
      %v874 = vmul.f32 %v838, %v859
      %v875 = vmul.f32 %v839, %v859
      %v876 = vmul.f32 %v840, %v859
      %v877 = vmul.f32 %v841, %v859
      %v878 = vmul.f32 %v842, %v859
      %v879 = vmul.f32 %v843, %v859
      %v880 = vmul.f32 %v844, %v859
      %v881 = vmul.f32 %v845, %v859
      %v882 = vmul.f32 %v846, %v859
      %v883 = vmul.f32 %v847, %v859
      %v884 = vmul.f32 %v848, %v859
      %v885 = vmul.f32 %v849, %v859
      %v886 = vmul.f32 %v850, %v859
      %v887 = vmul.f32 %v851, %v859
      %v888 = vmul.f32 %v852, %v859
      %v889 = vmul.f32 %v853, %v859
      %v890 = vmul.f32 %v854, %v859
      %v891 = vmul.f32 %v855, %v859
      %v892 = vadd.f32 %v792, %v860
      %v893 = vadd.f32 %v793, %v861
      %v894 = vadd.f32 %v794, %v862
      %v895 = vadd.f32 %v795, %v863
      %v896 = vadd.f32 %v796, %v864
      %v897 = vadd.f32 %v797, %v865
      %v898 = vadd.f32 %v798, %v866
      %v899 = vadd.f32 %v799, %v867
      %v900 = vadd.f32 %v800, %v868
      %v901 = vadd.f32 %v801, %v869
      %v902 = vadd.f32 %v802, %v870
      %v903 = vadd.f32 %v803, %v871
      %v904 = vadd.f32 %v804, %v872
      %v905 = vadd.f32 %v805, %v873
      %v906 = vadd.f32 %v806, %v874
      %v907 = vadd.f32 %v807, %v875
      %v908 = vadd.f32 %v808, %v876
      %v909 = vadd.f32 %v809, %v877
      %v910 = vadd.f32 %v810, %v878
      %v911 = vadd.f32 %v811, %v879
      %v912 = vadd.f32 %v812, %v880
      %v913 = vadd.f32 %v813, %v881
      %v914 = vadd.f32 %v814, %v882
      %v915 = vadd.f32 %v815, %v883
      %v916 = vadd.f32 %v816, %v884
      %v917 = vadd.f32 %v817, %v885
      %v918 = vadd.f32 %v818, %v886
      %v919 = vadd.f32 %v819, %v887
      %v920 = vadd.f32 %v820, %v888
      %v921 = vadd.f32 %v821, %v889
      %v922 = vadd.f32 %v822, %v890
      %v923 = vadd.f32 %v823, %v891
      %v924 = vld [vmem:[%s586] sm:$0xff]
      %v925 = vld [vmem:[%s586 + $0x8] sm:$0xff]
      %v926 = vld [vmem:[%s586 + $0x18] sm:$0xff]
      %v927 = vld [vmem:[%s586 + $0x20] sm:$0xff]
      %v928 = vld [vmem:[%s586 + $0x30] sm:$0xff]
      %v929 = vld [vmem:[%s586 + $0x38] sm:$0xff]
      %v930 = vld [vmem:[%s586 + $0x48] sm:$0xff]
      %v931 = vld [vmem:[%s586 + $0x50] sm:$0xff]
      %v932 = vld [vmem:[%s586 + $0x60] sm:$0xff]
      %v933 = vld [vmem:[%s586 + $0x68] sm:$0xff]
      %v934 = vld [vmem:[%s586 + $0x78] sm:$0xff]
      %v935 = vld [vmem:[%s586 + $0x80] sm:$0xff]
      %v936 = vld [vmem:[%s586 + $0x90] sm:$0xff]
      %v937 = vld [vmem:[%s586 + $0x98] sm:$0xff]
      %v938 = vld [vmem:[%s586 + $0xa8] sm:$0xff]
      %v939 = vld [vmem:[%s586 + $0xb0] sm:$0xff]
      %v940 = vld [vmem:[%s586 + $0xc0] sm:$0xff]
      %v941 = vld [vmem:[%s586 + $0xc8] sm:$0xff]
      %v942 = vld [vmem:[%s586 + $0xd8] sm:$0xff]
      %v943 = vld [vmem:[%s586 + $0xe0] sm:$0xff]
      %v944 = vld [vmem:[%s586 + $0xf0] sm:$0xff]
      %v945 = vld [vmem:[%s586 + $0xf8] sm:$0xff]
      %v946 = vld [vmem:[%s586 + $0x108] sm:$0xff]
      %v947 = vld [vmem:[%s586 + $0x110] sm:$0xff]
      %v948 = vld [vmem:[%s586 + $0x120] sm:$0xff]
      %v949 = vld [vmem:[%s586 + $0x128] sm:$0xff]
      %v950 = vld [vmem:[%s586 + $0x138] sm:$0xff]
      %v951 = vld [vmem:[%s586 + $0x140] sm:$0xff]
      %v952 = vld [vmem:[%s586 + $0x150] sm:$0xff]
      %v953 = vld [vmem:[%s586 + $0x158] sm:$0xff]
      %v954 = vld [vmem:[%s586 + $0x168] sm:$0xff]
      %v955 = vld [vmem:[%s586 + $0x170] sm:$0xff]
      %v956 = vlaneseq
      %v957 = vshrl.u32 %v956, 7
      %v958 = vsub.s32 0, %v957
      %v959 = vrot.slane %v621, %v958
      %v960 = vmul.f32 %v924, %v959
      %v961 = vmul.f32 %v925, %v959
      %v962 = vmul.f32 %v926, %v959
      %v963 = vmul.f32 %v927, %v959
      %v964 = vmul.f32 %v928, %v959
      %v965 = vmul.f32 %v929, %v959
      %v966 = vmul.f32 %v930, %v959
      %v967 = vmul.f32 %v931, %v959
      %v968 = vmul.f32 %v932, %v959
      %v969 = vmul.f32 %v933, %v959
      %v970 = vmul.f32 %v934, %v959
      %v971 = vmul.f32 %v935, %v959
      %v972 = vmul.f32 %v936, %v959
      %v973 = vmul.f32 %v937, %v959
      %v974 = vmul.f32 %v938, %v959
      %v975 = vmul.f32 %v939, %v959
      %v976 = vmul.f32 %v940, %v959
      %v977 = vmul.f32 %v941, %v959
      %v978 = vmul.f32 %v942, %v959
      %v979 = vmul.f32 %v943, %v959
      %v980 = vmul.f32 %v944, %v959
      %v981 = vmul.f32 %v945, %v959
      %v982 = vmul.f32 %v946, %v959
      %v983 = vmul.f32 %v947, %v959
      %v984 = vmul.f32 %v948, %v959
      %v985 = vmul.f32 %v949, %v959
      %v986 = vmul.f32 %v950, %v959
      %v987 = vmul.f32 %v951, %v959
      %v988 = vmul.f32 %v952, %v959
      %v989 = vmul.f32 %v953, %v959
      %v990 = vmul.f32 %v954, %v959
      %v991 = vmul.f32 %v955, %v959
      %v992 = vadd.f32 %v892, %v960
      %v993 = vadd.f32 %v893, %v961
      %v994 = vadd.f32 %v894, %v962
      %v995 = vadd.f32 %v895, %v963
      %v996 = vadd.f32 %v896, %v964
      %v997 = vadd.f32 %v897, %v965
      %v998 = vadd.f32 %v898, %v966
      %v999 = vadd.f32 %v899, %v967
      %v1000 = vadd.f32 %v900, %v968
      %v1001 = vadd.f32 %v901, %v969
      %v1002 = vadd.f32 %v902, %v970
      %v1003 = vadd.f32 %v903, %v971
      %v1004 = vadd.f32 %v904, %v972
      %v1005 = vadd.f32 %v905, %v973
      %v1006 = vadd.f32 %v906, %v974
      %v1007 = vadd.f32 %v907, %v975
      %v1008 = vadd.f32 %v908, %v976
      %v1009 = vadd.f32 %v909, %v977
      %v1010 = vadd.f32 %v910, %v978
      %v1011 = vadd.f32 %v911, %v979
      %v1012 = vadd.f32 %v912, %v980
      %v1013 = vadd.f32 %v913, %v981
      %v1014 = vadd.f32 %v914, %v982
      %v1015 = vadd.f32 %v915, %v983
      %v1016 = vadd.f32 %v916, %v984
      %v1017 = vadd.f32 %v917, %v985
      %v1018 = vadd.f32 %v918, %v986
      %v1019 = vadd.f32 %v919, %v987
      %v1020 = vadd.f32 %v920, %v988
      %v1021 = vadd.f32 %v921, %v989
      %v1022 = vadd.f32 %v922, %v990
      %v1023 = vadd.f32 %v923, %v991
      %v1024 = vld [vmem:[%s586 + $0x1] sm:$0xff]
      %v1025 = vld [vmem:[%s586 + $0x9] sm:$0xff]
      %v1026 = vld [vmem:[%s586 + $0x19] sm:$0xff]
      %v1027 = vld [vmem:[%s586 + $0x21] sm:$0xff]
      %v1028 = vld [vmem:[%s586 + $0x31] sm:$0xff]
      %v1029 = vld [vmem:[%s586 + $0x39] sm:$0xff]
      %v1030 = vld [vmem:[%s586 + $0x49] sm:$0xff]
      %v1031 = vld [vmem:[%s586 + $0x51] sm:$0xff]
      %v1032 = vld [vmem:[%s586 + $0x61] sm:$0xff]
      %v1033 = vld [vmem:[%s586 + $0x69] sm:$0xff]
      %v1034 = vld [vmem:[%s586 + $0x79] sm:$0xff]
      %v1035 = vld [vmem:[%s586 + $0x81] sm:$0xff]
      %v1036 = vld [vmem:[%s586 + $0x91] sm:$0xff]
      %v1037 = vld [vmem:[%s586 + $0x99] sm:$0xff]
      %v1038 = vld [vmem:[%s586 + $0xa9] sm:$0xff]
      %v1039 = vld [vmem:[%s586 + $0xb1] sm:$0xff]
      %v1040 = vld [vmem:[%s586 + $0xc1] sm:$0xff]
      %v1041 = vld [vmem:[%s586 + $0xc9] sm:$0xff]
      %v1042 = vld [vmem:[%s586 + $0xd9] sm:$0xff]
      %v1043 = vld [vmem:[%s586 + $0xe1] sm:$0xff]
      %v1044 = vld [vmem:[%s586 + $0xf1] sm:$0xff]
      %v1045 = vld [vmem:[%s586 + $0xf9] sm:$0xff]
      %v1046 = vld [vmem:[%s586 + $0x109] sm:$0xff]
      %v1047 = vld [vmem:[%s586 + $0x111] sm:$0xff]
      %v1048 = vld [vmem:[%s586 + $0x121] sm:$0xff]
      %v1049 = vld [vmem:[%s586 + $0x129] sm:$0xff]
      %v1050 = vld [vmem:[%s586 + $0x139] sm:$0xff]
      %v1051 = vld [vmem:[%s586 + $0x141] sm:$0xff]
      %v1052 = vld [vmem:[%s586 + $0x151] sm:$0xff]
      %v1053 = vld [vmem:[%s586 + $0x159] sm:$0xff]
      %v1054 = vld [vmem:[%s586 + $0x169] sm:$0xff]
      %v1055 = vld [vmem:[%s586 + $0x171] sm:$0xff]
      %v1056 = vlaneseq
      %v1057 = vshrl.u32 %v1056, 7
      %v1058 = vsub.s32 1, %v1057
      %v1059 = vrot.slane %v621, %v1058
      %v1060 = vmul.f32 %v1024, %v1059
      %v1061 = vmul.f32 %v1025, %v1059
      %v1062 = vmul.f32 %v1026, %v1059
      %v1063 = vmul.f32 %v1027, %v1059
      %v1064 = vmul.f32 %v1028, %v1059
      %v1065 = vmul.f32 %v1029, %v1059
      %v1066 = vmul.f32 %v1030, %v1059
      %v1067 = vmul.f32 %v1031, %v1059
      %v1068 = vmul.f32 %v1032, %v1059
      %v1069 = vmul.f32 %v1033, %v1059
      %v1070 = vmul.f32 %v1034, %v1059
      %v1071 = vmul.f32 %v1035, %v1059
      %v1072 = vmul.f32 %v1036, %v1059
      %v1073 = vmul.f32 %v1037, %v1059
      %v1074 = vmul.f32 %v1038, %v1059
      %v1075 = vmul.f32 %v1039, %v1059
      %v1076 = vmul.f32 %v1040, %v1059
      %v1077 = vmul.f32 %v1041, %v1059
      %v1078 = vmul.f32 %v1042, %v1059
      %v1079 = vmul.f32 %v1043, %v1059
      %v1080 = vmul.f32 %v1044, %v1059
      %v1081 = vmul.f32 %v1045, %v1059
      %v1082 = vmul.f32 %v1046, %v1059
      %v1083 = vmul.f32 %v1047, %v1059
      %v1084 = vmul.f32 %v1048, %v1059
      %v1085 = vmul.f32 %v1049, %v1059
      %v1086 = vmul.f32 %v1050, %v1059
      %v1087 = vmul.f32 %v1051, %v1059
      %v1088 = vmul.f32 %v1052, %v1059
      %v1089 = vmul.f32 %v1053, %v1059
      %v1090 = vmul.f32 %v1054, %v1059
      %v1091 = vmul.f32 %v1055, %v1059
      %v1092 = vadd.f32 %v992, %v1060
      %v1093 = vadd.f32 %v993, %v1061
      %v1094 = vadd.f32 %v994, %v1062
      %v1095 = vadd.f32 %v995, %v1063
      %v1096 = vadd.f32 %v996, %v1064
      %v1097 = vadd.f32 %v997, %v1065
      %v1098 = vadd.f32 %v998, %v1066
      %v1099 = vadd.f32 %v999, %v1067
      %v1100 = vadd.f32 %v1000, %v1068
      %v1101 = vadd.f32 %v1001, %v1069
      %v1102 = vadd.f32 %v1002, %v1070
      %v1103 = vadd.f32 %v1003, %v1071
      %v1104 = vadd.f32 %v1004, %v1072
      %v1105 = vadd.f32 %v1005, %v1073
      %v1106 = vadd.f32 %v1006, %v1074
      %v1107 = vadd.f32 %v1007, %v1075
      %v1108 = vadd.f32 %v1008, %v1076
      %v1109 = vadd.f32 %v1009, %v1077
      %v1110 = vadd.f32 %v1010, %v1078
      %v1111 = vadd.f32 %v1011, %v1079
      %v1112 = vadd.f32 %v1012, %v1080
      %v1113 = vadd.f32 %v1013, %v1081
      %v1114 = vadd.f32 %v1014, %v1082
      %v1115 = vadd.f32 %v1015, %v1083
      %v1116 = vadd.f32 %v1016, %v1084
      %v1117 = vadd.f32 %v1017, %v1085
      %v1118 = vadd.f32 %v1018, %v1086
      %v1119 = vadd.f32 %v1019, %v1087
      %v1120 = vadd.f32 %v1020, %v1088
      %v1121 = vadd.f32 %v1021, %v1089
      %v1122 = vadd.f32 %v1022, %v1090
      %v1123 = vadd.f32 %v1023, %v1091
      %v1124 = vld [vmem:[%s586 + $0x2] sm:$0xff]
      %v1125 = vld [vmem:[%s586 + $0xa] sm:$0xff]
      %v1126 = vld [vmem:[%s586 + $0x1a] sm:$0xff]
      %v1127 = vld [vmem:[%s586 + $0x22] sm:$0xff]
      %v1128 = vld [vmem:[%s586 + $0x32] sm:$0xff]
      %v1129 = vld [vmem:[%s586 + $0x3a] sm:$0xff]
      %v1130 = vld [vmem:[%s586 + $0x4a] sm:$0xff]
      %v1131 = vld [vmem:[%s586 + $0x52] sm:$0xff]
      %v1132 = vld [vmem:[%s586 + $0x62] sm:$0xff]
      %v1133 = vld [vmem:[%s586 + $0x6a] sm:$0xff]
      %v1134 = vld [vmem:[%s586 + $0x7a] sm:$0xff]
      %v1135 = vld [vmem:[%s586 + $0x82] sm:$0xff]
      %v1136 = vld [vmem:[%s586 + $0x92] sm:$0xff]
      %v1137 = vld [vmem:[%s586 + $0x9a] sm:$0xff]
      %v1138 = vld [vmem:[%s586 + $0xaa] sm:$0xff]
      %v1139 = vld [vmem:[%s586 + $0xb2] sm:$0xff]
      %v1140 = vld [vmem:[%s586 + $0xc2] sm:$0xff]
      %v1141 = vld [vmem:[%s586 + $0xca] sm:$0xff]
      %v1142 = vld [vmem:[%s586 + $0xda] sm:$0xff]
      %v1143 = vld [vmem:[%s586 + $0xe2] sm:$0xff]
      %v1144 = vld [vmem:[%s586 + $0xf2] sm:$0xff]
      %v1145 = vld [vmem:[%s586 + $0xfa] sm:$0xff]
      %v1146 = vld [vmem:[%s586 + $0x10a] sm:$0xff]
      %v1147 = vld [vmem:[%s586 + $0x112] sm:$0xff]
      %v1148 = vld [vmem:[%s586 + $0x122] sm:$0xff]
      %v1149 = vld [vmem:[%s586 + $0x12a] sm:$0xff]
      %v1150 = vld [vmem:[%s586 + $0x13a] sm:$0xff]
      %v1151 = vld [vmem:[%s586 + $0x142] sm:$0xff]
      %v1152 = vld [vmem:[%s586 + $0x152] sm:$0xff]
      %v1153 = vld [vmem:[%s586 + $0x15a] sm:$0xff]
      %v1154 = vld [vmem:[%s586 + $0x16a] sm:$0xff]
      %v1155 = vld [vmem:[%s586 + $0x172] sm:$0xff]
      %v1156 = vlaneseq
      %v1157 = vshrl.u32 %v1156, 7
      %v1158 = vsub.s32 2, %v1157
      %v1159 = vrot.slane %v621, %v1158
      %v1160 = vmul.f32 %v1124, %v1159
      %v1161 = vmul.f32 %v1125, %v1159
      %v1162 = vmul.f32 %v1126, %v1159
      %v1163 = vmul.f32 %v1127, %v1159
      %v1164 = vmul.f32 %v1128, %v1159
      %v1165 = vmul.f32 %v1129, %v1159
      %v1166 = vmul.f32 %v1130, %v1159
      %v1167 = vmul.f32 %v1131, %v1159
      %v1168 = vmul.f32 %v1132, %v1159
      %v1169 = vmul.f32 %v1133, %v1159
      %v1170 = vmul.f32 %v1134, %v1159
      %v1171 = vmul.f32 %v1135, %v1159
      %v1172 = vmul.f32 %v1136, %v1159
      %v1173 = vmul.f32 %v1137, %v1159
      %v1174 = vmul.f32 %v1138, %v1159
      %v1175 = vmul.f32 %v1139, %v1159
      %v1176 = vmul.f32 %v1140, %v1159
      %v1177 = vmul.f32 %v1141, %v1159
      %v1178 = vmul.f32 %v1142, %v1159
      %v1179 = vmul.f32 %v1143, %v1159
      %v1180 = vmul.f32 %v1144, %v1159
      %v1181 = vmul.f32 %v1145, %v1159
      %v1182 = vmul.f32 %v1146, %v1159
      %v1183 = vmul.f32 %v1147, %v1159
      %v1184 = vmul.f32 %v1148, %v1159
      %v1185 = vmul.f32 %v1149, %v1159
      %v1186 = vmul.f32 %v1150, %v1159
      %v1187 = vmul.f32 %v1151, %v1159
      %v1188 = vmul.f32 %v1152, %v1159
      %v1189 = vmul.f32 %v1153, %v1159
      %v1190 = vmul.f32 %v1154, %v1159
      %v1191 = vmul.f32 %v1155, %v1159
      %v1192 = vadd.f32 %v1092, %v1160
      %v1193 = vadd.f32 %v1093, %v1161
      %v1194 = vadd.f32 %v1094, %v1162
      %v1195 = vadd.f32 %v1095, %v1163
      %v1196 = vadd.f32 %v1096, %v1164
      %v1197 = vadd.f32 %v1097, %v1165
      %v1198 = vadd.f32 %v1098, %v1166
      %v1199 = vadd.f32 %v1099, %v1167
      %v1200 = vadd.f32 %v1100, %v1168
      %v1201 = vadd.f32 %v1101, %v1169
      %v1202 = vadd.f32 %v1102, %v1170
      %v1203 = vadd.f32 %v1103, %v1171
      %v1204 = vadd.f32 %v1104, %v1172
      %v1205 = vadd.f32 %v1105, %v1173
      %v1206 = vadd.f32 %v1106, %v1174
      %v1207 = vadd.f32 %v1107, %v1175
      %v1208 = vadd.f32 %v1108, %v1176
      %v1209 = vadd.f32 %v1109, %v1177
      %v1210 = vadd.f32 %v1110, %v1178
      %v1211 = vadd.f32 %v1111, %v1179
      %v1212 = vadd.f32 %v1112, %v1180
      %v1213 = vadd.f32 %v1113, %v1181
      %v1214 = vadd.f32 %v1114, %v1182
      %v1215 = vadd.f32 %v1115, %v1183
      %v1216 = vadd.f32 %v1116, %v1184
      %v1217 = vadd.f32 %v1117, %v1185
      %v1218 = vadd.f32 %v1118, %v1186
      %v1219 = vadd.f32 %v1119, %v1187
      %v1220 = vadd.f32 %v1120, %v1188
      %v1221 = vadd.f32 %v1121, %v1189
      %v1222 = vadd.f32 %v1122, %v1190
      %v1223 = vadd.f32 %v1123, %v1191
      %s1224 = scalar_lea.vmem [#allocation2], 48
      %v1225 = vld [vmem:[%s1224] sm:$0xff]
      %v1226 = vld [vmem:[%s1224 + $0x8] sm:$0xff]
      %v1227 = vld [vmem:[%s1224 + $0x18] sm:$0xff]
      %v1228 = vld [vmem:[%s1224 + $0x20] sm:$0xff]
      %v1229 = vld [vmem:[%s1224 + $0x30] sm:$0xff]
      %v1230 = vld [vmem:[%s1224 + $0x38] sm:$0xff]
      %v1231 = vld [vmem:[%s1224 + $0x48] sm:$0xff]
      %v1232 = vld [vmem:[%s1224 + $0x50] sm:$0xff]
      %v1233 = vld [vmem:[%s1224 + $0x60] sm:$0xff]
      %v1234 = vld [vmem:[%s1224 + $0x68] sm:$0xff]
      %v1235 = vld [vmem:[%s1224 + $0x78] sm:$0xff]
      %v1236 = vld [vmem:[%s1224 + $0x80] sm:$0xff]
      %v1237 = vld [vmem:[%s1224 + $0x90] sm:$0xff]
      %v1238 = vld [vmem:[%s1224 + $0x98] sm:$0xff]
      %v1239 = vld [vmem:[%s1224 + $0xa8] sm:$0xff]
      %v1240 = vld [vmem:[%s1224 + $0xb0] sm:$0xff]
      %v1241 = vld [vmem:[%s1224 + $0xc0] sm:$0xff]
      %v1242 = vld [vmem:[%s1224 + $0xc8] sm:$0xff]
      %v1243 = vld [vmem:[%s1224 + $0xd8] sm:$0xff]
      %v1244 = vld [vmem:[%s1224 + $0xe0] sm:$0xff]
      %v1245 = vld [vmem:[%s1224 + $0xf0] sm:$0xff]
      %v1246 = vld [vmem:[%s1224 + $0xf8] sm:$0xff]
      %v1247 = vld [vmem:[%s1224 + $0x108] sm:$0xff]
      %v1248 = vld [vmem:[%s1224 + $0x110] sm:$0xff]
      %v1249 = vld [vmem:[%s1224 + $0x120] sm:$0xff]
      %v1250 = vld [vmem:[%s1224 + $0x128] sm:$0xff]
      %v1251 = vld [vmem:[%s1224 + $0x138] sm:$0xff]
      %v1252 = vld [vmem:[%s1224 + $0x140] sm:$0xff]
      %v1253 = vld [vmem:[%s1224 + $0x150] sm:$0xff]
      %v1254 = vld [vmem:[%s1224 + $0x158] sm:$0xff]
      %v1255 = vld [vmem:[%s1224 + $0x168] sm:$0xff]
      %v1256 = vld [vmem:[%s1224 + $0x170] sm:$0xff]
      %v1257 = vlaneseq
      %v1258 = vshrl.u32 %v1257, 7
      %v1259 = vsub.s32 0, %v1258
      %v1260 = vrot.slane %v622, %v1259
      %v1261 = vmul.f32 %v1225, %v1260
      %v1262 = vmul.f32 %v1226, %v1260
      %v1263 = vmul.f32 %v1227, %v1260
      %v1264 = vmul.f32 %v1228, %v1260
      %v1265 = vmul.f32 %v1229, %v1260
      %v1266 = vmul.f32 %v1230, %v1260
      %v1267 = vmul.f32 %v1231, %v1260
      %v1268 = vmul.f32 %v1232, %v1260
      %v1269 = vmul.f32 %v1233, %v1260
      %v1270 = vmul.f32 %v1234, %v1260
      %v1271 = vmul.f32 %v1235, %v1260
      %v1272 = vmul.f32 %v1236, %v1260
      %v1273 = vmul.f32 %v1237, %v1260
      %v1274 = vmul.f32 %v1238, %v1260
      %v1275 = vmul.f32 %v1239, %v1260
      %v1276 = vmul.f32 %v1240, %v1260
      %v1277 = vmul.f32 %v1241, %v1260
      %v1278 = vmul.f32 %v1242, %v1260
      %v1279 = vmul.f32 %v1243, %v1260
      %v1280 = vmul.f32 %v1244, %v1260
      %v1281 = vmul.f32 %v1245, %v1260
      %v1282 = vmul.f32 %v1246, %v1260
      %v1283 = vmul.f32 %v1247, %v1260
      %v1284 = vmul.f32 %v1248, %v1260
      %v1285 = vmul.f32 %v1249, %v1260
      %v1286 = vmul.f32 %v1250, %v1260
      %v1287 = vmul.f32 %v1251, %v1260
      %v1288 = vmul.f32 %v1252, %v1260
      %v1289 = vmul.f32 %v1253, %v1260
      %v1290 = vmul.f32 %v1254, %v1260
      %v1291 = vmul.f32 %v1255, %v1260
      %v1292 = vmul.f32 %v1256, %v1260
      %v1293 = vadd.f32 %v1192, %v1261
      %v1294 = vadd.f32 %v1193, %v1262
      %v1295 = vadd.f32 %v1194, %v1263
      %v1296 = vadd.f32 %v1195, %v1264
      %v1297 = vadd.f32 %v1196, %v1265
      %v1298 = vadd.f32 %v1197, %v1266
      %v1299 = vadd.f32 %v1198, %v1267
      %v1300 = vadd.f32 %v1199, %v1268
      %v1301 = vadd.f32 %v1200, %v1269
      %v1302 = vadd.f32 %v1201, %v1270
      %v1303 = vadd.f32 %v1202, %v1271
      %v1304 = vadd.f32 %v1203, %v1272
      %v1305 = vadd.f32 %v1204, %v1273
      %v1306 = vadd.f32 %v1205, %v1274
      %v1307 = vadd.f32 %v1206, %v1275
      %v1308 = vadd.f32 %v1207, %v1276
      %v1309 = vadd.f32 %v1208, %v1277
      %v1310 = vadd.f32 %v1209, %v1278
      %v1311 = vadd.f32 %v1210, %v1279
      %v1312 = vadd.f32 %v1211, %v1280
      %v1313 = vadd.f32 %v1212, %v1281
      %v1314 = vadd.f32 %v1213, %v1282
      %v1315 = vadd.f32 %v1214, %v1283
      %v1316 = vadd.f32 %v1215, %v1284
      %v1317 = vadd.f32 %v1216, %v1285
      %v1318 = vadd.f32 %v1217, %v1286
      %v1319 = vadd.f32 %v1218, %v1287
      %v1320 = vadd.f32 %v1219, %v1288
      %v1321 = vadd.f32 %v1220, %v1289
      %v1322 = vadd.f32 %v1221, %v1290
      %v1323 = vadd.f32 %v1222, %v1291
      %v1324 = vadd.f32 %v1223, %v1292
      %v1325 = vld [vmem:[%s1224 + $0x1] sm:$0xff]
      %v1326 = vld [vmem:[%s1224 + $0x9] sm:$0xff]
      %v1327 = vld [vmem:[%s1224 + $0x19] sm:$0xff]
      %v1328 = vld [vmem:[%s1224 + $0x21] sm:$0xff]
      %v1329 = vld [vmem:[%s1224 + $0x31] sm:$0xff]
      %v1330 = vld [vmem:[%s1224 + $0x39] sm:$0xff]
      %v1331 = vld [vmem:[%s1224 + $0x49] sm:$0xff]
      %v1332 = vld [vmem:[%s1224 + $0x51] sm:$0xff]
      %v1333 = vld [vmem:[%s1224 + $0x61] sm:$0xff]
      %v1334 = vld [vmem:[%s1224 + $0x69] sm:$0xff]
      %v1335 = vld [vmem:[%s1224 + $0x79] sm:$0xff]
      %v1336 = vld [vmem:[%s1224 + $0x81] sm:$0xff]
      %v1337 = vld [vmem:[%s1224 + $0x91] sm:$0xff]
      %v1338 = vld [vmem:[%s1224 + $0x99] sm:$0xff]
      %v1339 = vld [vmem:[%s1224 + $0xa9] sm:$0xff]
      %v1340 = vld [vmem:[%s1224 + $0xb1] sm:$0xff]
      %v1341 = vld [vmem:[%s1224 + $0xc1] sm:$0xff]
      %v1342 = vld [vmem:[%s1224 + $0xc9] sm:$0xff]
      %v1343 = vld [vmem:[%s1224 + $0xd9] sm:$0xff]
      %v1344 = vld [vmem:[%s1224 + $0xe1] sm:$0xff]
      %v1345 = vld [vmem:[%s1224 + $0xf1] sm:$0xff]
      %v1346 = vld [vmem:[%s1224 + $0xf9] sm:$0xff]
      %v1347 = vld [vmem:[%s1224 + $0x109] sm:$0xff]
      %v1348 = vld [vmem:[%s1224 + $0x111] sm:$0xff]
      %v1349 = vld [vmem:[%s1224 + $0x121] sm:$0xff]
      %v1350 = vld [vmem:[%s1224 + $0x129] sm:$0xff]
      %v1351 = vld [vmem:[%s1224 + $0x139] sm:$0xff]
      %v1352 = vld [vmem:[%s1224 + $0x141] sm:$0xff]
      %v1353 = vld [vmem:[%s1224 + $0x151] sm:$0xff]
      %v1354 = vld [vmem:[%s1224 + $0x159] sm:$0xff]
      %v1355 = vld [vmem:[%s1224 + $0x169] sm:$0xff]
      %v1356 = vld [vmem:[%s1224 + $0x171] sm:$0xff]
      %v1357 = vlaneseq
      %v1358 = vshrl.u32 %v1357, 7
      %v1359 = vsub.s32 1, %v1358
      %v1360 = vrot.slane %v622, %v1359
      %v1361 = vmul.f32 %v1325, %v1360
      %v1362 = vmul.f32 %v1326, %v1360
      %v1363 = vmul.f32 %v1327, %v1360
      %v1364 = vmul.f32 %v1328, %v1360
      %v1365 = vmul.f32 %v1329, %v1360
      %v1366 = vmul.f32 %v1330, %v1360
      %v1367 = vmul.f32 %v1331, %v1360
      %v1368 = vmul.f32 %v1332, %v1360
      %v1369 = vmul.f32 %v1333, %v1360
      %v1370 = vmul.f32 %v1334, %v1360
      %v1371 = vmul.f32 %v1335, %v1360
      %v1372 = vmul.f32 %v1336, %v1360
      %v1373 = vmul.f32 %v1337, %v1360
      %v1374 = vmul.f32 %v1338, %v1360
      %v1375 = vmul.f32 %v1339, %v1360
      %v1376 = vmul.f32 %v1340, %v1360
      %v1377 = vmul.f32 %v1341, %v1360
      %v1378 = vmul.f32 %v1342, %v1360
      %v1379 = vmul.f32 %v1343, %v1360
      %v1380 = vmul.f32 %v1344, %v1360
      %v1381 = vmul.f32 %v1345, %v1360
      %v1382 = vmul.f32 %v1346, %v1360
      %v1383 = vmul.f32 %v1347, %v1360
      %v1384 = vmul.f32 %v1348, %v1360
      %v1385 = vmul.f32 %v1349, %v1360
      %v1386 = vmul.f32 %v1350, %v1360
      %v1387 = vmul.f32 %v1351, %v1360
      %v1388 = vmul.f32 %v1352, %v1360
      %v1389 = vmul.f32 %v1353, %v1360
      %v1390 = vmul.f32 %v1354, %v1360
      %v1391 = vmul.f32 %v1355, %v1360
      %v1392 = vmul.f32 %v1356, %v1360
      %v1393 = vadd.f32 %v1293, %v1361
      %v1394 = vadd.f32 %v1294, %v1362
      %v1395 = vadd.f32 %v1295, %v1363
      %v1396 = vadd.f32 %v1296, %v1364
      %v1397 = vadd.f32 %v1297, %v1365
      %v1398 = vadd.f32 %v1298, %v1366
      %v1399 = vadd.f32 %v1299, %v1367
      %v1400 = vadd.f32 %v1300, %v1368
      %v1401 = vadd.f32 %v1301, %v1369
      %v1402 = vadd.f32 %v1302, %v1370
      %v1403 = vadd.f32 %v1303, %v1371
      %v1404 = vadd.f32 %v1304, %v1372
      %v1405 = vadd.f32 %v1305, %v1373
      %v1406 = vadd.f32 %v1306, %v1374
      %v1407 = vadd.f32 %v1307, %v1375
      %v1408 = vadd.f32 %v1308, %v1376
      %v1409 = vadd.f32 %v1309, %v1377
      %v1410 = vadd.f32 %v1310, %v1378
      %v1411 = vadd.f32 %v1311, %v1379
      %v1412 = vadd.f32 %v1312, %v1380
      %v1413 = vadd.f32 %v1313, %v1381
      %v1414 = vadd.f32 %v1314, %v1382
      %v1415 = vadd.f32 %v1315, %v1383
      %v1416 = vadd.f32 %v1316, %v1384
      %v1417 = vadd.f32 %v1317, %v1385
      %v1418 = vadd.f32 %v1318, %v1386
      %v1419 = vadd.f32 %v1319, %v1387
      %v1420 = vadd.f32 %v1320, %v1388
      %v1421 = vadd.f32 %v1321, %v1389
      %v1422 = vadd.f32 %v1322, %v1390
      %v1423 = vadd.f32 %v1323, %v1391
      %v1424 = vadd.f32 %v1324, %v1392
      %v1425 = vld [vmem:[%s1224 + $0x2] sm:$0xff]
      %v1426 = vld [vmem:[%s1224 + $0xa] sm:$0xff]
      %v1427 = vld [vmem:[%s1224 + $0x1a] sm:$0xff]
      %v1428 = vld [vmem:[%s1224 + $0x22] sm:$0xff]
      %v1429 = vld [vmem:[%s1224 + $0x32] sm:$0xff]
      %v1430 = vld [vmem:[%s1224 + $0x3a] sm:$0xff]
      %v1431 = vld [vmem:[%s1224 + $0x4a] sm:$0xff]
      %v1432 = vld [vmem:[%s1224 + $0x52] sm:$0xff]
      %v1433 = vld [vmem:[%s1224 + $0x62] sm:$0xff]
      %v1434 = vld [vmem:[%s1224 + $0x6a] sm:$0xff]
      %v1435 = vld [vmem:[%s1224 + $0x7a] sm:$0xff]
      %v1436 = vld [vmem:[%s1224 + $0x82] sm:$0xff]
      %v1437 = vld [vmem:[%s1224 + $0x92] sm:$0xff]
      %v1438 = vld [vmem:[%s1224 + $0x9a] sm:$0xff]
      %v1439 = vld [vmem:[%s1224 + $0xaa] sm:$0xff]
      %v1440 = vld [vmem:[%s1224 + $0xb2] sm:$0xff]
      %v1441 = vld [vmem:[%s1224 + $0xc2] sm:$0xff]
      %v1442 = vld [vmem:[%s1224 + $0xca] sm:$0xff]
      %v1443 = vld [vmem:[%s1224 + $0xda] sm:$0xff]
      %v1444 = vld [vmem:[%s1224 + $0xe2] sm:$0xff]
      %v1445 = vld [vmem:[%s1224 + $0xf2] sm:$0xff]
      %v1446 = vld [vmem:[%s1224 + $0xfa] sm:$0xff]
      %v1447 = vld [vmem:[%s1224 + $0x10a] sm:$0xff]
      %v1448 = vld [vmem:[%s1224 + $0x112] sm:$0xff]
      %v1449 = vld [vmem:[%s1224 + $0x122] sm:$0xff]
      %v1450 = vld [vmem:[%s1224 + $0x12a] sm:$0xff]
      %v1451 = vld [vmem:[%s1224 + $0x13a] sm:$0xff]
      %v1452 = vld [vmem:[%s1224 + $0x142] sm:$0xff]
      %v1453 = vld [vmem:[%s1224 + $0x152] sm:$0xff]
      %v1454 = vld [vmem:[%s1224 + $0x15a] sm:$0xff]
      %v1455 = vld [vmem:[%s1224 + $0x16a] sm:$0xff]
      %v1456 = vld [vmem:[%s1224 + $0x172] sm:$0xff]
      %v1457 = vlaneseq
      %v1458 = vshrl.u32 %v1457, 7
      %v1459 = vsub.s32 2, %v1458
      %v1460 = vrot.slane %v622, %v1459
      %v1461 = vmul.f32 %v1425, %v1460
      %v1462 = vmul.f32 %v1426, %v1460
      %v1463 = vmul.f32 %v1427, %v1460
      %v1464 = vmul.f32 %v1428, %v1460
      %v1465 = vmul.f32 %v1429, %v1460
      %v1466 = vmul.f32 %v1430, %v1460
      %v1467 = vmul.f32 %v1431, %v1460
      %v1468 = vmul.f32 %v1432, %v1460
      %v1469 = vmul.f32 %v1433, %v1460
      %v1470 = vmul.f32 %v1434, %v1460
      %v1471 = vmul.f32 %v1435, %v1460
      %v1472 = vmul.f32 %v1436, %v1460
      %v1473 = vmul.f32 %v1437, %v1460
      %v1474 = vmul.f32 %v1438, %v1460
      %v1475 = vmul.f32 %v1439, %v1460
      %v1476 = vmul.f32 %v1440, %v1460
      %v1477 = vmul.f32 %v1441, %v1460
      %v1478 = vmul.f32 %v1442, %v1460
      %v1479 = vmul.f32 %v1443, %v1460
      %v1480 = vmul.f32 %v1444, %v1460
      %v1481 = vmul.f32 %v1445, %v1460
      %v1482 = vmul.f32 %v1446, %v1460
      %v1483 = vmul.f32 %v1447, %v1460
      %v1484 = vmul.f32 %v1448, %v1460
      %v1485 = vmul.f32 %v1449, %v1460
      %v1486 = vmul.f32 %v1450, %v1460
      %v1487 = vmul.f32 %v1451, %v1460
      %v1488 = vmul.f32 %v1452, %v1460
      %v1489 = vmul.f32 %v1453, %v1460
      %v1490 = vmul.f32 %v1454, %v1460
      %v1491 = vmul.f32 %v1455, %v1460
      %v1492 = vmul.f32 %v1456, %v1460
      %v1493 = vadd.f32 %v1393, %v1461
      %v1494 = vadd.f32 %v1394, %v1462
      %v1495 = vadd.f32 %v1395, %v1463
      %v1496 = vadd.f32 %v1396, %v1464
      %v1497 = vadd.f32 %v1397, %v1465
      %v1498 = vadd.f32 %v1398, %v1466
      %v1499 = vadd.f32 %v1399, %v1467
      %v1500 = vadd.f32 %v1400, %v1468
      %v1501 = vadd.f32 %v1401, %v1469
      %v1502 = vadd.f32 %v1402, %v1470
      %v1503 = vadd.f32 %v1403, %v1471
      %v1504 = vadd.f32 %v1404, %v1472
      %v1505 = vadd.f32 %v1405, %v1473
      %v1506 = vadd.f32 %v1406, %v1474
      %v1507 = vadd.f32 %v1407, %v1475
      %v1508 = vadd.f32 %v1408, %v1476
      %v1509 = vadd.f32 %v1409, %v1477
      %v1510 = vadd.f32 %v1410, %v1478
      %v1511 = vadd.f32 %v1411, %v1479
      %v1512 = vadd.f32 %v1412, %v1480
      %v1513 = vadd.f32 %v1413, %v1481
      %v1514 = vadd.f32 %v1414, %v1482
      %v1515 = vadd.f32 %v1415, %v1483
      %v1516 = vadd.f32 %v1416, %v1484
      %v1517 = vadd.f32 %v1417, %v1485
      %v1518 = vadd.f32 %v1418, %v1486
      %v1519 = vadd.f32 %v1419, %v1487
      %v1520 = vadd.f32 %v1420, %v1488
      %v1521 = vadd.f32 %v1421, %v1489
      %v1522 = vadd.f32 %v1422, %v1490
      %v1523 = vadd.f32 %v1423, %v1491
      %v1524 = vadd.f32 %v1424, %v1492
      %v1526 = vlaneseq
      %v1527 = vshrl.u32 %v1526, 7
      %v1528 = vsub.s32 0, %v1527
      %v1529 = vrot.slane %v623, %v1528
      %v1531 = vadd.f32 %v1493, %v1529
      %v1532 = vadd.f32 %v1494, %v1529
      %v1533 = vadd.f32 %v1495, %v1529
      %v1534 = vadd.f32 %v1496, %v1529
      %v1535 = vadd.f32 %v1497, %v1529
      %v1536 = vadd.f32 %v1498, %v1529
      %v1537 = vadd.f32 %v1499, %v1529
      %v1538 = vadd.f32 %v1500, %v1529
      %v1539 = vadd.f32 %v1501, %v1529
      %v1540 = vadd.f32 %v1502, %v1529
      %v1541 = vadd.f32 %v1503, %v1529
      %v1542 = vadd.f32 %v1504, %v1529
      %v1543 = vadd.f32 %v1505, %v1529
      %v1544 = vadd.f32 %v1506, %v1529
      %v1545 = vadd.f32 %v1507, %v1529
      %v1546 = vadd.f32 %v1508, %v1529
      %v1547 = vadd.f32 %v1509, %v1529
      %v1548 = vadd.f32 %v1510, %v1529
      %v1549 = vadd.f32 %v1511, %v1529
      %v1550 = vadd.f32 %v1512, %v1529
      %v1551 = vadd.f32 %v1513, %v1529
      %v1552 = vadd.f32 %v1514, %v1529
      %v1553 = vadd.f32 %v1515, %v1529
      %v1554 = vadd.f32 %v1516, %v1529
      %v1555 = vadd.f32 %v1517, %v1529
      %v1556 = vadd.f32 %v1518, %v1529
      %v1557 = vadd.f32 %v1519, %v1529
      %v1558 = vadd.f32 %v1520, %v1529
      %v1559 = vadd.f32 %v1521, %v1529
      %v1560 = vadd.f32 %v1522, %v1529
      %v1561 = vadd.f32 %v1523, %v1529
      %v1562 = vadd.f32 %v1524, %v1529
      %v1563 = vmax.f32 %v1531, 0.0
      %v1564 = vmax.f32 %v1532, 0.0
      %v1565 = vmax.f32 %v1533, 0.0
      %v1566 = vmax.f32 %v1534, 0.0
      %v1567 = vmax.f32 %v1535, 0.0
      %v1568 = vmax.f32 %v1536, 0.0
      %v1569 = vmax.f32 %v1537, 0.0
      %v1570 = vmax.f32 %v1538, 0.0
      %v1571 = vmax.f32 %v1539, 0.0
      %v1572 = vmax.f32 %v1540, 0.0
      %v1573 = vmax.f32 %v1541, 0.0
      %v1574 = vmax.f32 %v1542, 0.0
      %v1575 = vmax.f32 %v1543, 0.0
      %v1576 = vmax.f32 %v1544, 0.0
      %v1577 = vmax.f32 %v1545, 0.0
      %v1578 = vmax.f32 %v1546, 0.0
      %v1579 = vmax.f32 %v1547, 0.0
      %v1580 = vmax.f32 %v1548, 0.0
      %v1581 = vmax.f32 %v1549, 0.0
      %v1582 = vmax.f32 %v1550, 0.0
      %v1583 = vmax.f32 %v1551, 0.0
      %v1584 = vmax.f32 %v1552, 0.0
      %v1585 = vmax.f32 %v1553, 0.0
      %v1586 = vmax.f32 %v1554, 0.0
      %v1587 = vmax.f32 %v1555, 0.0
      %v1588 = vmax.f32 %v1556, 0.0
      %v1589 = vmax.f32 %v1557, 0.0
      %v1590 = vmax.f32 %v1558, 0.0
      %v1591 = vmax.f32 %v1559, 0.0
      %v1592 = vmax.f32 %v1560, 0.0
      %v1593 = vmax.f32 %v1561, 0.0
      %v1594 = vmax.f32 %v1562, 0.0
      %v1595 = vmin.f32 %v1563, 6.0
      %v1596 = vmin.f32 %v1564, 6.0
      %v1597 = vmin.f32 %v1565, 6.0
      %v1598 = vmin.f32 %v1566, 6.0
      %v1599 = vmin.f32 %v1567, 6.0
      %v1600 = vmin.f32 %v1568, 6.0
      %v1601 = vmin.f32 %v1569, 6.0
      %v1602 = vmin.f32 %v1570, 6.0
      %v1603 = vmin.f32 %v1571, 6.0
      %v1604 = vmin.f32 %v1572, 6.0
      %v1605 = vmin.f32 %v1573, 6.0
      %v1606 = vmin.f32 %v1574, 6.0
      %v1607 = vmin.f32 %v1575, 6.0
      %v1608 = vmin.f32 %v1576, 6.0
      %v1609 = vmin.f32 %v1577, 6.0
      %v1610 = vmin.f32 %v1578, 6.0
      %v1611 = vmin.f32 %v1579, 6.0
      %v1612 = vmin.f32 %v1580, 6.0
      %v1613 = vmin.f32 %v1581, 6.0
      %v1614 = vmin.f32 %v1582, 6.0
      %v1615 = vmin.f32 %v1583, 6.0
      %v1616 = vmin.f32 %v1584, 6.0
      %v1617 = vmin.f32 %v1585, 6.0
      %v1618 = vmin.f32 %v1586, 6.0
      %v1619 = vmin.f32 %v1587, 6.0
      %v1620 = vmin.f32 %v1588, 6.0
      %v1621 = vmin.f32 %v1589, 6.0
      %v1622 = vmin.f32 %v1590, 6.0
      %v1623 = vmin.f32 %v1591, 6.0
      %v1624 = vmin.f32 %v1592, 6.0
      %v1625 = vmin.f32 %v1593, 6.0
      %v1626 = vmin.f32 %v1594, 6.0
      %v1627 = vpack.c.bf16 %v1596, %v1595
      %v1628 = vpack.c.bf16 %v1598, %v1597
      %v1629 = vpack.c.bf16 %v1600, %v1599
      %v1630 = vpack.c.bf16 %v1602, %v1601
      %v1631 = vpack.c.bf16 %v1604, %v1603
      %v1632 = vpack.c.bf16 %v1606, %v1605
      %v1633 = vpack.c.bf16 %v1608, %v1607
      %v1634 = vpack.c.bf16 %v1610, %v1609
      %v1635 = vpack.c.bf16 %v1612, %v1611
      %v1636 = vpack.c.bf16 %v1614, %v1613
      %v1637 = vpack.c.bf16 %v1616, %v1615
      %v1638 = vpack.c.bf16 %v1618, %v1617
      %v1639 = vpack.c.bf16 %v1620, %v1619
      %v1640 = vpack.c.bf16 %v1622, %v1621
      %v1641 = vpack.c.bf16 %v1624, %v1623
      %v1642 = vpack.c.bf16 %v1626, %v1625
      %v1659 = vunpack.c.l.b16 %v1627
      %v1660 = vunpack.c.h.b16 %v1627
      %v1661 = vunpack.c.l.b16 %v1628
      %v1662 = vunpack.c.h.b16 %v1628
      %v1663 = vunpack.c.l.b16 %v1629
      %v1664 = vunpack.c.h.b16 %v1629
      %v1665 = vunpack.c.l.b16 %v1630
      %v1666 = vunpack.c.h.b16 %v1630
      %v1667 = vunpack.c.l.b16 %v1631
      %v1668 = vunpack.c.h.b16 %v1631
      %v1669 = vunpack.c.l.b16 %v1632
      %v1670 = vunpack.c.h.b16 %v1632
      %v1671 = vunpack.c.l.b16 %v1633
      %v1672 = vunpack.c.h.b16 %v1633
      %v1673 = vunpack.c.l.b16 %v1634
      %v1674 = vunpack.c.h.b16 %v1634
      %v1675 = vunpack.c.l.b16 %v1635
      %v1676 = vunpack.c.h.b16 %v1635
      %v1677 = vunpack.c.l.b16 %v1636
      %v1678 = vunpack.c.h.b16 %v1636
      %v1679 = vunpack.c.l.b16 %v1637
      %v1680 = vunpack.c.h.b16 %v1637
      %v1681 = vunpack.c.l.b16 %v1638
      %v1682 = vunpack.c.h.b16 %v1638
      %v1683 = vunpack.c.l.b16 %v1639
      %v1684 = vunpack.c.h.b16 %v1639
      %v1685 = vunpack.c.l.b16 %v1640
      %v1686 = vunpack.c.h.b16 %v1640
      %v1687 = vunpack.c.l.b16 %v1641
      %v1688 = vunpack.c.h.b16 %v1641
      %v1689 = vunpack.c.l.b16 %v1642
      %v1690 = vunpack.c.h.b16 %v1642
      %v1691 = vpack.c.b16 %v1659, %v1659
      %v1692 = vpack.c.b16 %v1660, %v1660
      %v1693 = vpack.c.b16 %v1661, %v1661
      %v1694 = vpack.c.b16 %v1662, %v1662
      %v1695 = vpack.c.b16 %v1663, %v1663
      %v1696 = vpack.c.b16 %v1664, %v1664
      %v1697 = vpack.c.b16 %v1665, %v1665
      %v1698 = vpack.c.b16 %v1666, %v1666
      %v1699 = vpack.c.b16 %v1667, %v1667
      %v1700 = vpack.c.b16 %v1668, %v1668
      %v1701 = vpack.c.b16 %v1669, %v1669
      %v1702 = vpack.c.b16 %v1670, %v1670
      %v1703 = vpack.c.b16 %v1671, %v1671
      %v1704 = vpack.c.b16 %v1672, %v1672
      %v1705 = vpack.c.b16 %v1673, %v1673
      %v1706 = vpack.c.b16 %v1674, %v1674
      %v1707 = vpack.c.b16 %v1675, %v1675
      %v1708 = vpack.c.b16 %v1676, %v1676
      %v1709 = vpack.c.b16 %v1677, %v1677
      %v1710 = vpack.c.b16 %v1678, %v1678
      %v1711 = vpack.c.b16 %v1679, %v1679
      %v1712 = vpack.c.b16 %v1680, %v1680
      %v1713 = vpack.c.b16 %v1681, %v1681
      %v1714 = vpack.c.b16 %v1682, %v1682
      %v1715 = vpack.c.b16 %v1683, %v1683
      %v1716 = vpack.c.b16 %v1684, %v1684
      %v1717 = vpack.c.b16 %v1685, %v1685
      %v1718 = vpack.c.b16 %v1686, %v1686
      %v1719 = vpack.c.b16 %v1687, %v1687
      %v1720 = vpack.c.b16 %v1688, %v1688
      %v1721 = vpack.c.b16 %v1689, %v1689
      %v1722 = vpack.c.b16 %v1690, %v1690
      %vm1755 = vcmask 388096
      %1756 = vst.msk [vmem:[%s222] sm:$0xf] %vm1755, %v1691
      %1757 = vst.msk [vmem:[%s222 + $0x4] sm:$0xf] %vm1755, %v1692
      %1758 = vst.msk [vmem:[%s222 + $0x8] sm:$0xf] %vm1755, %v1693
      %1759 = vst.msk [vmem:[%s222 + $0xc] sm:$0xf] %vm1755, %v1694
      %1760 = vst.msk [vmem:[%s222 + $0x10] sm:$0xf] %vm1755, %v1695
      %1761 = vst.msk [vmem:[%s222 + $0x14] sm:$0xf] %vm1755, %v1696
      %1762 = vst.msk [vmem:[%s222 + $0x18] sm:$0xf] %vm1755, %v1697
      %1763 = vst.msk [vmem:[%s222 + $0x1c] sm:$0xf] %vm1755, %v1698
      %1764 = vst.msk [vmem:[%s222 + $0x20] sm:$0xf] %vm1755, %v1699
      %1765 = vst.msk [vmem:[%s222 + $0x24] sm:$0xf] %vm1755, %v1700
      %1766 = vst.msk [vmem:[%s222 + $0x28] sm:$0xf] %vm1755, %v1701
      %1767 = vst.msk [vmem:[%s222 + $0x2c] sm:$0xf] %vm1755, %v1702
      %1768 = vst.msk [vmem:[%s222 + $0x30] sm:$0xf] %vm1755, %v1703
      %1769 = vst.msk [vmem:[%s222 + $0x34] sm:$0xf] %vm1755, %v1704
      %1770 = vst.msk [vmem:[%s222 + $0x38] sm:$0xf] %vm1755, %v1705
      %1771 = vst.msk [vmem:[%s222 + $0x3c] sm:$0xf] %vm1755, %v1706
      %1772 = vst.msk [vmem:[%s222 + $0x40] sm:$0xf] %vm1755, %v1707
      %1773 = vst.msk [vmem:[%s222 + $0x44] sm:$0xf] %vm1755, %v1708
      %1774 = vst.msk [vmem:[%s222 + $0x48] sm:$0xf] %vm1755, %v1709
      %1775 = vst.msk [vmem:[%s222 + $0x4c] sm:$0xf] %vm1755, %v1710
      %1776 = vst.msk [vmem:[%s222 + $0x50] sm:$0xf] %vm1755, %v1711
      %1777 = vst.msk [vmem:[%s222 + $0x54] sm:$0xf] %vm1755, %v1712
      %1778 = vst.msk [vmem:[%s222 + $0x58] sm:$0xf] %vm1755, %v1713
      %1779 = vst.msk [vmem:[%s222 + $0x5c] sm:$0xf] %vm1755, %v1714
      %1780 = vst.msk [vmem:[%s222 + $0x60] sm:$0xf] %vm1755, %v1715
      %1781 = vst.msk [vmem:[%s222 + $0x64] sm:$0xf] %vm1755, %v1716
      %1782 = vst.msk [vmem:[%s222 + $0x68] sm:$0xf] %vm1755, %v1717
      %1783 = vst.msk [vmem:[%s222 + $0x6c] sm:$0xf] %vm1755, %v1718
      %1784 = vst.msk [vmem:[%s222 + $0x70] sm:$0xf] %vm1755, %v1719
      %1785 = vst.msk [vmem:[%s222 + $0x74] sm:$0xf] %vm1755, %v1720
      %1786 = vst.msk [vmem:[%s222 + $0x78] sm:$0xf] %vm1755, %v1721
      %1787 = vst.msk [vmem:[%s222 + $0x7c] sm:$0xf] %vm1755, %v1722
      %v1788 = vsel %vm587, %v1595, inf
      %v1789 = vsel %vm587, %v1596, inf
      %v1790 = vsel %vm587, %v1597, inf
      %v1791 = vsel %vm587, %v1598, inf
      %v1792 = vsel %vm587, %v1599, inf
      %v1793 = vmin.f32 %v1788, %v1792
      %v1794 = vsel %vm587, %v1600, inf
      %v1795 = vmin.f32 %v1789, %v1794
      %v1796 = vsel %vm587, %v1601, inf
      %v1797 = vmin.f32 %v1790, %v1796
      %v1798 = vsel %vm587, %v1602, inf
      %v1799 = vmin.f32 %v1791, %v1798
      %v1800 = vsel %vm587, %v1603, inf
      %v1801 = vmin.f32 %v1793, %v1800
      %v1802 = vsel %vm587, %v1604, inf
      %v1803 = vmin.f32 %v1795, %v1802
      %v1804 = vsel %vm587, %v1605, inf
      %v1805 = vmin.f32 %v1797, %v1804
      %v1806 = vsel %vm587, %v1606, inf
      %v1807 = vmin.f32 %v1799, %v1806
      %v1808 = vsel %vm587, %v1607, inf
      %v1809 = vmin.f32 %v1801, %v1808
      %v1810 = vsel %vm587, %v1608, inf
      %v1811 = vmin.f32 %v1803, %v1810
      %v1812 = vsel %vm587, %v1609, inf
      %v1813 = vmin.f32 %v1805, %v1812
      %v1814 = vsel %vm587, %v1610, inf
      %v1815 = vmin.f32 %v1807, %v1814
      %v1816 = vsel %vm587, %v1611, inf
      %v1817 = vmin.f32 %v1809, %v1816
      %v1818 = vsel %vm587, %v1612, inf
      %v1819 = vmin.f32 %v1811, %v1818
      %v1820 = vsel %vm587, %v1613, inf
      %v1821 = vmin.f32 %v1813, %v1820
      %v1822 = vsel %vm587, %v1614, inf
      %v1823 = vmin.f32 %v1815, %v1822
      %v1824 = vsel %vm587, %v1615, inf
      %v1825 = vmin.f32 %v1817, %v1824
      %v1826 = vsel %vm587, %v1616, inf
      %v1827 = vmin.f32 %v1819, %v1826
      %v1828 = vsel %vm587, %v1617, inf
      %v1829 = vmin.f32 %v1821, %v1828
      %v1830 = vsel %vm587, %v1618, inf
      %v1831 = vmin.f32 %v1823, %v1830
      %v1832 = vsel %vm587, %v1619, inf
      %v1833 = vmin.f32 %v1825, %v1832
      %v1834 = vsel %vm587, %v1620, inf
      %v1835 = vmin.f32 %v1827, %v1834
      %v1836 = vsel %vm587, %v1621, inf
      %v1837 = vmin.f32 %v1829, %v1836
      %v1838 = vsel %vm587, %v1622, inf
      %v1839 = vmin.f32 %v1831, %v1838
      %v1840 = vsel %vm587, %v1623, inf
      %v1841 = vmin.f32 %v1833, %v1840
      %v1842 = vsel %vm587, %v1624, inf
      %v1843 = vmin.f32 %v1835, %v1842
      %v1844 = vsel %vm587, %v1625, inf
      %v1845 = vmin.f32 %v1837, %v1844
      %v1846 = vsel %vm587, %v1626, inf
      %v1847 = vmin.f32 %v1839, %v1846
      %v1848 = vmin.f32 %v1841, %v1843
      %v1849 = vmin.f32 %v1845, %v1847
      %v1850 = vmin.f32 %v1848, %v1849
      %v1851 = vrot.slane %v1850, 4
      %v1852 = vmin.f32 %v1850, %v1851
      %v1853 = vrot.slane %v1852, 2
      %v1854 = vmin.f32 %v1852, %v1853
      %v1855 = vrot.slane %v1854, 1
      %v1856 = vmin.f32 %v1854, %v1855
      %v1857 = vsel %vm587, %v1595, -inf
      %v1858 = vsel %vm587, %v1596, -inf
      %v1859 = vsel %vm587, %v1597, -inf
      %v1860 = vsel %vm587, %v1598, -inf
      %v1861 = vsel %vm587, %v1599, -inf
      %v1862 = vmax.f32 %v1857, %v1861
      %v1863 = vsel %vm587, %v1600, -inf
      %v1864 = vmax.f32 %v1858, %v1863
      %v1865 = vsel %vm587, %v1601, -inf
      %v1866 = vmax.f32 %v1859, %v1865
      %v1867 = vsel %vm587, %v1602, -inf
      %v1868 = vmax.f32 %v1860, %v1867
      %v1869 = vsel %vm587, %v1603, -inf
      %v1870 = vmax.f32 %v1862, %v1869
      %v1871 = vsel %vm587, %v1604, -inf
      %v1872 = vmax.f32 %v1864, %v1871
      %v1873 = vsel %vm587, %v1605, -inf
      %v1874 = vmax.f32 %v1866, %v1873
      %v1875 = vsel %vm587, %v1606, -inf
      %v1876 = vmax.f32 %v1868, %v1875
      %v1877 = vsel %vm587, %v1607, -inf
      %v1878 = vmax.f32 %v1870, %v1877
      %v1879 = vsel %vm587, %v1608, -inf
      %v1880 = vmax.f32 %v1872, %v1879
      %v1881 = vsel %vm587, %v1609, -inf
      %v1882 = vmax.f32 %v1874, %v1881
      %v1883 = vsel %vm587, %v1610, -inf
      %v1884 = vmax.f32 %v1876, %v1883
      %v1885 = vsel %vm587, %v1611, -inf
      %v1886 = vmax.f32 %v1878, %v1885
      %v1887 = vsel %vm587, %v1612, -inf
      %v1888 = vmax.f32 %v1880, %v1887
      %v1889 = vsel %vm587, %v1613, -inf
      %v1890 = vmax.f32 %v1882, %v1889
      %v1891 = vsel %vm587, %v1614, -inf
      %v1892 = vmax.f32 %v1884, %v1891
      %v1893 = vsel %vm587, %v1615, -inf
      %v1894 = vmax.f32 %v1886, %v1893
      %v1895 = vsel %vm587, %v1616, -inf
      %v1896 = vmax.f32 %v1888, %v1895
      %v1897 = vsel %vm587, %v1617, -inf
      %v1898 = vmax.f32 %v1890, %v1897
      %v1899 = vsel %vm587, %v1618, -inf
      %v1900 = vmax.f32 %v1892, %v1899
      %v1901 = vsel %vm587, %v1619, -inf
      %v1902 = vmax.f32 %v1894, %v1901
      %v1903 = vsel %vm587, %v1620, -inf
      %v1904 = vmax.f32 %v1896, %v1903
      %v1905 = vsel %vm587, %v1621, -inf
      %v1906 = vmax.f32 %v1898, %v1905
      %v1907 = vsel %vm587, %v1622, -inf
      %v1908 = vmax.f32 %v1900, %v1907
      %v1909 = vsel %vm587, %v1623, -inf
      %v1910 = vmax.f32 %v1902, %v1909
      %v1911 = vsel %vm587, %v1624, -inf
      %v1912 = vmax.f32 %v1904, %v1911
      %v1913 = vsel %vm587, %v1625, -inf
      %v1914 = vmax.f32 %v1906, %v1913
      %v1915 = vsel %vm587, %v1626, -inf
      %v1916 = vmax.f32 %v1908, %v1915
      %v1917 = vmax.f32 %v1910, %v1912
      %v1918 = vmax.f32 %v1914, %v1916
      %v1919 = vmax.f32 %v1917, %v1918
      %v1920 = vrot.slane %v1919, 4
      %v1921 = vmax.f32 %v1919, %v1920
      %v1922 = vrot.slane %v1921, 2
      %v1923 = vmax.f32 %v1921, %v1922
      %v1924 = vrot.slane %v1923, 1
      %v1925 = vmax.f32 %v1923, %v1924
      // Predicated region
      $region41: #{inverted_residual_forward.6} parent=35 // pred_check
        %p1926 = pneg %p526
      $region42: #{inverted_residual_forward.6} parent=35 // pred_check_branch
        %1928 = sbr.rel (%p1926) target = $region44
      $region43: #{inverted_residual_forward.6} parent=35 // pred_region
        %vm1929 = vcmask 385024
        %1930 = vst.msk [vmem:[#allocation3] sm:$0x1] %vm1929, %v1856
        %1931 = vst.msk [vmem:[#allocation3 + $0x1] sm:$0x1] %vm1929, %v1925
      $region44: #{inverted_residual_forward.6} parent=35 // pred_fallthru
        _
      %p1932 = scmp.ne.s32.totalorder %s17, 0
      // Predicated region
      $region45: #{inverted_residual_forward.6} parent=35 // pred_check
        %p1933 = pneg %p1932
      $region46: #{inverted_residual_forward.6} parent=35 // pred_check_branch
        %1935 = sbr.rel (%p1933) target = $region48
      $region47: #{inverted_residual_forward.6} parent=35 // pred_region
        %v1936 = vld [vmem:[#allocation3] sm:$0x1]
        %v1937 = vmin.f32 %v1936, %v1856
        %vm1938 = vcmask 385024
        %1939 = vst.msk [vmem:[#allocation3] sm:$0x1] %vm1938, %v1937
        %v1940 = vld [vmem:[#allocation3 + $0x1] sm:$0x1]
        %v1941 = vmax.f32 %v1940, %v1925
        %1942 = vst.msk [vmem:[#allocation3 + $0x1] sm:$0x1] %vm1938, %v1941
      $region48: #{inverted_residual_forward.6} parent=35 // pred_fallthru
        _
      %p1943 = scmp.eq.s32.totalorder %s17, 1
      // Predicated region
      $region49: #{inverted_residual_forward.6} parent=35 // pred_check
        %p1944 = pneg %p1943
      $region50: #{inverted_residual_forward.6} parent=35 // pred_check_branch
        %1946 = sbr.rel (%p1944) target = $region52
      $region51: #{inverted_residual_forward.6} parent=35 // pred_region
        %v1947 = vld [vmem:[#allocation3] sm:$0x1]
        %vm1948 = vcmask 385024
        %v1949 = vsel %vm1948, %v1947, inf
        %1950 = vmin.xlane.f32.xlu0 %v1949
        %v1951 = vpop.xlane.xlu0 %1950
        %v1952 = vmin.f32 %v1951, 0.0
        %v1953 = vld [vmem:[#allocation3 + $0x1] sm:$0x1]
        %v1954 = vsel %vm1948, %v1953, -inf
        %1955 = vmax.xlane.f32.xlu0 %v1954
        %v1956 = vpop.xlane.xlu0 %1955
        %v1957 = vmax.f32 %v1956, 0.0
        %v1958 = vsub.f32 %v1957, %v1952
        %v1959 = vmul.f32 %v1958, 0.003921569
        %v1960 = vmax.f32 %v1959, 1e-08
        %v1961 = vsub.f32 0.0, %v1952
        %v1962 = vrcp.pop %v1960
        %v1963 = vmul.f32 %v1961, %v1962
        %v1964 = vround.ne.pseudo %v1963
        %v1965 = vmul.f32 1.0, %v1962
        %1966 = vst [vmem:[%s5] sm:$0x1] %v1965
        %1967 = vst [vmem:[%s5 + $0x1] sm:$0x1] %v1960
        %1968 = vst [vmem:[%s5 + $0x2] sm:$0x1] %v1964
      $region52: #{inverted_residual_forward.6} parent=35 // pred_fallthru
        _
      %p1969 = scmp.lt.s32.totalorder %s17, 1
      %s1970 = scalar_select %p1969, %s17, 1
      %s1971 = smul.addr %s1970, 32
      %s1972 = smul.addr %s1971, 4
      %s1973 = scalar_lea.vmem %s4, %s1972
      // Predicated region
      $region53: #{inverted_residual_forward.6} parent=35 // pred_check
        %p1974 = pneg %p124
      $region54: #{inverted_residual_forward.6} parent=35 // pred_check_branch
        %1976 = sbr.rel (%p1974) target = $region56
      $region55: #{inverted_residual_forward.6} parent=35 // pred_region
        _
      $region56: #{inverted_residual_forward.6} parent=35 // pred_fallthru
        _
      // Predicated region
      $region57: #{inverted_residual_forward.6} parent=35 // pred_check
        %p1977 = pneg %p145
      $region58: #{inverted_residual_forward.6} parent=35 // pred_check_branch
        %1979 = sbr.rel (%p1977) target = $region60
      $region59: #{inverted_residual_forward.6} parent=35 // pred_region
        _
      $region60: #{inverted_residual_forward.6} parent=35 // pred_fallthru
        _
      // Predicated region
      $region61: #{inverted_residual_forward.6} parent=35 // pred_check
        %p1980 = pneg %p145
      $region62: #{inverted_residual_forward.6} parent=35 // pred_check_branch
        %1982 = sbr.rel (%p1980) target = $region64
      $region63: #{inverted_residual_forward.6} parent=35 // pred_region
        _
      $region64: #{inverted_residual_forward.6} parent=35 // pred_fallthru
        _
    $region36: #{inverted_residual_forward.6} parent=5 // pred_fallthru
      _
    %p1983 = scmp.le.s32.totalorder 2, %s12
    // Predicated region
    $region65: #{inverted_residual_forward.6} parent=5 // pred_check
      %p1984 = pneg %p1983
    $region66: #{inverted_residual_forward.6} parent=5 // pred_check_branch
      %1986 = sbr.rel (%p1984) target = $region68
    $region67: #{inverted_residual_forward.6} parent=5 // pred_region
      %s1987 = ssub.s32 %s12, 2
      // Predicated region
      $region69: #{inverted_residual_forward.6} parent=67 // pred_check
        %p1988 = pneg %p130
      $region70: #{inverted_residual_forward.6} parent=67 // pred_check_branch
        %1990 = sbr.rel (%p1988) target = $region72
      $region71: #{inverted_residual_forward.6} parent=67 // pred_region
        %p1991 = scmp.lt.s32.totalorder %s18, 1
        %s1992 = scalar_select %p1991, %s18, 1
        %s1993 = smul.addr %s1992, 32
        %s1994 = smul.addr %s1993, 4
        %s1995 = scalar_lea.vmem %s4, %s1994
      $region72: #{inverted_residual_forward.6} parent=67 // pred_fallthru
        _
    $region68: #{inverted_residual_forward.6} parent=5 // pred_fallthru
      _
  $region6: #{inverted_residual_forward.6} parent=0 // loop_footer
    %s16 = sadd.s32 1, %s12
  $region7: #{inverted_residual_forward.6} parent=0 // loop_footer_branch
    %11 = sbr.rel target = $region3
  $region8: #{inverted_residual_forward.6} parent=0 // loop_exit
    _

// kernel: inverted_residual_forward.9
$region0: #{inverted_residual_forward.9}
  #allocation0 [shape = 'u32[]', space=smem, size = 0x4, offset = 0x4, fixed_abs, tag = 'smem constant byte address 0x4 - core index']
  #allocation1 [shape = 'u32[144,128]{1,0:T(1,128)}', space=vmem, size = 0x12000, scoped, tag = 'internal scratch']
  %s0 = inlined_call_operand.vmem [shape: f32[3,128], index: 0, kind: input, shape index: {}]
  %s1 = inlined_call_operand.vmem [shape: f32[32,128], index: 1, kind: input, shape index: {}]
  %s2 = inlined_call_operand.vmem [shape: f32[32,128], index: 2, kind: output, shape index: {}]
  %s3 = sld [smem:[#allocation0]]
  $region41: #{inverted_residual_forward.9} parent=0
    _
  %s5 = ssub.s32 1, %s3
  %s6 = scalar_select 0, %s5, %s3
  loop: start=0, step=1, limit=4
  $region2: #{inverted_residual_forward.9} parent=0 // loop_pre_header
    _
  $region3: #{inverted_residual_forward.9} parent=0 // loop_header
    %s8 = sphi 0, %s12
    %p9 = scmp.ge.s32.totalorder %s8, 4
    %s16 = sphi 0, %s16
    %s18 = sphi 0, %s16
    %s19 = sphi 0, %s18
    %s33 = sphi 0, %s19
    %s39 = sphi 0, %s41
    %s42 = sphi 0, %s39
    %s43 = sphi 0, %s42
    %s59 = sphi 0, %s43
    %s65 = sphi 0, %s67
    %s68 = sphi 0, %s65
    %s69 = sphi 0, %s68
    %s85 = sphi 0, %s69
  $region4: #{inverted_residual_forward.9} parent=0 // loop_header_branch
    %11 = sbr.rel (%p9) target = $region8
  $region5: #{inverted_residual_forward.9} parent=0 // loop_body
    %s13 = ssub.s32 %s8, 1
    %s14 = ssub.s32 %s8, 2
    %s15 = sadd.s32 %s8, 1
    %s17 = sadd.s32 %s16, 1
    %p20 = scmp.eq.s32.totalorder %s8, 1
    %p21 = scmp.ne.s32.totalorder %s16, %s18
    %p22 = scmp.eq.s32.totalorder %s8, 0
    %p23 = por %p21, %p22
    %p24 = scmp.ne.s32.totalorder %s16, %s18
    %p25 = scmp.eq.s32.totalorder %s13, 1
    %p26 = por %p24, %p25
    %p27 = scmp.ne.s32.totalorder %s18, %s19
    %p28 = scmp.eq.s32.totalorder %s13, 0
    %p29 = por %p27, %p28
    %p30 = scmp.ne.s32.totalorder %s18, %s19
    %p31 = scmp.eq.s32.totalorder %s14, 1
    %p32 = por %p30, %p31
    %p34 = scmp.ne.s32.totalorder %s19, %s33
    %p35 = scmp.eq.s32.totalorder %s14, 0
    %p36 = por %p34, %p35
    %s37 = ssub.s32 %s8, %s15
    %p38 = scmp.eq.s32.totalorder %s37, 0
    %s40 = sadd.s32 %s39, 1
    %s41 = scalar_select %p38, %s39, %s40
    %p44 = pneg %p38
    %p45 = scmp.eq.s32.totalorder %s8, 1
    %p46 = por %p44, %p45
    %p47 = scmp.ne.s32.totalorder %s39, %s42
    %p48 = scmp.eq.s32.totalorder %s8, 0
    %p49 = por %p47, %p48
    %p50 = scmp.ne.s32.totalorder %s39, %s42
    %p51 = scmp.eq.s32.totalorder %s13, 1
    %p52 = por %p50, %p51
    %p53 = scmp.ne.s32.totalorder %s42, %s43
    %p54 = scmp.eq.s32.totalorder %s13, 0
    %p55 = por %p53, %p54
    %p56 = scmp.ne.s32.totalorder %s42, %s43
    %p57 = scmp.eq.s32.totalorder %s14, 1
    %p58 = por %p56, %p57
    %p60 = scmp.ne.s32.totalorder %s43, %s59
    %p61 = scmp.eq.s32.totalorder %s14, 0
    %p62 = por %p60, %p61
    %s63 = ssub.s32 %s8, %s15
    %p64 = scmp.eq.s32.totalorder %s63, 0
    %s66 = sadd.s32 %s65, 1
    %s67 = scalar_select %p64, %s65, %s66
    %p70 = pneg %p64
    %p71 = scmp.eq.s32.totalorder %s8, 1
    %p72 = por %p70, %p71
    %p73 = scmp.ne.s32.totalorder %s65, %s68
    %p74 = scmp.eq.s32.totalorder %s8, 0
    %p75 = por %p73, %p74
    %p76 = scmp.ne.s32.totalorder %s65, %s68
    %p77 = scmp.eq.s32.totalorder %s13, 1
    %p78 = por %p76, %p77
    %p79 = scmp.ne.s32.totalorder %s68, %s69
    %p80 = scmp.eq.s32.totalorder %s13, 0
    %p81 = por %p79, %p80
    %p82 = scmp.ne.s32.totalorder %s68, %s69
    %p83 = scmp.eq.s32.totalorder %s14, 1
    %p84 = por %p82, %p83
    %p86 = scmp.ne.s32.totalorder %s69, %s85
    %p87 = scmp.eq.s32.totalorder %s14, 0
    %p88 = por %p86, %p87
    %p89 = scmp.le.s32.totalorder 1, %s8
    %p90 = scmp.lt.s32.totalorder %s8, 3
    %p91 = pnand %p89, %p90
    %p92 = pneg %p91
    // Predicated region
    $region9: #{inverted_residual_forward.9} parent=5 // pred_check
      _
    $region10: #{inverted_residual_forward.9} parent=5 // pred_check_branch
      %94 = sbr.rel (%p91) target = $region12
    $region11: #{inverted_residual_forward.9} parent=5 // pred_region
      %s95 = ssub.s32 %s8, 1
      // Predicated region
      $region13: #{inverted_residual_forward.9} parent=11 // pred_check
        %p96 = pneg %p29
      $region14: #{inverted_residual_forward.9} parent=11 // pred_check_branch
        %98 = sbr.rel (%p96) target = $region16
      $region15: #{inverted_residual_forward.9} parent=11 // pred_region
        _
      $region16: #{inverted_residual_forward.9} parent=11 // pred_fallthru
        _
    $region12: #{inverted_residual_forward.9} parent=5 // pred_fallthru
      _
    %p99 = scmp.lt.s32.totalorder %s8, 2
    // Predicated region
    $region17: #{inverted_residual_forward.9} parent=5 // pred_check
      %p100 = pneg %p99
    $region18: #{inverted_residual_forward.9} parent=5 // pred_check_branch
      %102 = sbr.rel (%p100) target = $region20
    $region19: #{inverted_residual_forward.9} parent=5 // pred_region
      // Predicated region
      $region21: #{inverted_residual_forward.9} parent=19 // pred_check
        %p103 = pneg %p49
      $region22: #{inverted_residual_forward.9} parent=19 // pred_check_branch
        %105 = sbr.rel (%p103) target = $region24
      $region23: #{inverted_residual_forward.9} parent=19 // pred_region
        %s106 = smul.u32 2, %s8
        %p107 = scmp.lt.s32.totalorder %s106, 3
        %s108 = scalar_select %p107, %s106, 3
        %s109 = smul.addr %s108, 8
        %s110 = scalar_lea.vmem %s1, %s109
        %s111 = smul.u32 2, %s8
      $region24: #{inverted_residual_forward.9} parent=19 // pred_fallthru
        _
    $region20: #{inverted_residual_forward.9} parent=5 // pred_fallthru
      _
    %p112 = scmp.le.s32.totalorder 1, %s8
    %p113 = scmp.lt.s32.totalorder %s8, 3
    %p114 = pnand %p112, %p113
    %p115 = pneg %p114
    // Predicated region
    $region25: #{inverted_residual_forward.9} parent=5 // pred_check
      _
    $region26: #{inverted_residual_forward.9} parent=5 // pred_check_branch
      %117 = sbr.rel (%p114) target = $region28
    $region27: #{inverted_residual_forward.9} parent=5 // pred_region
      %s118 = ssub.s32 %s8, 1
      %p119 = pneg %p29
      %p120 = pneg %p26
      %s121 = smul.u32 2, %s13
      %p122 = scmp.lt.s32.totalorder %s121, 3
      %s123 = scalar_select %p122, %s121, 3
      %s124 = smul.addr %s123, 8
      %s125 = scalar_lea.vmem %s1, %s124
      %p126 = pneg %p55
      %p127 = pneg %p52
      %p128 = pneg %p81
      %p129 = pneg %p78
      %s130 = smul.u32 2, %s13
      %p131 = scmp.lt.s32.totalorder %s130, 3
      %s132 = scalar_select %p131, %s130, 3
      %s133 = smul.addr %s132, 8
      %s134 = scalar_lea.vmem %s2, %s133
      %s135 = smul.u32 2, %s13
      %p136 = scmp.lt.s32.totalorder %s135, 3
      %s137 = scalar_select %p136, %s135, 3
      %s138 = smul.addr %s137, 8
      %s139 = scalar_lea.vmem %s1, %s138
      %s140 = smul.u32 2, %s13
      %s141 = smul.u32 2, %s13
      %p142 = scmp.lt.s32.totalorder %s141, 3
      %s143 = scalar_select %p142, %s141, 3
      %s144 = smul.addr %s143, 8
      %s145 = scalar_lea.vmem %s2, %s144
      %s146 = smul.u32 2, %s13
      %v147 = vld [vmem:[%s0] sm:$0x1]
      %v148 = vld [vmem:[%s0 + $0x1] sm:$0x1]
      %v149 = vld [vmem:[%s0 + $0x2] sm:$0x1]
      %v150 = vld [vmem:[%s139] sm:$0xff]
      %v151 = vld [vmem:[%s139 + $0x8] sm:$0xff]
      %s153 = vtos %v147
      %v154 = vstv %s153
      %v156 = vmul.f32 %v150, %v154
      %v157 = vmul.f32 %v151, %v154
      %v158 = vround.ne.pseudo %v156
      %v159 = vround.ne.pseudo %v157
      %s161 = vtos %v149
      %v162 = vstv %s161
      %v164 = vadd.f32 %v158, %v162
      %v165 = vadd.f32 %v159, %v162
      %v166 = vmax.f32 %v164, 0.0
      %v167 = vmax.f32 %v165, 0.0
      %v168 = vmin.f32 %v166, 255.0
      %v169 = vmin.f32 %v167, 255.0
      %v170 = vsub.f32 %v168, %v162
      %v171 = vsub.f32 %v169, %v162
      %s173 = vtos %v148
      %v174 = vstv %s173
      %v176 = vmul.f32 %v170, %v174
      %v177 = vmul.f32 %v171, %v174
      %178 = vst [vmem:[%s145] sm:$0xff] %v176
      %179 = vst [vmem:[%s145 + $0x8] sm:$0xff] %v177
      %s180 = smul.u32 2, %s13
      %p181 = scmp.lt.s32.totalorder %s180, 3
      %s182 = scalar_select %p181, %s180, 3
      %s183 = smul.addr %s182, 8
      %s184 = scalar_lea.vmem %s2, %s183
      // Predicated region
      $region29: #{inverted_residual_forward.9} parent=27 // pred_check
        %p185 = pneg %p78
      $region30: #{inverted_residual_forward.9} parent=27 // pred_check_branch
        %187 = sbr.rel (%p185) target = $region32
      $region31: #{inverted_residual_forward.9} parent=27 // pred_region
        %s188 = smul.u32 2, %s13
      $region32: #{inverted_residual_forward.9} parent=27 // pred_fallthru
        _
    $region28: #{inverted_residual_forward.9} parent=5 // pred_fallthru
      _
    %p189 = scmp.le.s32.totalorder 2, %s8
    // Predicated region
    $region33: #{inverted_residual_forward.9} parent=5 // pred_check
      %p190 = pneg %p189
    $region34: #{inverted_residual_forward.9} parent=5 // pred_check_branch
      %192 = sbr.rel (%p190) target = $region36
    $region35: #{inverted_residual_forward.9} parent=5 // pred_region
      %s193 = ssub.s32 %s8, 2
      // Predicated region
      $region37: #{inverted_residual_forward.9} parent=35 // pred_check
        %p194 = pneg %p84
      $region38: #{inverted_residual_forward.9} parent=35 // pred_check_branch
        %196 = sbr.rel (%p194) target = $region40
      $region39: #{inverted_residual_forward.9} parent=35 // pred_region
        %s197 = smul.u32 2, %s14
        %p198 = scmp.lt.s32.totalorder %s197, 3
        %s199 = scalar_select %p198, %s197, 3
        %s200 = smul.addr %s199, 8
        %s201 = scalar_lea.vmem %s2, %s200
      $region40: #{inverted_residual_forward.9} parent=35 // pred_fallthru
        _
    $region36: #{inverted_residual_forward.9} parent=5 // pred_fallthru
      _
  $region6: #{inverted_residual_forward.9} parent=0 // loop_footer
    %s12 = sadd.s32 1, %s8
  $region7: #{inverted_residual_forward.9} parent=0 // loop_footer_branch
    %7 = sbr.rel target = $region3
  $region8: #{inverted_residual_forward.9} parent=0 // loop_exit
    _

</llo_original>
